<compile_context>
chip_gen: v5e
topology: v5e:2x2
jax: 0.10.0
libtpu: 0.0.40
codegen_flags: <defaults>
</compile_context>

<pallas_src>
import functools

import jax
import jax.numpy as jnp
from jax.experimental import pallas as pl
from jax.experimental.pallas import tpu as pltpu

IN_CHANNELS = 3
C_IN_PAD = 16         # pad 3 -> 16 input channels (zero rows in W1 keep math exact)
NUM_POINTS = 64       # small demo size (module default is 1024)
NUM_CLASSES = 40
K_PAD = 128           # pad logits width 40 -> 128 for a lane-dense output store
BATCH = 2


def _pick_slab():
    """Column-tile width for the 128 -> 1024 layer: MXU-native per generation."""
    try:
        kind = jax.devices()[0].device_kind.lower()
    except Exception:  # pragma: no cover - defensive, keeps script runnable anywhere
        return 256
    # v5e MXU tiles are 128x128; v6e / v7x MXUs are 256-wide.
    return 128 if "v5" in kind else 256


def pointnet_cls_kernel(x_ref,
                        w1_ref, b1_ref, w2_ref, b2_ref, w3_ref, b3_ref,
                        w4_ref, b4_ref, w5_ref, b5_ref,
                        wf1_hbm, bf1_ref, wf2_hbm, bf2_ref, wf3_hbm, bf3_ref,
                        out_ref,
                        wf1_vmem, wf2_vmem, wf3_vmem, wf1_sems, head_sems,
                        *, batch, num_points, slab):
    """Single invocation: all B*N points + batched FC head, head weights prefetched."""
    c5 = w5_ref.shape[1]                     # 1024
    n_slabs = c5 // slab

    # ---- kick off FC-head weight DMAs so they hide behind the per-point MLP ----
    wf1_copies = []
    for s in range(n_slabs):
        lo, hi = s * slab, (s + 1) * slab
        cp = pltpu.make_async_copy(wf1_hbm.at[lo:hi, :], wf1_vmem.at[lo:hi, :],
                                   wf1_sems.at[s])
        cp.start()
        wf1_copies.append(cp)
    wf2_cp = pltpu.make_async_copy(wf2_hbm, wf2_vmem, head_sems.at[0])
    wf2_cp.start()
    wf3_cp = pltpu.make_async_copy(wf3_hbm, wf3_vmem, head_sems.at[1])
    wf3_cp.start()

    def dense_relu(a_bf16, w, b):
        # bf16 x bf16 -> f32 on the MXU; bias + ReLU in f32; carry bf16 activations.
        y = jnp.dot(a_bf16, w, preferred_element_type=jnp.float32) + b
        return jnp.maximum(y, 0.0).astype(jnp.bfloat16)

    # ---- shared per-point MLPs (Conv1d k=1 + folded BN + ReLU), M = B*N rows ----
    h = x_ref[...].astype(jnp.bfloat16)                       # (B*N, 16)
    h = dense_relu(h, w1_ref[...], b1_ref[...])                # (B*N, 64)
    h = dense_relu(h, w2_ref[...], b2_ref[...])                # (B*N, 64)
    h = dense_relu(h, w3_ref[...], b3_ref[...])                # (B*N, 64)
    h = dense_relu(h, w4_ref[...], b4_ref[...])                # (B*N, 128) bf16

    # ---- layer 5 (128 -> 1024) fused with global max-pool AND FC1 accumulation ----
    # Never materializes (B*N, 1024) nor the concatenated (B, 1024) global feature.
    acc = jnp.zeros((batch, wf1_vmem.shape[1]), jnp.float32)   # (B, 512) FC1 accumulator
    for s in range(n_slabs):
        lo, hi = s * slab, (s + 1) * slab
        y = jnp.dot(h, w5_ref[:, lo:hi], preferred_element_type=jnp.float32)
        y = jnp.maximum(y + b5_ref[:, lo:hi], 0.0)             # (B*N, slab)
        y = y.reshape(batch, num_points, slab)
        g_slab = jnp.max(y, axis=1).astype(jnp.bfloat16)       # (B, slab) global max-pool
        wf1_copies[s].wait()                                   # only this 256-row chunk needed
        acc = acc + jnp.dot(g_slab, wf1_vmem[lo:hi, :],
                            preferred_element_type=jnp.float32)
    g = jnp.maximum(acc + bf1_ref[...], 0.0).astype(jnp.bfloat16)   # (B, 512)  FCN(1024,512)

    # ---- rest of the classification head, batched over B ----
    wf2_cp.wait()
    g = dense_relu(g, wf2_vmem[...], bf2_ref[...])              # (B, 256)  FCN(512,256)
    wf3_cp.wait()
    logits = jnp.dot(g, wf3_vmem[...],
                     preferred_element_type=jnp.float32) + bf3_ref[...]  # (B, K_PAD)
    out_ref[...] = logits


def pointnet_cls_forward(x_flat, params, batch, num_points):
    """x_flat: (B*N, C_IN_PAD) float32.  Returns (logits (B, K), end_points dict)."""
    order = ["w1", "b1", "w2", "b2", "w3", "b3", "w4", "b4", "w5", "b5",
             "wf1", "bf1", "wf2", "bf2", "wf3", "bf3"]
    weights = [params[k] for k in order]
    k_pad = params["wf3"].shape[1]
    c5 = params["w5"].shape[1]
    slab = _pick_slab()
    n_slabs = c5 // slab

    kernel = functools.partial(pointnet_cls_kernel,
                               batch=batch, num_points=num_points, slab=slab)

    vmem = pl.BlockSpec(memory_space=pltpu.MemorySpace.VMEM)
    hbm = pl.BlockSpec(memory_space=pl.ANY)
    # x + 10 conv params in VMEM; FC-head weights stay in HBM (manually prefetched),
    # their (small) biases in VMEM.
    in_specs = [vmem] * 11 + [hbm, vmem, hbm, vmem, hbm, vmem]

    logits_pad = pl.pallas_call(
        kernel,
        out_shape=jax.ShapeDtypeStruct((batch, k_pad), jnp.float32),
        in_specs=in_specs,
        out_specs=pl.BlockSpec(memory_space=pltpu.MemorySpace.VMEM),
        scratch_shapes=[
            pltpu.VMEM(params["wf1"].shape, jnp.bfloat16),      # (1024, 512)
            pltpu.VMEM(params["wf2"].shape, jnp.bfloat16),      # (512, 256)
            pltpu.VMEM(params["wf3"].shape, jnp.bfloat16),      # (256, 128)
            pltpu.SemaphoreType.DMA((n_slabs,)),
            pltpu.SemaphoreType.DMA((2,)),
        ],
        compiler_params=pltpu.CompilerParams(
            # ~2-3 MiB total (bf16 weights + scratch + small activations).
            vmem_limit_bytes=32 * 1024 * 1024,
        ),
    )(x_flat, *weights)

    end_points = {}   # no input/feature transforms (defaults False)
    return logits_pad[:, :NUM_CLASSES], end_points


def _fold_bn(w, b, gamma, beta, mean, var, eps=1e-5):
    scale = gamma / jnp.sqrt(var + eps)
    return w * scale[None, :], b * scale + (beta - mean * scale)


def init_params(key, in_channels=IN_CHANNELS, K=NUM_CLASSES):
    """Deterministic synthetic parameters matching the module's shapes (eval mode)."""
    conv_dims = [(in_channels, 64), (64, 64), (64, 64), (64, 128), (128, 1024)]
    fc_dims = [(1024, 512), (512, 256), (256, K)]
    params = {}
    keys = jax.random.split(key, 32)
    ki = 0

    def layer(cin, cout, with_bn):
        nonlocal ki
        w = 0.05 * jax.random.normal(keys[ki], (cin, cout), jnp.float32); ki += 1
        b = 0.05 * jax.random.normal(keys[ki], (cout,), jnp.float32); ki += 1
        if with_bn:
            gamma = 1.0 + 0.05 * jax.random.normal(keys[ki], (cout,), jnp.float32); ki += 1
            beta = 0.05 * jax.random.normal(keys[ki], (cout,), jnp.float32); ki += 1
            mean = jnp.zeros((cout,), jnp.float32)     # eval-mode running stats
            var = jnp.ones((cout,), jnp.float32)
            w, b = _fold_bn(w, b, gamma, beta, mean, var)
        return w, b.reshape(1, cout)

    # conv (shared MLP) layers, all with BN; weights stored in bf16
    for i, (cin, cout) in enumerate(conv_dims, start=1):
        w, b = layer(cin, cout, with_bn=True)
        if i == 1:  # pad input channels 3 -> 16 with zero rows (exact)
            w = jnp.pad(w, ((0, C_IN_PAD - cin), (0, 0)))
        params[f"w{i}"] = w.astype(jnp.bfloat16)
        params[f"b{i}"] = b                           # biases stay f32
    # fc layers: fcn1, fcn2 with BN; fcn3 plain Linear (padded 40 -> 128 cols)
    for i, (cin, cout) in enumerate(fc_dims, start=1):
        w, b = layer(cin, cout, with_bn=(i < 3))
        if i == 3:
            w = jnp.pad(w, ((0, 0), (0, K_PAD - cout)))   # exact zero columns
            b = jnp.pad(b, ((0, 0), (0, K_PAD - cout)))
        params[f"wf{i}"] = w.astype(jnp.bfloat16)
        params[f"bf{i}"] = b
    return params


if __name__ == "__main__":
    key = jax.random.PRNGKey(0)
    kx, kp = jax.random.split(key)

    # PyTorch-layout input: (B, C_in, N) point cloud
    x_torch_layout = jax.random.normal(kx, (BATCH, IN_CHANNELS, NUM_POINTS), jnp.float32)

    # glue: NCW -> (B, N, C), zero-pad channels 3 -> 16, flatten to (B*N, C_IN_PAD)
    x = jnp.transpose(x_torch_layout, (0, 2, 1))
    x = jnp.pad(x, ((0, 0), (0, 0), (0, C_IN_PAD - IN_CHANNELS)))
    x = x.reshape(BATCH * NUM_POINTS, C_IN_PAD)

    params = init_params(kp)
    logits, end_points = pointnet_cls_forward(x, params, BATCH, NUM_POINTS)
    logits = jax.block_until_ready(logits)
    assert logits.shape == (BATCH, NUM_CLASSES)
    assert jnp.all(jnp.isfinite(logits))
    print("KERNEL_OK")
</pallas_src>

<mosaic_0001>
module attributes {stable_mosaic.version = 11 : i64} {
  func.func @pointnet_cls_kernel(%arg0: memref<128x16xf32, #tpu.memory_space<vmem>>, %arg1: memref<16x64xbf16, #tpu.memory_space<vmem>>, %arg2: memref<1x64xf32, #tpu.memory_space<vmem>>, %arg3: memref<64x64xbf16, #tpu.memory_space<vmem>>, %arg4: memref<1x64xf32, #tpu.memory_space<vmem>>, %arg5: memref<64x64xbf16, #tpu.memory_space<vmem>>, %arg6: memref<1x64xf32, #tpu.memory_space<vmem>>, %arg7: memref<64x128xbf16, #tpu.memory_space<vmem>>, %arg8: memref<1x128xf32, #tpu.memory_space<vmem>>, %arg9: memref<128x1024xbf16, #tpu.memory_space<vmem>>, %arg10: memref<1x1024xf32, #tpu.memory_space<vmem>>, %arg11: memref<1024x512xbf16, #tpu.memory_space<any>>, %arg12: memref<1x512xf32, #tpu.memory_space<vmem>>, %arg13: memref<512x256xbf16, #tpu.memory_space<any>>, %arg14: memref<1x256xf32, #tpu.memory_space<vmem>>, %arg15: memref<256x128xbf16, #tpu.memory_space<any>>, %arg16: memref<1x128xf32, #tpu.memory_space<vmem>>, %arg17: memref<2x128xf32, #tpu.memory_space<vmem>>, %arg18: memref<1024x512xbf16, #tpu.memory_space<vmem>>, %arg19: memref<512x256xbf16, #tpu.memory_space<vmem>>, %arg20: memref<256x128xbf16, #tpu.memory_space<vmem>>, %arg21: memref<4x!tpu.dma_semaphore, #tpu.memory_space<semaphore_mem>>, %arg22: memref<2x!tpu.dma_semaphore, #tpu.memory_space<semaphore_mem>>) attributes {dimension_semantics = [], scalar_prefetch = 0 : i64, scratch_operands = 5 : i64, tpu.core_type = #tpu.core_type<tc>} {
    %c0_i32 = arith.constant 0 : i32
    %c0_i32_0 = arith.constant 0 : i32
    %c0_i32_1 = arith.constant 0 : i32
    %0 = tpu.memref_slice %arg11[%c0_i32_0, %c0_i32_1] : memref<1024x512xbf16, #tpu.memory_space<any>> -> memref<256x512xbf16, #tpu.memory_space<any>>
    %c0_i32_2 = arith.constant 0 : i32
    %c0_i32_3 = arith.constant 0 : i32
    %1 = tpu.memref_slice %arg18[%c0_i32_2, %c0_i32_3] : memref<1024x512xbf16, #tpu.memory_space<vmem>> -> memref<256x512xbf16, #tpu.memory_space<vmem>>
    %2 = tpu.memref_slice %arg21[%c0_i32] : memref<4x!tpu.dma_semaphore, #tpu.memory_space<semaphore_mem>> -> memref<1x!tpu.dma_semaphore, #tpu.memory_space<semaphore_mem>>
    %3 = tpu.memref_squeeze %2 : memref<1x!tpu.dma_semaphore, #tpu.memory_space<semaphore_mem>> -> memref<!tpu.dma_semaphore, #tpu.memory_space<semaphore_mem>>
    tpu.enqueue_dma source(%0 : memref<256x512xbf16, #tpu.memory_space<any>>) target(%1 : memref<256x512xbf16, #tpu.memory_space<vmem>>) target_semaphore(%3 : memref<!tpu.dma_semaphore, #tpu.memory_space<semaphore_mem>>)
    %c1_i32 = arith.constant 1 : i32
    %c256_i32 = arith.constant 256 : i32
    %c0_i32_4 = arith.constant 0 : i32
    %4 = tpu.memref_slice %arg11[%c256_i32, %c0_i32_4] : memref<1024x512xbf16, #tpu.memory_space<any>> -> memref<256x512xbf16, #tpu.memory_space<any>>
    %c256_i32_5 = arith.constant 256 : i32
    %c0_i32_6 = arith.constant 0 : i32
    %5 = tpu.memref_slice %arg18[%c256_i32_5, %c0_i32_6] : memref<1024x512xbf16, #tpu.memory_space<vmem>> -> memref<256x512xbf16, #tpu.memory_space<vmem>>
    %6 = tpu.memref_slice %arg21[%c1_i32] : memref<4x!tpu.dma_semaphore, #tpu.memory_space<semaphore_mem>> -> memref<1x!tpu.dma_semaphore, #tpu.memory_space<semaphore_mem>>
    %7 = tpu.memref_squeeze %6 : memref<1x!tpu.dma_semaphore, #tpu.memory_space<semaphore_mem>> -> memref<!tpu.dma_semaphore, #tpu.memory_space<semaphore_mem>>
    tpu.enqueue_dma source(%4 : memref<256x512xbf16, #tpu.memory_space<any>>) target(%5 : memref<256x512xbf16, #tpu.memory_space<vmem>>) target_semaphore(%7 : memref<!tpu.dma_semaphore, #tpu.memory_space<semaphore_mem>>)
    %c2_i32 = arith.constant 2 : i32
    %c512_i32 = arith.constant 512 : i32
    %c0_i32_7 = arith.constant 0 : i32
    %8 = tpu.memref_slice %arg11[%c512_i32, %c0_i32_7] : memref<1024x512xbf16, #tpu.memory_space<any>> -> memref<256x512xbf16, #tpu.memory_space<any>>
    %c512_i32_8 = arith.constant 512 : i32
    %c0_i32_9 = arith.constant 0 : i32
    %9 = tpu.memref_slice %arg18[%c512_i32_8, %c0_i32_9] : memref<1024x512xbf16, #tpu.memory_space<vmem>> -> memref<256x512xbf16, #tpu.memory_space<vmem>>
    %10 = tpu.memref_slice %arg21[%c2_i32] : memref<4x!tpu.dma_semaphore, #tpu.memory_space<semaphore_mem>> -> memref<1x!tpu.dma_semaphore, #tpu.memory_space<semaphore_mem>>
    %11 = tpu.memref_squeeze %10 : memref<1x!tpu.dma_semaphore, #tpu.memory_space<semaphore_mem>> -> memref<!tpu.dma_semaphore, #tpu.memory_space<semaphore_mem>>
    tpu.enqueue_dma source(%8 : memref<256x512xbf16, #tpu.memory_space<any>>) target(%9 : memref<256x512xbf16, #tpu.memory_space<vmem>>) target_semaphore(%11 : memref<!tpu.dma_semaphore, #tpu.memory_space<semaphore_mem>>)
    %c3_i32 = arith.constant 3 : i32
    %c768_i32 = arith.constant 768 : i32
    %c0_i32_10 = arith.constant 0 : i32
    %12 = tpu.memref_slice %arg11[%c768_i32, %c0_i32_10] : memref<1024x512xbf16, #tpu.memory_space<any>> -> memref<256x512xbf16, #tpu.memory_space<any>>
    %c768_i32_11 = arith.constant 768 : i32
    %c0_i32_12 = arith.constant 0 : i32
    %13 = tpu.memref_slice %arg18[%c768_i32_11, %c0_i32_12] : memref<1024x512xbf16, #tpu.memory_space<vmem>> -> memref<256x512xbf16, #tpu.memory_space<vmem>>
    %14 = tpu.memref_slice %arg21[%c3_i32] : memref<4x!tpu.dma_semaphore, #tpu.memory_space<semaphore_mem>> -> memref<1x!tpu.dma_semaphore, #tpu.memory_space<semaphore_mem>>
    %15 = tpu.memref_squeeze %14 : memref<1x!tpu.dma_semaphore, #tpu.memory_space<semaphore_mem>> -> memref<!tpu.dma_semaphore, #tpu.memory_space<semaphore_mem>>
    tpu.enqueue_dma source(%12 : memref<256x512xbf16, #tpu.memory_space<any>>) target(%13 : memref<256x512xbf16, #tpu.memory_space<vmem>>) target_semaphore(%15 : memref<!tpu.dma_semaphore, #tpu.memory_space<semaphore_mem>>)
    %c0_i32_13 = arith.constant 0 : i32
    %16 = tpu.memref_slice %arg22[%c0_i32_13] : memref<2x!tpu.dma_semaphore, #tpu.memory_space<semaphore_mem>> -> memref<1x!tpu.dma_semaphore, #tpu.memory_space<semaphore_mem>>
    %17 = tpu.memref_squeeze %16 : memref<1x!tpu.dma_semaphore, #tpu.memory_space<semaphore_mem>> -> memref<!tpu.dma_semaphore, #tpu.memory_space<semaphore_mem>>
    tpu.enqueue_dma source(%arg13 : memref<512x256xbf16, #tpu.memory_space<any>>) target(%arg19 : memref<512x256xbf16, #tpu.memory_space<vmem>>) target_semaphore(%17 : memref<!tpu.dma_semaphore, #tpu.memory_space<semaphore_mem>>)
    %c1_i32_14 = arith.constant 1 : i32
    %18 = tpu.memref_slice %arg22[%c1_i32_14] : memref<2x!tpu.dma_semaphore, #tpu.memory_space<semaphore_mem>> -> memref<1x!tpu.dma_semaphore, #tpu.memory_space<semaphore_mem>>
    %19 = tpu.memref_squeeze %18 : memref<1x!tpu.dma_semaphore, #tpu.memory_space<semaphore_mem>> -> memref<!tpu.dma_semaphore, #tpu.memory_space<semaphore_mem>>
    tpu.enqueue_dma source(%arg15 : memref<256x128xbf16, #tpu.memory_space<any>>) target(%arg20 : memref<256x128xbf16, #tpu.memory_space<vmem>>) target_semaphore(%19 : memref<!tpu.dma_semaphore, #tpu.memory_space<semaphore_mem>>)
    %c0 = arith.constant 0 : index
    %c0_15 = arith.constant 0 : index
    %20 = vector.load %arg0[%c0, %c0_15] : memref<128x16xf32, #tpu.memory_space<vmem>>, vector<128x16xf32>
    %21 = arith.truncf %20 : vector<128x16xf32> to vector<128x16xbf16>
    %c0_16 = arith.constant 0 : index
    %c0_17 = arith.constant 0 : index
    %22 = vector.load %arg1[%c0_16, %c0_17] : memref<16x64xbf16, #tpu.memory_space<vmem>>, vector<16x64xbf16>
    %c0_18 = arith.constant 0 : index
    %c0_19 = arith.constant 0 : index
    %23 = vector.load %arg2[%c0_18, %c0_19] : memref<1x64xf32, #tpu.memory_space<vmem>>, vector<1x64xf32>
    %cst = arith.constant dense<0.000000e+00> : vector<128x64xf32>
    %24 = tpu.matmul %21, %22, %cst {dimension_numbers = #tpu.dot_dimension_numbers<[1], [0], [0], [1], [0, 0, 1, 1], [], []>} : vector<128x16xbf16>, vector<16x64xbf16>, vector<128x64xf32> -> vector<128x64xf32>
    %25 = vector.broadcast %23 : vector<1x64xf32> to vector<128x64xf32>
    %26 = arith.addf %24, %25 : vector<128x64xf32>
    %cst_20 = arith.constant 0.000000e+00 : f32
    %27 = vector.broadcast %cst_20 : f32 to vector<128x64xf32>
    %28 = arith.maximumf %26, %27 : vector<128x64xf32>
    %29 = arith.truncf %28 : vector<128x64xf32> to vector<128x64xbf16>
    %c0_21 = arith.constant 0 : index
    %c0_22 = arith.constant 0 : index
    %30 = vector.load %arg3[%c0_21, %c0_22] : memref<64x64xbf16, #tpu.memory_space<vmem>>, vector<64x64xbf16>
    %c0_23 = arith.constant 0 : index
    %c0_24 = arith.constant 0 : index
    %31 = vector.load %arg4[%c0_23, %c0_24] : memref<1x64xf32, #tpu.memory_space<vmem>>, vector<1x64xf32>
    %cst_25 = arith.constant dense<0.000000e+00> : vector<128x64xf32>
    %32 = tpu.matmul %29, %30, %cst_25 {dimension_numbers = #tpu.dot_dimension_numbers<[1], [0], [0], [1], [0, 0, 1, 1], [], []>} : vector<128x64xbf16>, vector<64x64xbf16>, vector<128x64xf32> -> vector<128x64xf32>
    %33 = vector.broadcast %31 : vector<1x64xf32> to vector<128x64xf32>
    %34 = arith.addf %32, %33 : vector<128x64xf32>
    %cst_26 = arith.constant 0.000000e+00 : f32
    %35 = vector.broadcast %cst_26 : f32 to vector<128x64xf32>
    %36 = arith.maximumf %34, %35 : vector<128x64xf32>
    %37 = arith.truncf %36 : vector<128x64xf32> to vector<128x64xbf16>
    %c0_27 = arith.constant 0 : index
    %c0_28 = arith.constant 0 : index
    %38 = vector.load %arg5[%c0_27, %c0_28] : memref<64x64xbf16, #tpu.memory_space<vmem>>, vector<64x64xbf16>
    %c0_29 = arith.constant 0 : index
    %c0_30 = arith.constant 0 : index
    %39 = vector.load %arg6[%c0_29, %c0_30] : memref<1x64xf32, #tpu.memory_space<vmem>>, vector<1x64xf32>
    %cst_31 = arith.constant dense<0.000000e+00> : vector<128x64xf32>
    %40 = tpu.matmul %37, %38, %cst_31 {dimension_numbers = #tpu.dot_dimension_numbers<[1], [0], [0], [1], [0, 0, 1, 1], [], []>} : vector<128x64xbf16>, vector<64x64xbf16>, vector<128x64xf32> -> vector<128x64xf32>
    %41 = vector.broadcast %39 : vector<1x64xf32> to vector<128x64xf32>
    %42 = arith.addf %40, %41 : vector<128x64xf32>
    %cst_32 = arith.constant 0.000000e+00 : f32
    %43 = vector.broadcast %cst_32 : f32 to vector<128x64xf32>
    %44 = arith.maximumf %42, %43 : vector<128x64xf32>
    %45 = arith.truncf %44 : vector<128x64xf32> to vector<128x64xbf16>
    %c0_33 = arith.constant 0 : index
    %c0_34 = arith.constant 0 : index
    %46 = vector.load %arg7[%c0_33, %c0_34] : memref<64x128xbf16, #tpu.memory_space<vmem>>, vector<64x128xbf16>
    %c0_35 = arith.constant 0 : index
    %c0_36 = arith.constant 0 : index
    %47 = vector.load %arg8[%c0_35, %c0_36] : memref<1x128xf32, #tpu.memory_space<vmem>>, vector<1x128xf32>
    %cst_37 = arith.constant dense<0.000000e+00> : vector<128x128xf32>
    %48 = tpu.matmul %45, %46, %cst_37 {dimension_numbers = #tpu.dot_dimension_numbers<[1], [0], [0], [1], [0, 0, 1, 1], [], []>} : vector<128x64xbf16>, vector<64x128xbf16>, vector<128x128xf32> -> vector<128x128xf32>
    %49 = vector.broadcast %47 : vector<1x128xf32> to vector<128x128xf32>
    %50 = arith.addf %48, %49 : vector<128x128xf32>
    %cst_38 = arith.constant 0.000000e+00 : f32
    %51 = vector.broadcast %cst_38 : f32 to vector<128x128xf32>
    %52 = arith.maximumf %50, %51 : vector<128x128xf32>
    %53 = arith.truncf %52 : vector<128x128xf32> to vector<128x128xbf16>
    %cst_39 = arith.constant 0.000000e+00 : f32
    %54 = vector.broadcast %cst_39 : f32 to vector<2x512xf32>
    %c0_40 = arith.constant 0 : index
    %c0_41 = arith.constant 0 : index
    %55 = vector.load %arg9[%c0_40, %c0_41] : memref<128x1024xbf16, #tpu.memory_space<vmem>>, vector<128x256xbf16>
    %cst_42 = arith.constant dense<0.000000e+00> : vector<128x256xf32>
    %56 = tpu.matmul %53, %55, %cst_42 {dimension_numbers = #tpu.dot_dimension_numbers<[1], [0], [0], [1], [0, 0, 1, 1], [], []>} : vector<128x128xbf16>, vector<128x256xbf16>, vector<128x256xf32> -> vector<128x256xf32>
    %c0_43 = arith.constant 0 : index
    %c0_44 = arith.constant 0 : index
    %57 = vector.load %arg10[%c0_43, %c0_44] : memref<1x1024xf32, #tpu.memory_space<vmem>>, vector<1x256xf32>
    %58 = vector.broadcast %57 : vector<1x256xf32> to vector<128x256xf32>
    %59 = arith.addf %56, %58 : vector<128x256xf32>
    %cst_45 = arith.constant 0.000000e+00 : f32
    %60 = vector.broadcast %cst_45 : f32 to vector<128x256xf32>
    %61 = arith.maximumf %59, %60 : vector<128x256xf32>
    %62 = vector.shape_cast %61 : vector<128x256xf32> to vector<2x64x256xf32>
    %cst_46 = arith.constant dense<0xFF800000> : vector<2x256xf32>
    %63 = vector.multi_reduction <maximumf>, %62, %cst_46 [1] : vector<2x64x256xf32> to vector<2x256xf32>
    %64 = arith.truncf %63 : vector<2x256xf32> to vector<2x256xbf16>
    %c0_i32_47 = arith.constant 0 : i32
    %c0_i32_48 = arith.constant 0 : i32
    %c0_i32_49 = arith.constant 0 : i32
    %65 = tpu.memref_slice %arg11[%c0_i32_48, %c0_i32_49] : memref<1024x512xbf16, #tpu.memory_space<any>> -> memref<256x512xbf16, #tpu.memory_space<any>>
    %c0_i32_50 = arith.constant 0 : i32
    %c0_i32_51 = arith.constant 0 : i32
    %66 = tpu.memref_slice %arg18[%c0_i32_50, %c0_i32_51] : memref<1024x512xbf16, #tpu.memory_space<vmem>> -> memref<256x512xbf16, #tpu.memory_space<vmem>>
    %67 = tpu.memref_slice %arg21[%c0_i32_47] : memref<4x!tpu.dma_semaphore, #tpu.memory_space<semaphore_mem>> -> memref<1x!tpu.dma_semaphore, #tpu.memory_space<semaphore_mem>>
    %68 = tpu.memref_squeeze %67 : memref<1x!tpu.dma_semaphore, #tpu.memory_space<semaphore_mem>> -> memref<!tpu.dma_semaphore, #tpu.memory_space<semaphore_mem>>
    tpu.wait_dma2 semaphore(%68 : memref<!tpu.dma_semaphore, #tpu.memory_space<semaphore_mem>>) src(%65 : memref<256x512xbf16, #tpu.memory_space<any>>) dst(%66 : memref<256x512xbf16, #tpu.memory_space<vmem>>)
    %c0_52 = arith.constant 0 : index
    %c0_53 = arith.constant 0 : index
    %69 = vector.load %arg18[%c0_52, %c0_53] : memref<1024x512xbf16, #tpu.memory_space<vmem>>, vector<256x512xbf16>
    %cst_54 = arith.constant dense<0.000000e+00> : vector<2x512xf32>
    %70 = tpu.matmul %64, %69, %cst_54 {dimension_numbers = #tpu.dot_dimension_numbers<[1], [0], [0], [1], [0, 0, 1, 1], [], []>} : vector<2x256xbf16>, vector<256x512xbf16>, vector<2x512xf32> -> vector<2x512xf32>
    %71 = arith.addf %54, %70 : vector<2x512xf32>
    %c0_55 = arith.constant 0 : index
    %c256 = arith.constant 256 : index
    %72 = vector.load %arg9[%c0_55, %c256] : memref<128x1024xbf16, #tpu.memory_space<vmem>>, vector<128x256xbf16>
    %cst_56 = arith.constant dense<0.000000e+00> : vector<128x256xf32>
    %73 = tpu.matmul %53, %72, %cst_56 {dimension_numbers = #tpu.dot_dimension_numbers<[1], [0], [0], [1], [0, 0, 1, 1], [], []>} : vector<128x128xbf16>, vector<128x256xbf16>, vector<128x256xf32> -> vector<128x256xf32>
    %c0_57 = arith.constant 0 : index
    %c256_58 = arith.constant 256 : index
    %74 = vector.load %arg10[%c0_57, %c256_58] : memref<1x1024xf32, #tpu.memory_space<vmem>>, vector<1x256xf32>
    %75 = vector.broadcast %74 : vector<1x256xf32> to vector<128x256xf32>
    %76 = arith.addf %73, %75 : vector<128x256xf32>
    %cst_59 = arith.constant 0.000000e+00 : f32
    %77 = vector.broadcast %cst_59 : f32 to vector<128x256xf32>
    %78 = arith.maximumf %76, %77 : vector<128x256xf32>
    %79 = vector.shape_cast %78 : vector<128x256xf32> to vector<2x64x256xf32>
    %cst_60 = arith.constant dense<0xFF800000> : vector<2x256xf32>
    %80 = vector.multi_reduction <maximumf>, %79, %cst_60 [1] : vector<2x64x256xf32> to vector<2x256xf32>
    %81 = arith.truncf %80 : vector<2x256xf32> to vector<2x256xbf16>
    %c1_i32_61 = arith.constant 1 : i32
    %c256_i32_62 = arith.constant 256 : i32
    %c0_i32_63 = arith.constant 0 : i32
    %82 = tpu.memref_slice %arg11[%c256_i32_62, %c0_i32_63] : memref<1024x512xbf16, #tpu.memory_space<any>> -> memref<256x512xbf16, #tpu.memory_space<any>>
    %c256_i32_64 = arith.constant 256 : i32
    %c0_i32_65 = arith.constant 0 : i32
    %83 = tpu.memref_slice %arg18[%c256_i32_64, %c0_i32_65] : memref<1024x512xbf16, #tpu.memory_space<vmem>> -> memref<256x512xbf16, #tpu.memory_space<vmem>>
    %84 = tpu.memref_slice %arg21[%c1_i32_61] : memref<4x!tpu.dma_semaphore, #tpu.memory_space<semaphore_mem>> -> memref<1x!tpu.dma_semaphore, #tpu.memory_space<semaphore_mem>>
    %85 = tpu.memref_squeeze %84 : memref<1x!tpu.dma_semaphore, #tpu.memory_space<semaphore_mem>> -> memref<!tpu.dma_semaphore, #tpu.memory_space<semaphore_mem>>
    tpu.wait_dma2 semaphore(%85 : memref<!tpu.dma_semaphore, #tpu.memory_space<semaphore_mem>>) src(%82 : memref<256x512xbf16, #tpu.memory_space<any>>) dst(%83 : memref<256x512xbf16, #tpu.memory_space<vmem>>)
    %c256_66 = arith.constant 256 : index
    %c0_67 = arith.constant 0 : index
    %86 = vector.load %arg18[%c256_66, %c0_67] : memref<1024x512xbf16, #tpu.memory_space<vmem>>, vector<256x512xbf16>
    %cst_68 = arith.constant dense<0.000000e+00> : vector<2x512xf32>
    %87 = tpu.matmul %81, %86, %cst_68 {dimension_numbers = #tpu.dot_dimension_numbers<[1], [0], [0], [1], [0, 0, 1, 1], [], []>} : vector<2x256xbf16>, vector<256x512xbf16>, vector<2x512xf32> -> vector<2x512xf32>
    %88 = arith.addf %71, %87 : vector<2x512xf32>
    %c0_69 = arith.constant 0 : index
    %c512 = arith.constant 512 : index
    %89 = vector.load %arg9[%c0_69, %c512] : memref<128x1024xbf16, #tpu.memory_space<vmem>>, vector<128x256xbf16>
    %cst_70 = arith.constant dense<0.000000e+00> : vector<128x256xf32>
    %90 = tpu.matmul %53, %89, %cst_70 {dimension_numbers = #tpu.dot_dimension_numbers<[1], [0], [0], [1], [0, 0, 1, 1], [], []>} : vector<128x128xbf16>, vector<128x256xbf16>, vector<128x256xf32> -> vector<128x256xf32>
    %c0_71 = arith.constant 0 : index
    %c512_72 = arith.constant 512 : index
    %91 = vector.load %arg10[%c0_71, %c512_72] : memref<1x1024xf32, #tpu.memory_space<vmem>>, vector<1x256xf32>
    %92 = vector.broadcast %91 : vector<1x256xf32> to vector<128x256xf32>
    %93 = arith.addf %90, %92 : vector<128x256xf32>
    %cst_73 = arith.constant 0.000000e+00 : f32
    %94 = vector.broadcast %cst_73 : f32 to vector<128x256xf32>
    %95 = arith.maximumf %93, %94 : vector<128x256xf32>
    %96 = vector.shape_cast %95 : vector<128x256xf32> to vector<2x64x256xf32>
    %cst_74 = arith.constant dense<0xFF800000> : vector<2x256xf32>
    %97 = vector.multi_reduction <maximumf>, %96, %cst_74 [1] : vector<2x64x256xf32> to vector<2x256xf32>
    %98 = arith.truncf %97 : vector<2x256xf32> to vector<2x256xbf16>
    %c2_i32_75 = arith.constant 2 : i32
    %c512_i32_76 = arith.constant 512 : i32
    %c0_i32_77 = arith.constant 0 : i32
    %99 = tpu.memref_slice %arg11[%c512_i32_76, %c0_i32_77] : memref<1024x512xbf16, #tpu.memory_space<any>> -> memref<256x512xbf16, #tpu.memory_space<any>>
    %c512_i32_78 = arith.constant 512 : i32
    %c0_i32_79 = arith.constant 0 : i32
    %100 = tpu.memref_slice %arg18[%c512_i32_78, %c0_i32_79] : memref<1024x512xbf16, #tpu.memory_space<vmem>> -> memref<256x512xbf16, #tpu.memory_space<vmem>>
    %101 = tpu.memref_slice %arg21[%c2_i32_75] : memref<4x!tpu.dma_semaphore, #tpu.memory_space<semaphore_mem>> -> memref<1x!tpu.dma_semaphore, #tpu.memory_space<semaphore_mem>>
    %102 = tpu.memref_squeeze %101 : memref<1x!tpu.dma_semaphore, #tpu.memory_space<semaphore_mem>> -> memref<!tpu.dma_semaphore, #tpu.memory_space<semaphore_mem>>
    tpu.wait_dma2 semaphore(%102 : memref<!tpu.dma_semaphore, #tpu.memory_space<semaphore_mem>>) src(%99 : memref<256x512xbf16, #tpu.memory_space<any>>) dst(%100 : memref<256x512xbf16, #tpu.memory_space<vmem>>)
    %c512_80 = arith.constant 512 : index
    %c0_81 = arith.constant 0 : index
    %103 = vector.load %arg18[%c512_80, %c0_81] : memref<1024x512xbf16, #tpu.memory_space<vmem>>, vector<256x512xbf16>
    %cst_82 = arith.constant dense<0.000000e+00> : vector<2x512xf32>
    %104 = tpu.matmul %98, %103, %cst_82 {dimension_numbers = #tpu.dot_dimension_numbers<[1], [0], [0], [1], [0, 0, 1, 1], [], []>} : vector<2x256xbf16>, vector<256x512xbf16>, vector<2x512xf32> -> vector<2x512xf32>
    %105 = arith.addf %88, %104 : vector<2x512xf32>
    %c0_83 = arith.constant 0 : index
    %c768 = arith.constant 768 : index
    %106 = vector.load %arg9[%c0_83, %c768] : memref<128x1024xbf16, #tpu.memory_space<vmem>>, vector<128x256xbf16>
    %cst_84 = arith.constant dense<0.000000e+00> : vector<128x256xf32>
    %107 = tpu.matmul %53, %106, %cst_84 {dimension_numbers = #tpu.dot_dimension_numbers<[1], [0], [0], [1], [0, 0, 1, 1], [], []>} : vector<128x128xbf16>, vector<128x256xbf16>, vector<128x256xf32> -> vector<128x256xf32>
    %c0_85 = arith.constant 0 : index
    %c768_86 = arith.constant 768 : index
    %108 = vector.load %arg10[%c0_85, %c768_86] : memref<1x1024xf32, #tpu.memory_space<vmem>>, vector<1x256xf32>
    %109 = vector.broadcast %108 : vector<1x256xf32> to vector<128x256xf32>
    %110 = arith.addf %107, %109 : vector<128x256xf32>
    %cst_87 = arith.constant 0.000000e+00 : f32
    %111 = vector.broadcast %cst_87 : f32 to vector<128x256xf32>
    %112 = arith.maximumf %110, %111 : vector<128x256xf32>
    %113 = vector.shape_cast %112 : vector<128x256xf32> to vector<2x64x256xf32>
    %cst_88 = arith.constant dense<0xFF800000> : vector<2x256xf32>
    %114 = vector.multi_reduction <maximumf>, %113, %cst_88 [1] : vector<2x64x256xf32> to vector<2x256xf32>
    %115 = arith.truncf %114 : vector<2x256xf32> to vector<2x256xbf16>
    %c3_i32_89 = arith.constant 3 : i32
    %c768_i32_90 = arith.constant 768 : i32
    %c0_i32_91 = arith.constant 0 : i32
    %116 = tpu.memref_slice %arg11[%c768_i32_90, %c0_i32_91] : memref<1024x512xbf16, #tpu.memory_space<any>> -> memref<256x512xbf16, #tpu.memory_space<any>>
    %c768_i32_92 = arith.constant 768 : i32
    %c0_i32_93 = arith.constant 0 : i32
    %117 = tpu.memref_slice %arg18[%c768_i32_92, %c0_i32_93] : memref<1024x512xbf16, #tpu.memory_space<vmem>> -> memref<256x512xbf16, #tpu.memory_space<vmem>>
    %118 = tpu.memref_slice %arg21[%c3_i32_89] : memref<4x!tpu.dma_semaphore, #tpu.memory_space<semaphore_mem>> -> memref<1x!tpu.dma_semaphore, #tpu.memory_space<semaphore_mem>>
    %119 = tpu.memref_squeeze %118 : memref<1x!tpu.dma_semaphore, #tpu.memory_space<semaphore_mem>> -> memref<!tpu.dma_semaphore, #tpu.memory_space<semaphore_mem>>
    tpu.wait_dma2 semaphore(%119 : memref<!tpu.dma_semaphore, #tpu.memory_space<semaphore_mem>>) src(%116 : memref<256x512xbf16, #tpu.memory_space<any>>) dst(%117 : memref<256x512xbf16, #tpu.memory_space<vmem>>)
    %c768_94 = arith.constant 768 : index
    %c0_95 = arith.constant 0 : index
    %120 = vector.load %arg18[%c768_94, %c0_95] : memref<1024x512xbf16, #tpu.memory_space<vmem>>, vector<256x512xbf16>
    %cst_96 = arith.constant dense<0.000000e+00> : vector<2x512xf32>
    %121 = tpu.matmul %115, %120, %cst_96 {dimension_numbers = #tpu.dot_dimension_numbers<[1], [0], [0], [1], [0, 0, 1, 1], [], []>} : vector<2x256xbf16>, vector<256x512xbf16>, vector<2x512xf32> -> vector<2x512xf32>
    %122 = arith.addf %105, %121 : vector<2x512xf32>
    %c0_97 = arith.constant 0 : index
    %c0_98 = arith.constant 0 : index
    %123 = vector.load %arg12[%c0_97, %c0_98] : memref<1x512xf32, #tpu.memory_space<vmem>>, vector<1x512xf32>
    %124 = vector.broadcast %123 : vector<1x512xf32> to vector<2x512xf32>
    %125 = arith.addf %122, %124 : vector<2x512xf32>
    %cst_99 = arith.constant 0.000000e+00 : f32
    %126 = vector.broadcast %cst_99 : f32 to vector<2x512xf32>
    %127 = arith.maximumf %125, %126 : vector<2x512xf32>
    %128 = arith.truncf %127 : vector<2x512xf32> to vector<2x512xbf16>
    %c0_i32_100 = arith.constant 0 : i32
    %129 = tpu.memref_slice %arg22[%c0_i32_100] : memref<2x!tpu.dma_semaphore, #tpu.memory_space<semaphore_mem>> -> memref<1x!tpu.dma_semaphore, #tpu.memory_space<semaphore_mem>>
    %130 = tpu.memref_squeeze %129 : memref<1x!tpu.dma_semaphore, #tpu.memory_space<semaphore_mem>> -> memref<!tpu.dma_semaphore, #tpu.memory_space<semaphore_mem>>
    tpu.wait_dma2 semaphore(%130 : memref<!tpu.dma_semaphore, #tpu.memory_space<semaphore_mem>>) src(%arg13 : memref<512x256xbf16, #tpu.memory_space<any>>) dst(%arg19 : memref<512x256xbf16, #tpu.memory_space<vmem>>)
    %c0_101 = arith.constant 0 : index
    %c0_102 = arith.constant 0 : index
    %131 = vector.load %arg19[%c0_101, %c0_102] : memref<512x256xbf16, #tpu.memory_space<vmem>>, vector<512x256xbf16>
    %c0_103 = arith.constant 0 : index
    %c0_104 = arith.constant 0 : index
    %132 = vector.load %arg14[%c0_103, %c0_104] : memref<1x256xf32, #tpu.memory_space<vmem>>, vector<1x256xf32>
    %cst_105 = arith.constant dense<0.000000e+00> : vector<2x256xf32>
    %133 = tpu.matmul %128, %131, %cst_105 {dimension_numbers = #tpu.dot_dimension_numbers<[1], [0], [0], [1], [0, 0, 1, 1], [], []>} : vector<2x512xbf16>, vector<512x256xbf16>, vector<2x256xf32> -> vector<2x256xf32>
    %134 = vector.broadcast %132 : vector<1x256xf32> to vector<2x256xf32>
    %135 = arith.addf %133, %134 : vector<2x256xf32>
    %cst_106 = arith.constant 0.000000e+00 : f32
    %136 = vector.broadcast %cst_106 : f32 to vector<2x256xf32>
    %137 = arith.maximumf %135, %136 : vector<2x256xf32>
    %138 = arith.truncf %137 : vector<2x256xf32> to vector<2x256xbf16>
    %c1_i32_107 = arith.constant 1 : i32
    %139 = tpu.memref_slice %arg22[%c1_i32_107] : memref<2x!tpu.dma_semaphore, #tpu.memory_space<semaphore_mem>> -> memref<1x!tpu.dma_semaphore, #tpu.memory_space<semaphore_mem>>
    %140 = tpu.memref_squeeze %139 : memref<1x!tpu.dma_semaphore, #tpu.memory_space<semaphore_mem>> -> memref<!tpu.dma_semaphore, #tpu.memory_space<semaphore_mem>>
    tpu.wait_dma2 semaphore(%140 : memref<!tpu.dma_semaphore, #tpu.memory_space<semaphore_mem>>) src(%arg15 : memref<256x128xbf16, #tpu.memory_space<any>>) dst(%arg20 : memref<256x128xbf16, #tpu.memory_space<vmem>>)
    %c0_108 = arith.constant 0 : index
    %c0_109 = arith.constant 0 : index
    %141 = vector.load %arg20[%c0_108, %c0_109] : memref<256x128xbf16, #tpu.memory_space<vmem>>, vector<256x128xbf16>
    %cst_110 = arith.constant dense<0.000000e+00> : vector<2x128xf32>
    %142 = tpu.matmul %138, %141, %cst_110 {dimension_numbers = #tpu.dot_dimension_numbers<[1], [0], [0], [1], [0, 0, 1, 1], [], []>} : vector<2x256xbf16>, vector<256x128xbf16>, vector<2x128xf32> -> vector<2x128xf32>
    %c0_111 = arith.constant 0 : index
    %c0_112 = arith.constant 0 : index
    %143 = vector.load %arg16[%c0_111, %c0_112] : memref<1x128xf32, #tpu.memory_space<vmem>>, vector<1x128xf32>
    %144 = vector.broadcast %143 : vector<1x128xf32> to vector<2x128xf32>
    %145 = arith.addf %142, %144 : vector<2x128xf32>
    %c0_113 = arith.constant 0 : index
    %c0_114 = arith.constant 0 : index
    %146 = vector.load %arg17[%c0_113, %c0_114] : memref<2x128xf32, #tpu.memory_space<vmem>>, vector<2x128xf32>
    tpu.vector_store %arg17[%c0_113, %c0_114], %145 {strides = array<i32>} : memref<2x128xf32, #tpu.memory_space<vmem>>, vector<2x128xf32>,
    return
  }
}

</mosaic_0001>

<llo_original>
// kernel: tpu_custom_call.1
$region0: #{tpu_custom_call.1}
  #allocation0 [shape = 'u32[]', space=smem, size = 0x4, offset = 0x4, fixed_abs, tag = 'smem constant byte address 0x4 - core index']
  #allocation1 [shape = 'u32[72,128]{1,0:T(1,128)}', space=vmem, size = 0x9000, scoped, tag = 'internal scratch']
  #allocation2 [shape = 'bf16[1024,512]{1,0:T(8,128)(2,1)}', space=vmem, size = 0x100000, scoped, tag = 'scratch operand']
  #allocation3 [shape = 'bf16[512,256]{1,0:T(8,128)(2,1)}', space=vmem, size = 0x40000, scoped, tag = 'scratch operand']
  #allocation4 [shape = 'bf16[256,128]{1,0:T(8,128)(2,1)}', space=vmem, size = 0x10000, scoped, tag = 'scratch operand']
  #allocation5 [shape = 's32[4]{0}', space=sflag, size = 0x10, scoped, tag = 'scratch operand']
  #allocation6 [shape = 's32[2]{0}', space=sflag, size = 0x8, scoped, tag = 'scratch operand']
  #allocation16 [shape = 's32[]', space=sflag, size = 0x4, offset = 0, fixed_abs, tag = 'sflag constant byte address 0x0 - dummy sync flag']
  #allocation17 [shape = 's32[]', space=sflag, size = 0x4, offset = 0, fixed_abs, tag = 'sflag constant byte address 0x0 - dummy sync flag']
  #allocation18 [shape = 'u32[]', space=smem, size = 0x4, offset = 0x44, fixed_abs, tag = 'smem constant byte address 0x44 - assertion arg 0']
  #allocation19 [shape = 'u32[]', space=smem, size = 0x4, offset = 0x48, fixed_abs, tag = 'smem constant byte address 0x48 - assertion arg 1']
  #allocation20 [shape = 's32[]', space=sflag, size = 0x4, offset = 0, fixed_abs, tag = 'sflag constant byte address 0x0 - dummy sync flag']
  #allocation21 [shape = 's32[]', space=sflag, size = 0x4, offset = 0, fixed_abs, tag = 'sflag constant byte address 0x0 - dummy sync flag']
  #allocation22 [shape = 's32[]', space=sflag, size = 0x4, offset = 0, fixed_abs, tag = 'sflag constant byte address 0x0 - dummy sync flag']
  #allocation23 [shape = 's32[]', space=sflag, size = 0x4, offset = 0, fixed_abs, tag = 'sflag constant byte address 0x0 - dummy sync flag']
  #allocation24 [shape = 's32[]', space=sflag, size = 0x4, offset = 0, fixed_abs, tag = 'sflag constant byte address 0x0 - dummy sync flag']
  #allocation25 [shape = 's32[]', space=sflag, size = 0x4, offset = 0, fixed_abs, tag = 'sflag constant byte address 0x0 - dummy sync flag']
  #allocation26 [shape = 's32[]', space=sflag, size = 0x4, offset = 0, fixed_abs, tag = 'sflag constant byte address 0x0 - dummy sync flag']
  #allocation27 [shape = 's32[]', space=sflag, size = 0x4, offset = 0, fixed_abs, tag = 'sflag constant byte address 0x0 - dummy sync flag']
  #allocation28 [shape = 's32[]', space=sflag, size = 0x4, offset = 0, fixed_abs, tag = 'sflag constant byte address 0x0 - dummy sync flag']
  %s0 = inlined_call_operand.vmem [shape: f32[128,16], index: 0, kind: input, shape index: {}]
  %s1 = inlined_call_operand.vmem [shape: bf16[16,64], index: 1, kind: input, shape index: {}]
  %s2 = inlined_call_operand.vmem [shape: f32[1,64], index: 2, kind: input, shape index: {}]
  %s3 = inlined_call_operand.hbm [shape: bf16[64,64], index: 3, kind: input, shape index: {}]
  %s4 = inlined_call_operand.vmem [shape: f32[1,64], index: 4, kind: input, shape index: {}]
  %s5 = inlined_call_operand.hbm [shape: bf16[64,64], index: 5, kind: input, shape index: {}]
  %s6 = inlined_call_operand.vmem [shape: f32[1,64], index: 6, kind: input, shape index: {}]
  %s7 = inlined_call_operand.hbm [shape: bf16[64,128], index: 7, kind: input, shape index: {}]
  %s8 = inlined_call_operand.vmem [shape: f32[1,128], index: 8, kind: input, shape index: {}]
  %s9 = inlined_call_operand.hbm [shape: bf16[128,1024], index: 9, kind: input, shape index: {}]
  %s10 = inlined_call_operand.vmem [shape: f32[1,1024], index: 10, kind: input, shape index: {}]
  %s11 = inlined_call_operand.hbm [shape: bf16[1024,512], index: 11, kind: input, shape index: {}]
  %s12 = inlined_call_operand.vmem [shape: f32[1,512], index: 12, kind: input, shape index: {}]
  %s13 = inlined_call_operand.hbm [shape: bf16[512,256], index: 13, kind: input, shape index: {}]
  %s14 = inlined_call_operand.vmem [shape: f32[1,256], index: 14, kind: input, shape index: {}]
  %s15 = inlined_call_operand.vmem [shape: bf16[256,128], index: 15, kind: input, shape index: {}]
  %s16 = inlined_call_operand.vmem [shape: f32[1,128], index: 16, kind: input, shape index: {}]
  %s17 = inlined_call_operand.hbm [shape: f32[2,128], index: 17, kind: output, shape index: {}]
  %s18 = sld [smem:[#allocation0]]
  $region121: #{tpu_custom_call.1} parent=0
    _
  %s20 = ssub.s32 1, %s18
  %s21 = scalar_select 0, %s20, %s18
  $region1: #{tpu_custom_call.1} parent=0
    #allocation7 [shape = 'u8[16384]{0}', space=vmem, size = 0x4000, scoped, tag = 'input window, operand 3, single buffered']
    #allocation8 [shape = 's32[1]{0}', space=sflag, size = 0x4, scoped, tag = 'scoped memory for tpu_custom_call.1']
    #allocation9 [shape = 's32[1]{0}', space=sflag, size = 0x4, scoped, tag = 'scoped memory for tpu_custom_call.1']
    #allocation10 [shape = 'u8[16384]{0}', space=vmem, size = 0x4000, scoped, tag = 'input window, operand 5, single buffered']
    #allocation11 [shape = 's32[1]{0}', space=sflag, size = 0x4, scoped, tag = 'scoped memory for tpu_custom_call.1']
    #allocation12 [shape = 'u8[16384]{0}', space=vmem, size = 0x4000, scoped, tag = 'input window, operand 7, single buffered']
    #allocation13 [shape = 'u8[262144]{0}', space=vmem, size = 0x40000, scoped, tag = 'input window, operand 9, single buffered']
    #allocation14 [shape = 's32[1]{0}', space=sflag, size = 0x4, scoped, tag = 'scoped memory for tpu_custom_call.1']
    #allocation15 [shape = 'u8[1024]{0}', space=vmem, size = 0x400, scoped, tag = 'output window, operand 0, single buffered']
    %22 = vsyncpa [#allocation8], 0
    %23 = vsyncpa [#allocation11], 0
    %24 = vsyncpa [#allocation14], 0
    %25 = vsyncpa [#allocation9], 0
    // Predicated region
    $region2: #{tpu_custom_call.1} parent=1 // pred_check
      _
    $region3: #{tpu_custom_call.1} parent=1 // pred_check_branch
      %27 = sbr.rel (0) target = $region5
    $region4: #{tpu_custom_call.1} parent=1 // pred_region
      _
    $region5: #{tpu_custom_call.1} parent=1 // pred_fallthru
      _
    // Predicated region
    $region6: #{tpu_custom_call.1} parent=1 // pred_check
      _
    $region7: #{tpu_custom_call.1} parent=1 // pred_check_branch
      %29 = sbr.rel (0) target = $region9
    $region8: #{tpu_custom_call.1} parent=1 // pred_region
      _
    $region9: #{tpu_custom_call.1} parent=1 // pred_fallthru
      _
    // Predicated region
    $region10: #{tpu_custom_call.1} parent=1 // pred_check
      _
    $region11: #{tpu_custom_call.1} parent=1 // pred_check_branch
      %31 = sbr.rel (0) target = $region13
    $region12: #{tpu_custom_call.1} parent=1 // pred_region
      _
    $region13: #{tpu_custom_call.1} parent=1 // pred_fallthru
      _
    // Predicated region
    $region14: #{tpu_custom_call.1} parent=1 // pred_check
      _
    $region15: #{tpu_custom_call.1} parent=1 // pred_check_branch
      %33 = sbr.rel (0) target = $region17
    $region16: #{tpu_custom_call.1} parent=1 // pred_region
      %35 = vsyncadd [#allocation8], 0
      %s36 = sshll.u32 %s3, 4
      %s37 = int_to_ptr.hbm [resolvable:$true] %s36
      %s38 = sshll.u32 [#allocation7], 4
      %s39 = int_to_ptr.vmem [resolvable:$true] %s38
      %44 = dma.hbm_to_vmem [thread:$0]  %s37, 512, %s39, [#allocation8], 64, 64, 4
    $region17: #{tpu_custom_call.1} parent=1 // pred_fallthru
      _
    // Predicated region
    $region18: #{tpu_custom_call.1} parent=1 // pred_check
      _
    $region19: #{tpu_custom_call.1} parent=1 // pred_check_branch
      %46 = sbr.rel (0) target = $region21
    $region20: #{tpu_custom_call.1} parent=1 // pred_region
      _
    $region21: #{tpu_custom_call.1} parent=1 // pred_fallthru
      _
    // Predicated region
    $region22: #{tpu_custom_call.1} parent=1 // pred_check
      _
    $region23: #{tpu_custom_call.1} parent=1 // pred_check_branch
      %48 = sbr.rel (0) target = $region25
    $region24: #{tpu_custom_call.1} parent=1 // pred_region
      %50 = vsyncadd [#allocation11], 0
      %s51 = sshll.u32 %s5, 4
      %s52 = int_to_ptr.hbm [resolvable:$true] %s51
      %s53 = sshll.u32 [#allocation10], 4
      %s54 = int_to_ptr.vmem [resolvable:$true] %s53
      %59 = dma.hbm_to_vmem [thread:$0]  %s52, 512, %s54, [#allocation11], 64, 64, 4
    $region25: #{tpu_custom_call.1} parent=1 // pred_fallthru
      _
    // Predicated region
    $region26: #{tpu_custom_call.1} parent=1 // pred_check
      _
    $region27: #{tpu_custom_call.1} parent=1 // pred_check_branch
      %61 = sbr.rel (0) target = $region29
    $region28: #{tpu_custom_call.1} parent=1 // pred_region
      _
    $region29: #{tpu_custom_call.1} parent=1 // pred_fallthru
      _
    // Predicated region
    $region30: #{tpu_custom_call.1} parent=1 // pred_check
      _
    $region31: #{tpu_custom_call.1} parent=1 // pred_check_branch
      %63 = sbr.rel (0) target = $region33
    $region32: #{tpu_custom_call.1} parent=1 // pred_region
      %65 = vsyncadd [#allocation11], 0
      %s66 = sshll.u32 %s7, 4
      %s67 = int_to_ptr.hbm [resolvable:$true] %s66
      %s68 = sshll.u32 [#allocation12], 4
      %s69 = int_to_ptr.vmem [resolvable:$true] %s68
      %74 = dma.hbm_to_vmem [thread:$0]  %s67, 512, %s69, [#allocation11], 64, 64, 4
    $region33: #{tpu_custom_call.1} parent=1 // pred_fallthru
      _
    // Predicated region
    $region34: #{tpu_custom_call.1} parent=1 // pred_check
      _
    $region35: #{tpu_custom_call.1} parent=1 // pred_check_branch
      %76 = sbr.rel (0) target = $region37
    $region36: #{tpu_custom_call.1} parent=1 // pred_region
      _
    $region37: #{tpu_custom_call.1} parent=1 // pred_fallthru
      _
    // Predicated region
    $region38: #{tpu_custom_call.1} parent=1 // pred_check
      _
    $region39: #{tpu_custom_call.1} parent=1 // pred_check_branch
      %78 = sbr.rel (0) target = $region41
    $region40: #{tpu_custom_call.1} parent=1 // pred_region
      %80 = vsyncadd [#allocation14], 0
      %s81 = sshll.u32 %s9, 4
      %s82 = int_to_ptr.hbm [resolvable:$true] %s81
      %s83 = sshll.u32 [#allocation13], 4
      %s84 = int_to_ptr.vmem [resolvable:$true] %s83
      %89 = dma.hbm_to_vmem [thread:$0]  %s82, 8192, %s84, [#allocation14], 512, 512, 32
    $region41: #{tpu_custom_call.1} parent=1 // pred_fallthru
      _
    // Predicated region
    $region42: #{tpu_custom_call.1} parent=1 // pred_check
      _
    $region43: #{tpu_custom_call.1} parent=1 // pred_check_branch
      %91 = sbr.rel (0) target = $region45
    $region44: #{tpu_custom_call.1} parent=1 // pred_region
      _
    $region45: #{tpu_custom_call.1} parent=1 // pred_fallthru
      _
    // Predicated region
    $region46: #{tpu_custom_call.1} parent=1 // pred_check
      _
    $region47: #{tpu_custom_call.1} parent=1 // pred_check_branch
      %93 = sbr.rel (0) target = $region49
    $region48: #{tpu_custom_call.1} parent=1 // pred_region
      _
    $region49: #{tpu_custom_call.1} parent=1 // pred_fallthru
      _
    // Predicated region
    $region50: #{tpu_custom_call.1} parent=1 // pred_check
      _
    $region51: #{tpu_custom_call.1} parent=1 // pred_check_branch
      %95 = sbr.rel (0) target = $region53
    $region52: #{tpu_custom_call.1} parent=1 // pred_region
      _
    $region53: #{tpu_custom_call.1} parent=1 // pred_fallthru
      _
    // Predicated region
    $region54: #{tpu_custom_call.1} parent=1 // pred_check
      _
    $region55: #{tpu_custom_call.1} parent=1 // pred_check_branch
      %97 = sbr.rel (0) target = $region57
    $region56: #{tpu_custom_call.1} parent=1 // pred_region
      _
    $region57: #{tpu_custom_call.1} parent=1 // pred_fallthru
      _
    // Predicated region
    $region58: #{tpu_custom_call.1} parent=1 // pred_check
      _
    $region59: #{tpu_custom_call.1} parent=1 // pred_check_branch
      %99 = sbr.rel (0) target = $region61
    $region60: #{tpu_custom_call.1} parent=1 // pred_region
      %101 = dma.done [#allocation8], 512
    $region61: #{tpu_custom_call.1} parent=1 // pred_fallthru
      _
    // Predicated region
    $region62: #{tpu_custom_call.1} parent=1 // pred_check
      _
    $region63: #{tpu_custom_call.1} parent=1 // pred_check_branch
      %103 = sbr.rel (0) target = $region65
    $region64: #{tpu_custom_call.1} parent=1 // pred_region
      %105 = dma.done [#allocation11], 512
    $region65: #{tpu_custom_call.1} parent=1 // pred_fallthru
      _
    // Predicated region
    $region66: #{tpu_custom_call.1} parent=1 // pred_check
      _
    $region67: #{tpu_custom_call.1} parent=1 // pred_check_branch
      %107 = sbr.rel (0) target = $region69
    $region68: #{tpu_custom_call.1} parent=1 // pred_region
      %109 = dma.done [#allocation11], 512
    $region69: #{tpu_custom_call.1} parent=1 // pred_fallthru
      _
    // Predicated region
    $region70: #{tpu_custom_call.1} parent=1 // pred_check
      _
    $region71: #{tpu_custom_call.1} parent=1 // pred_check_branch
      %111 = sbr.rel (0) target = $region73
    $region72: #{tpu_custom_call.1} parent=1 // pred_region
      %113 = dma.done [#allocation14], 8192
    $region73: #{tpu_custom_call.1} parent=1 // pred_fallthru
      _
    // Predicated region
    $region74: #{tpu_custom_call.1} parent=1 // pred_check
      _
    $region75: #{tpu_custom_call.1} parent=1 // pred_check_branch
      %116 = sbr.rel target = $region77
    $region76: #{tpu_custom_call.1} parent=1 // pred_region
      %117 = sst [smem:[#allocation18]] [#allocation17]
      %118 = sst [smem:[#allocation19]] [#allocation16]
    $region77: #{tpu_custom_call.1} parent=1 // pred_fallthru
      _
    %120 = shalt.err (0)
    %s122 = sshll.u32 %s11, 4
    %s123 = int_to_ptr.hbm [resolvable:$true] %s122
    %s124 = sshll.u32 [#allocation2], 4
    %s125 = int_to_ptr.vmem [resolvable:$true] %s124
    %127 = dma.hbm_to_vmem [thread:$0]  %s123, 8192, %s125, [#allocation5]
    %s128 = scalar_lea.hbm %s11, 512
    %s129 = scalar_lea.vmem [#allocation2], 512
    %s130 = scalar_lea.sflag [#allocation5], 1
    // Predicated region
    $region78: #{tpu_custom_call.1} parent=1 // pred_check
      _
    $region79: #{tpu_custom_call.1} parent=1 // pred_check_branch
      %132 = sbr.rel target = $region81
    $region80: #{tpu_custom_call.1} parent=1 // pred_region
      %133 = sst [smem:[#allocation18]] [#allocation21]
      %134 = sst [smem:[#allocation19]] [#allocation20]
    $region81: #{tpu_custom_call.1} parent=1 // pred_fallthru
      _
    %136 = shalt.err (0)
    %s138 = sshll.u32 %s128, 4
    %s139 = int_to_ptr.hbm [resolvable:$true] %s138
    %s140 = sshll.u32 %s129, 4
    %s141 = int_to_ptr.vmem [resolvable:$true] %s140
    %143 = dma.hbm_to_vmem [thread:$0]  %s139, 8192, %s141, %s130
    %s144 = scalar_lea.hbm %s11, 1024
    %s145 = scalar_lea.vmem [#allocation2], 1024
    %s146 = scalar_lea.sflag [#allocation5], 2
    // Predicated region
    $region82: #{tpu_custom_call.1} parent=1 // pred_check
      _
    $region83: #{tpu_custom_call.1} parent=1 // pred_check_branch
      %148 = sbr.rel target = $region85
    $region84: #{tpu_custom_call.1} parent=1 // pred_region
      %149 = sst [smem:[#allocation18]] [#allocation23]
      %150 = sst [smem:[#allocation19]] [#allocation22]
    $region85: #{tpu_custom_call.1} parent=1 // pred_fallthru
      _
    %152 = shalt.err (0)
    %s154 = sshll.u32 %s144, 4
    %s155 = int_to_ptr.hbm [resolvable:$true] %s154
    %s156 = sshll.u32 %s145, 4
    %s157 = int_to_ptr.vmem [resolvable:$true] %s156
    %159 = dma.hbm_to_vmem [thread:$0]  %s155, 8192, %s157, %s146
    %s160 = scalar_lea.hbm %s11, 1536
    %s161 = scalar_lea.vmem [#allocation2], 1536
    %s162 = scalar_lea.sflag [#allocation5], 3
    // Predicated region
    $region86: #{tpu_custom_call.1} parent=1 // pred_check
      _
    $region87: #{tpu_custom_call.1} parent=1 // pred_check_branch
      %164 = sbr.rel target = $region89
    $region88: #{tpu_custom_call.1} parent=1 // pred_region
      %165 = sst [smem:[#allocation18]] [#allocation25]
      %166 = sst [smem:[#allocation19]] [#allocation24]
    $region89: #{tpu_custom_call.1} parent=1 // pred_fallthru
      _
    %168 = shalt.err (0)
    %s170 = sshll.u32 %s160, 4
    %s171 = int_to_ptr.hbm [resolvable:$true] %s170
    %s172 = sshll.u32 %s161, 4
    %s173 = int_to_ptr.vmem [resolvable:$true] %s172
    %175 = dma.hbm_to_vmem [thread:$0]  %s171, 8192, %s173, %s162
    // Predicated region
    $region90: #{tpu_custom_call.1} parent=1 // pred_check
      _
    $region91: #{tpu_custom_call.1} parent=1 // pred_check_branch
      %177 = sbr.rel target = $region93
    $region92: #{tpu_custom_call.1} parent=1 // pred_region
      %178 = sst [smem:[#allocation18]] [#allocation27]
      %179 = sst [smem:[#allocation19]] [#allocation26]
    $region93: #{tpu_custom_call.1} parent=1 // pred_fallthru
      _
    %181 = shalt.err (0)
    %s183 = sshll.u32 %s13, 4
    %s184 = int_to_ptr.hbm [resolvable:$true] %s183
    %s185 = sshll.u32 [#allocation3], 4
    %s186 = int_to_ptr.vmem [resolvable:$true] %s185
    %188 = dma.hbm_to_vmem [thread:$0]  %s184, 8192, %s186, [#allocation6]
    %s189 = scalar_lea.sflag [#allocation6], 1
    // Predicated region
    $region94: #{tpu_custom_call.1} parent=1 // pred_check
      _
    $region95: #{tpu_custom_call.1} parent=1 // pred_check_branch
      %191 = sbr.rel (0) target = $region97
    $region96: #{tpu_custom_call.1} parent=1 // pred_region
      loop: start=0, step=1, limit=1
      $region98: #{tpu_custom_call.1} parent=96 // loop_pre_header
        _
      $region99: #{tpu_custom_call.1} parent=96 // loop_header
        %s193 = sphi 0, %s197
        %p194 = scmp.ge.s32.totalorder %s193, 1
        %s198 = sphi %s15, %s15
        %s199 = sphi [#allocation4], [#allocation4]
      $region100: #{tpu_custom_call.1} parent=96 // loop_header_branch
        %196 = sbr.rel (%p194) target = $region104
      $region101: #{tpu_custom_call.1} parent=96 // loop_body
        %v200 = vld [vmem:[%s198] sm:$0xff]
        %201 = vst [vmem:[%s199] sm:$0xff] %v200
        %v202 = vld [vmem:[%s198 + $0x8] sm:$0xff]
        %203 = vst [vmem:[%s199 + $0x8] sm:$0xff] %v202
        %v204 = vld [vmem:[%s198 + $0x10] sm:$0xff]
        %205 = vst [vmem:[%s199 + $0x10] sm:$0xff] %v204
        %v206 = vld [vmem:[%s198 + $0x18] sm:$0xff]
        %207 = vst [vmem:[%s199 + $0x18] sm:$0xff] %v206
        %v208 = vld [vmem:[%s198 + $0x20] sm:$0xff]
        %209 = vst [vmem:[%s199 + $0x20] sm:$0xff] %v208
        %v210 = vld [vmem:[%s198 + $0x28] sm:$0xff]
        %211 = vst [vmem:[%s199 + $0x28] sm:$0xff] %v210
        %v212 = vld [vmem:[%s198 + $0x30] sm:$0xff]
        %213 = vst [vmem:[%s199 + $0x30] sm:$0xff] %v212
        %v214 = vld [vmem:[%s198 + $0x38] sm:$0xff]
        %215 = vst [vmem:[%s199 + $0x38] sm:$0xff] %v214
        %v216 = vld [vmem:[%s198 + $0x40] sm:$0xff]
        %217 = vst [vmem:[%s199 + $0x40] sm:$0xff] %v216
        %v218 = vld [vmem:[%s198 + $0x48] sm:$0xff]
        %219 = vst [vmem:[%s199 + $0x48] sm:$0xff] %v218
        %v220 = vld [vmem:[%s198 + $0x50] sm:$0xff]
        %221 = vst [vmem:[%s199 + $0x50] sm:$0xff] %v220
        %v222 = vld [vmem:[%s198 + $0x58] sm:$0xff]
        %223 = vst [vmem:[%s199 + $0x58] sm:$0xff] %v222
        %v224 = vld [vmem:[%s198 + $0x60] sm:$0xff]
        %225 = vst [vmem:[%s199 + $0x60] sm:$0xff] %v224
        %v226 = vld [vmem:[%s198 + $0x68] sm:$0xff]
        %227 = vst [vmem:[%s199 + $0x68] sm:$0xff] %v226
        %v228 = vld [vmem:[%s198 + $0x70] sm:$0xff]
        %229 = vst [vmem:[%s199 + $0x70] sm:$0xff] %v228
        %v230 = vld [vmem:[%s198 + $0x78] sm:$0xff]
        %231 = vst [vmem:[%s199 + $0x78] sm:$0xff] %v230
      $region102: #{tpu_custom_call.1} parent=96 // loop_footer
        %s197 = sadd.s32 1, %s193
      $region103: #{tpu_custom_call.1} parent=96 // loop_footer_branch
        %192 = sbr.rel target = $region99
      $region104: #{tpu_custom_call.1} parent=96 // loop_exit
        _
    $region97: #{tpu_custom_call.1} parent=1 // pred_fallthru
      _
    // Predicated region
    $region105: #{tpu_custom_call.1} parent=1 // pred_check
      _
    $region106: #{tpu_custom_call.1} parent=1 // pred_check_branch
      %233 = sbr.rel target = $region108
    $region107: #{tpu_custom_call.1} parent=1 // pred_region
      _
    $region108: #{tpu_custom_call.1} parent=1 // pred_fallthru
      _
    // Predicated region
    $region109: #{tpu_custom_call.1} parent=1 // pred_check
      _
    $region110: #{tpu_custom_call.1} parent=1 // pred_check_branch
      %236 = sbr.rel (0) target = $region112
    $region111: #{tpu_custom_call.1} parent=1 // pred_region
      %237 = vsyncadd %s189, 2048
    $region112: #{tpu_custom_call.1} parent=1 // pred_fallthru
      _
    %v238 = vld [vmem:[%s0] sm:$0xff]
    %v239 = vld [vmem:[%s0 + $0x8] sm:$0xff]
    %v240 = vld [vmem:[%s0 + $0x10] sm:$0xff]
    %v241 = vld [vmem:[%s0 + $0x18] sm:$0xff]
    %v242 = vld [vmem:[%s0 + $0x20] sm:$0xff]
    %v243 = vld [vmem:[%s0 + $0x28] sm:$0xff]
    %v244 = vld [vmem:[%s0 + $0x30] sm:$0xff]
    %v245 = vld [vmem:[%s0 + $0x38] sm:$0xff]
    %v246 = vld [vmem:[%s0 + $0x40] sm:$0xff]
    %v247 = vld [vmem:[%s0 + $0x48] sm:$0xff]
    %v248 = vld [vmem:[%s0 + $0x50] sm:$0xff]
    %v249 = vld [vmem:[%s0 + $0x58] sm:$0xff]
    %v250 = vld [vmem:[%s0 + $0x60] sm:$0xff]
    %v251 = vld [vmem:[%s0 + $0x68] sm:$0xff]
    %v252 = vld [vmem:[%s0 + $0x70] sm:$0xff]
    %v253 = vld [vmem:[%s0 + $0x78] sm:$0xff]
    %v254 = vpack.c.bf16 %v239, %v238
    %v255 = vpack.c.bf16 %v241, %v240
    %v256 = vpack.c.bf16 %v243, %v242
    %v257 = vpack.c.bf16 %v245, %v244
    %v258 = vpack.c.bf16 %v247, %v246
    %v259 = vpack.c.bf16 %v249, %v248
    %v260 = vpack.c.bf16 %v251, %v250
    %v261 = vpack.c.bf16 %v253, %v252
    %v262 = vld [vmem:[%s1] sm:$0xf]
    %v263 = vld [vmem:[%s1 + $0x4] sm:$0xf]
    %v264 = vld [vmem:[%s2] sm:$0x1]
    %v266 = vperm.slane %v264, 0
    %v270 = vunpack.c.l.b16 %v262
    %v271 = vunpack.c.l.b16 %v263
    %v272 = vpack.c.b16 %v271, %v270
    %vm274 = vcmask 130048
    %v276 = vsel %vm274, %v254, 0
    %v279 = vsel %vm274, %v255, 0
    %v282 = vsel %vm274, %v256, 0
    %v285 = vsel %vm274, %v257, 0
    %v288 = vsel %vm274, %v258, 0
    %v291 = vsel %vm274, %v259, 0
    %v294 = vsel %vm274, %v260, 0
    %v297 = vsel %vm274, %v261, 0
    %299 = vmatpush.bf16.msra.mxu0 0
    %300 = vmatpush.bf16.msra.mxu0 0
    %301 = vmatpush.bf16.msra.mxu0 0
    %302 = vmatpush.bf16.msra.mxu0 0
    %303 = vmatpush.bf16.msra.mxu0 0
    %304 = vmatpush.bf16.msra.mxu0 0
    %305 = vmatpush.bf16.msra.mxu0 0
    %306 = vmatpush.bf16.msra.mxu0 %v272
    %307 = vmatmul.bf16.gmra.mxu0 %v276
    %v308 = vpop.f32.mrf.mxu0
    %v309 = vadd.f32 %v266, %v308
    %v310 = vpop.f32.mrf.mxu0
    %v311 = vadd.f32 %v266, %v310
    %312 = vmatmul.bf16.gmra.mxu0 %v279
    %v313 = vpop.f32.mrf.mxu0
    %v314 = vadd.f32 %v266, %v313
    %v315 = vpop.f32.mrf.mxu0
    %v316 = vadd.f32 %v266, %v315
    %317 = vmatmul.bf16.gmra.mxu0 %v282
    %v318 = vpop.f32.mrf.mxu0
    %v319 = vadd.f32 %v266, %v318
    %v320 = vpop.f32.mrf.mxu0
    %v321 = vadd.f32 %v266, %v320
    %322 = vmatmul.bf16.gmra.mxu0 %v285
    %v323 = vpop.f32.mrf.mxu0
    %v324 = vadd.f32 %v266, %v323
    %v325 = vpop.f32.mrf.mxu0
    %v326 = vadd.f32 %v266, %v325
    %327 = vmatmul.bf16.gmra.mxu0 %v288
    %v328 = vpop.f32.mrf.mxu0
    %v329 = vadd.f32 %v266, %v328
    %v330 = vpop.f32.mrf.mxu0
    %v331 = vadd.f32 %v266, %v330
    %332 = vmatmul.bf16.gmra.mxu0 %v291
    %v333 = vpop.f32.mrf.mxu0
    %v334 = vadd.f32 %v266, %v333
    %v335 = vpop.f32.mrf.mxu0
    %v336 = vadd.f32 %v266, %v335
    %337 = vmatmul.bf16.gmra.mxu0 %v294
    %v338 = vpop.f32.mrf.mxu0
    %v339 = vadd.f32 %v266, %v338
    %v340 = vpop.f32.mrf.mxu0
    %v341 = vadd.f32 %v266, %v340
    %342 = vmatmul.bf16.gmra.mxu0 %v297
    %v343 = vpop.f32.mrf.mxu0
    %v344 = vadd.f32 %v266, %v343
    %v345 = vpop.f32.mrf.mxu0
    %v346 = vadd.f32 %v266, %v345
    %347 = vdwg.mxu0
    %v348 = vmax.f32 %v309, 0.0
    %v349 = vmax.f32 %v311, 0.0
    %v350 = vmax.f32 %v314, 0.0
    %v351 = vmax.f32 %v316, 0.0
    %v352 = vmax.f32 %v319, 0.0
    %v353 = vmax.f32 %v321, 0.0
    %v354 = vmax.f32 %v324, 0.0
    %v355 = vmax.f32 %v326, 0.0
    %v356 = vmax.f32 %v329, 0.0
    %v357 = vmax.f32 %v331, 0.0
    %v358 = vmax.f32 %v334, 0.0
    %v359 = vmax.f32 %v336, 0.0
    %v360 = vmax.f32 %v339, 0.0
    %v361 = vmax.f32 %v341, 0.0
    %v362 = vmax.f32 %v344, 0.0
    %v363 = vmax.f32 %v346, 0.0
    %v364 = vpack.c.bf16 %v349, %v348
    %v365 = vpack.c.bf16 %v351, %v350
    %v366 = vpack.c.bf16 %v353, %v352
    %v367 = vpack.c.bf16 %v355, %v354
    %v368 = vpack.c.bf16 %v357, %v356
    %v369 = vpack.c.bf16 %v359, %v358
    %v370 = vpack.c.bf16 %v361, %v360
    %v371 = vpack.c.bf16 %v363, %v362
    %v372 = vld [vmem:[#allocation7] sm:$0xf]
    %v373 = vld [vmem:[#allocation7 + $0x4] sm:$0xf]
    %v374 = vld [vmem:[#allocation7 + $0x8] sm:$0xf]
    %v375 = vld [vmem:[#allocation7 + $0xc] sm:$0xf]
    %v376 = vld [vmem:[#allocation7 + $0x10] sm:$0xf]
    %v377 = vld [vmem:[#allocation7 + $0x14] sm:$0xf]
    %v378 = vld [vmem:[#allocation7 + $0x18] sm:$0xf]
    %v379 = vld [vmem:[#allocation7 + $0x1c] sm:$0xf]
    %v380 = vld [vmem:[%s4] sm:$0x1]
    %v382 = vperm.slane %v380, 0
    %v392 = vunpack.c.l.b16 %v372
    %v393 = vunpack.c.l.b16 %v373
    %v394 = vunpack.c.l.b16 %v374
    %v395 = vunpack.c.l.b16 %v375
    %v396 = vunpack.c.l.b16 %v376
    %v397 = vunpack.c.l.b16 %v377
    %v398 = vunpack.c.l.b16 %v378
    %v399 = vunpack.c.l.b16 %v379
    %v400 = vpack.c.b16 %v393, %v392
    %v401 = vpack.c.b16 %v395, %v394
    %v402 = vpack.c.b16 %v397, %v396
    %v403 = vpack.c.b16 %v399, %v398
    %vm408 = vcmask 523264
    %v410 = vsel %vm408, %v364, 0
    %v413 = vsel %vm408, %v365, 0
    %v416 = vsel %vm408, %v366, 0
    %v419 = vsel %vm408, %v367, 0
    %v422 = vsel %vm408, %v368, 0
    %v425 = vsel %vm408, %v369, 0
    %v428 = vsel %vm408, %v370, 0
    %v431 = vsel %vm408, %v371, 0
    %433 = vmatpush.bf16.msra.mxu0 0
    %434 = vmatpush.bf16.msra.mxu0 0
    %435 = vmatpush.bf16.msra.mxu0 0
    %436 = vmatpush.bf16.msra.mxu0 0
    %437 = vmatpush.bf16.msra.mxu0 %v403
    %438 = vmatpush.bf16.msra.mxu0 %v402
    %439 = vmatpush.bf16.msra.mxu0 %v401
    %440 = vmatpush.bf16.msra.mxu0 %v400
    %441 = vmatmul.bf16.gmra.mxu0 %v410
    %v442 = vpop.f32.mrf.mxu0
    %v443 = vadd.f32 %v382, %v442
    %v444 = vpop.f32.mrf.mxu0
    %v445 = vadd.f32 %v382, %v444
    %446 = vmatmul.bf16.gmra.mxu0 %v413
    %v447 = vpop.f32.mrf.mxu0
    %v448 = vadd.f32 %v382, %v447
    %v449 = vpop.f32.mrf.mxu0
    %v450 = vadd.f32 %v382, %v449
    %451 = vmatmul.bf16.gmra.mxu0 %v416
    %v452 = vpop.f32.mrf.mxu0
    %v453 = vadd.f32 %v382, %v452
    %v454 = vpop.f32.mrf.mxu0
    %v455 = vadd.f32 %v382, %v454
    %456 = vmatmul.bf16.gmra.mxu0 %v419
    %v457 = vpop.f32.mrf.mxu0
    %v458 = vadd.f32 %v382, %v457
    %v459 = vpop.f32.mrf.mxu0
    %v460 = vadd.f32 %v382, %v459
    %461 = vmatmul.bf16.gmra.mxu0 %v422
    %v462 = vpop.f32.mrf.mxu0
    %v463 = vadd.f32 %v382, %v462
    %v464 = vpop.f32.mrf.mxu0
    %v465 = vadd.f32 %v382, %v464
    %466 = vmatmul.bf16.gmra.mxu0 %v425
    %v467 = vpop.f32.mrf.mxu0
    %v468 = vadd.f32 %v382, %v467
    %v469 = vpop.f32.mrf.mxu0
    %v470 = vadd.f32 %v382, %v469
    %471 = vmatmul.bf16.gmra.mxu0 %v428
    %v472 = vpop.f32.mrf.mxu0
    %v473 = vadd.f32 %v382, %v472
    %v474 = vpop.f32.mrf.mxu0
    %v475 = vadd.f32 %v382, %v474
    %476 = vmatmul.bf16.gmra.mxu0 %v431
    %v477 = vpop.f32.mrf.mxu0
    %v478 = vadd.f32 %v382, %v477
    %v479 = vpop.f32.mrf.mxu0
    %v480 = vadd.f32 %v382, %v479
    %481 = vdwg.mxu0
    %v482 = vmax.f32 %v443, 0.0
    %v483 = vmax.f32 %v445, 0.0
    %v484 = vmax.f32 %v448, 0.0
    %v485 = vmax.f32 %v450, 0.0
    %v486 = vmax.f32 %v453, 0.0
    %v487 = vmax.f32 %v455, 0.0
    %v488 = vmax.f32 %v458, 0.0
    %v489 = vmax.f32 %v460, 0.0
    %v490 = vmax.f32 %v463, 0.0
    %v491 = vmax.f32 %v465, 0.0
    %v492 = vmax.f32 %v468, 0.0
    %v493 = vmax.f32 %v470, 0.0
    %v494 = vmax.f32 %v473, 0.0
    %v495 = vmax.f32 %v475, 0.0
    %v496 = vmax.f32 %v478, 0.0
    %v497 = vmax.f32 %v480, 0.0
    %v498 = vpack.c.bf16 %v483, %v482
    %v499 = vpack.c.bf16 %v485, %v484
    %v500 = vpack.c.bf16 %v487, %v486
    %v501 = vpack.c.bf16 %v489, %v488
    %v502 = vpack.c.bf16 %v491, %v490
    %v503 = vpack.c.bf16 %v493, %v492
    %v504 = vpack.c.bf16 %v495, %v494
    %v505 = vpack.c.bf16 %v497, %v496
    %v506 = vld [vmem:[#allocation10] sm:$0xf]
    %v507 = vld [vmem:[#allocation10 + $0x4] sm:$0xf]
    %v508 = vld [vmem:[#allocation10 + $0x8] sm:$0xf]
    %v509 = vld [vmem:[#allocation10 + $0xc] sm:$0xf]
    %v510 = vld [vmem:[#allocation10 + $0x10] sm:$0xf]
    %v511 = vld [vmem:[#allocation10 + $0x14] sm:$0xf]
    %v512 = vld [vmem:[#allocation10 + $0x18] sm:$0xf]
    %v513 = vld [vmem:[#allocation10 + $0x1c] sm:$0xf]
    %v514 = vld [vmem:[%s6] sm:$0x1]
    %v516 = vperm.slane %v514, 0
    %v526 = vunpack.c.l.b16 %v506
    %v527 = vunpack.c.l.b16 %v507
    %v528 = vunpack.c.l.b16 %v508
    %v529 = vunpack.c.l.b16 %v509
    %v530 = vunpack.c.l.b16 %v510
    %v531 = vunpack.c.l.b16 %v511
    %v532 = vunpack.c.l.b16 %v512
    %v533 = vunpack.c.l.b16 %v513
    %v534 = vpack.c.b16 %v527, %v526
    %v535 = vpack.c.b16 %v529, %v528
    %v536 = vpack.c.b16 %v531, %v530
    %v537 = vpack.c.b16 %v533, %v532
    %v543 = vsel %vm408, %v498, 0
    %v546 = vsel %vm408, %v499, 0
    %v549 = vsel %vm408, %v500, 0
    %v552 = vsel %vm408, %v501, 0
    %v555 = vsel %vm408, %v502, 0
    %v558 = vsel %vm408, %v503, 0
    %v561 = vsel %vm408, %v504, 0
    %v564 = vsel %vm408, %v505, 0
    %566 = vmatpush.bf16.msra.mxu0 0
    %567 = vmatpush.bf16.msra.mxu0 0
    %568 = vmatpush.bf16.msra.mxu0 0
    %569 = vmatpush.bf16.msra.mxu0 0
    %570 = vmatpush.bf16.msra.mxu0 %v537
    %571 = vmatpush.bf16.msra.mxu0 %v536
    %572 = vmatpush.bf16.msra.mxu0 %v535
    %573 = vmatpush.bf16.msra.mxu0 %v534
    %574 = vmatmul.bf16.gmra.mxu0 %v543
    %v575 = vpop.f32.mrf.mxu0
    %v576 = vadd.f32 %v516, %v575
    %v577 = vpop.f32.mrf.mxu0
    %v578 = vadd.f32 %v516, %v577
    %579 = vmatmul.bf16.gmra.mxu0 %v546
    %v580 = vpop.f32.mrf.mxu0
    %v581 = vadd.f32 %v516, %v580
    %v582 = vpop.f32.mrf.mxu0
    %v583 = vadd.f32 %v516, %v582
    %584 = vmatmul.bf16.gmra.mxu0 %v549
    %v585 = vpop.f32.mrf.mxu0
    %v586 = vadd.f32 %v516, %v585
    %v587 = vpop.f32.mrf.mxu0
    %v588 = vadd.f32 %v516, %v587
    %589 = vmatmul.bf16.gmra.mxu0 %v552
    %v590 = vpop.f32.mrf.mxu0
    %v591 = vadd.f32 %v516, %v590
    %v592 = vpop.f32.mrf.mxu0
    %v593 = vadd.f32 %v516, %v592
    %594 = vmatmul.bf16.gmra.mxu0 %v555
    %v595 = vpop.f32.mrf.mxu0
    %v596 = vadd.f32 %v516, %v595
    %v597 = vpop.f32.mrf.mxu0
    %v598 = vadd.f32 %v516, %v597
    %599 = vmatmul.bf16.gmra.mxu0 %v558
    %v600 = vpop.f32.mrf.mxu0
    %v601 = vadd.f32 %v516, %v600
    %v602 = vpop.f32.mrf.mxu0
    %v603 = vadd.f32 %v516, %v602
    %604 = vmatmul.bf16.gmra.mxu0 %v561
    %v605 = vpop.f32.mrf.mxu0
    %v606 = vadd.f32 %v516, %v605
    %v607 = vpop.f32.mrf.mxu0
    %v608 = vadd.f32 %v516, %v607
    %609 = vmatmul.bf16.gmra.mxu0 %v564
    %v610 = vpop.f32.mrf.mxu0
    %v611 = vadd.f32 %v516, %v610
    %v612 = vpop.f32.mrf.mxu0
    %v613 = vadd.f32 %v516, %v612
    %614 = vdwg.mxu0
    %v615 = vmax.f32 %v576, 0.0
    %v616 = vmax.f32 %v578, 0.0
    %v617 = vmax.f32 %v581, 0.0
    %v618 = vmax.f32 %v583, 0.0
    %v619 = vmax.f32 %v586, 0.0
    %v620 = vmax.f32 %v588, 0.0
    %v621 = vmax.f32 %v591, 0.0
    %v622 = vmax.f32 %v593, 0.0
    %v623 = vmax.f32 %v596, 0.0
    %v624 = vmax.f32 %v598, 0.0
    %v625 = vmax.f32 %v601, 0.0
    %v626 = vmax.f32 %v603, 0.0
    %v627 = vmax.f32 %v606, 0.0
    %v628 = vmax.f32 %v608, 0.0
    %v629 = vmax.f32 %v611, 0.0
    %v630 = vmax.f32 %v613, 0.0
    %v631 = vpack.c.bf16 %v616, %v615
    %v632 = vpack.c.bf16 %v618, %v617
    %v633 = vpack.c.bf16 %v620, %v619
    %v634 = vpack.c.bf16 %v622, %v621
    %v635 = vpack.c.bf16 %v624, %v623
    %v636 = vpack.c.bf16 %v626, %v625
    %v637 = vpack.c.bf16 %v628, %v627
    %v638 = vpack.c.bf16 %v630, %v629
    %v639 = vld [vmem:[#allocation12] sm:$0xf]
    %v640 = vld [vmem:[#allocation12 + $0x4] sm:$0xf]
    %v641 = vld [vmem:[#allocation12 + $0x8] sm:$0xf]
    %v642 = vld [vmem:[#allocation12 + $0xc] sm:$0xf]
    %v643 = vld [vmem:[#allocation12 + $0x10] sm:$0xf]
    %v644 = vld [vmem:[#allocation12 + $0x14] sm:$0xf]
    %v645 = vld [vmem:[#allocation12 + $0x18] sm:$0xf]
    %v646 = vld [vmem:[#allocation12 + $0x1c] sm:$0xf]
    %v647 = vld [vmem:[%s8] sm:$0x1]
    %v649 = vperm.slane %v647, 0
    %v659 = vunpack.c.l.b16 %v639
    %v660 = vunpack.c.l.b16 %v640
    %v661 = vunpack.c.l.b16 %v641
    %v662 = vunpack.c.l.b16 %v642
    %v663 = vunpack.c.l.b16 %v643
    %v664 = vunpack.c.l.b16 %v644
    %v665 = vunpack.c.l.b16 %v645
    %v666 = vunpack.c.l.b16 %v646
    %v667 = vpack.c.b16 %v660, %v659
    %v668 = vpack.c.b16 %v662, %v661
    %v669 = vpack.c.b16 %v664, %v663
    %v670 = vpack.c.b16 %v666, %v665
    %v676 = vsel %vm408, %v631, 0
    %v679 = vsel %vm408, %v632, 0
    %v682 = vsel %vm408, %v633, 0
    %v685 = vsel %vm408, %v634, 0
    %v688 = vsel %vm408, %v635, 0
    %v691 = vsel %vm408, %v636, 0
    %v694 = vsel %vm408, %v637, 0
    %v697 = vsel %vm408, %v638, 0
    %699 = vmatpush.bf16.msra.mxu0 0
    %700 = vmatpush.bf16.msra.mxu0 0
    %701 = vmatpush.bf16.msra.mxu0 0
    %702 = vmatpush.bf16.msra.mxu0 0
    %703 = vmatpush.bf16.msra.mxu0 %v670
    %704 = vmatpush.bf16.msra.mxu0 %v669
    %705 = vmatpush.bf16.msra.mxu0 %v668
    %706 = vmatpush.bf16.msra.mxu0 %v667
    %707 = vmatmul.bf16.gmra.mxu0 %v676
    %v708 = vpop.f32.mrf.mxu0
    %v709 = vadd.f32 %v649, %v708
    %v710 = vpop.f32.mrf.mxu0
    %v711 = vadd.f32 %v649, %v710
    %712 = vmatmul.bf16.gmra.mxu0 %v679
    %v713 = vpop.f32.mrf.mxu0
    %v714 = vadd.f32 %v649, %v713
    %v715 = vpop.f32.mrf.mxu0
    %v716 = vadd.f32 %v649, %v715
    %717 = vmatmul.bf16.gmra.mxu0 %v682
    %v718 = vpop.f32.mrf.mxu0
    %v719 = vadd.f32 %v649, %v718
    %v720 = vpop.f32.mrf.mxu0
    %v721 = vadd.f32 %v649, %v720
    %722 = vmatmul.bf16.gmra.mxu0 %v685
    %v723 = vpop.f32.mrf.mxu0
    %v724 = vadd.f32 %v649, %v723
    %v725 = vpop.f32.mrf.mxu0
    %v726 = vadd.f32 %v649, %v725
    %727 = vmatmul.bf16.gmra.mxu0 %v688
    %v728 = vpop.f32.mrf.mxu0
    %v729 = vadd.f32 %v649, %v728
    %v730 = vpop.f32.mrf.mxu0
    %v731 = vadd.f32 %v649, %v730
    %732 = vmatmul.bf16.gmra.mxu0 %v691
    %v733 = vpop.f32.mrf.mxu0
    %v734 = vadd.f32 %v649, %v733
    %v735 = vpop.f32.mrf.mxu0
    %v736 = vadd.f32 %v649, %v735
    %737 = vmatmul.bf16.gmra.mxu0 %v694
    %v738 = vpop.f32.mrf.mxu0
    %v739 = vadd.f32 %v649, %v738
    %v740 = vpop.f32.mrf.mxu0
    %v741 = vadd.f32 %v649, %v740
    %742 = vmatmul.bf16.gmra.mxu0 %v697
    %v743 = vpop.f32.mrf.mxu0
    %v744 = vadd.f32 %v649, %v743
    %v745 = vpop.f32.mrf.mxu0
    %v746 = vadd.f32 %v649, %v745
    %747 = vdwg.mxu0
    %v748 = vmax.f32 %v709, 0.0
    %v749 = vmax.f32 %v711, 0.0
    %v750 = vmax.f32 %v714, 0.0
    %v751 = vmax.f32 %v716, 0.0
    %v752 = vmax.f32 %v719, 0.0
    %v753 = vmax.f32 %v721, 0.0
    %v754 = vmax.f32 %v724, 0.0
    %v755 = vmax.f32 %v726, 0.0
    %v756 = vmax.f32 %v729, 0.0
    %v757 = vmax.f32 %v731, 0.0
    %v758 = vmax.f32 %v734, 0.0
    %v759 = vmax.f32 %v736, 0.0
    %v760 = vmax.f32 %v739, 0.0
    %v761 = vmax.f32 %v741, 0.0
    %v762 = vmax.f32 %v744, 0.0
    %v763 = vmax.f32 %v746, 0.0
    %v764 = vpack.c.bf16 %v749, %v748
    %v765 = vpack.c.bf16 %v751, %v750
    %v766 = vpack.c.bf16 %v753, %v752
    %v767 = vpack.c.bf16 %v755, %v754
    %v768 = vpack.c.bf16 %v757, %v756
    %v769 = vpack.c.bf16 %v759, %v758
    %v770 = vpack.c.bf16 %v761, %v760
    %v771 = vpack.c.bf16 %v763, %v762
    %v772 = vld [vmem:[#allocation13] sm:$0xff]
    %v773 = vld [vmem:[#allocation13 + $0x20] sm:$0xff]
    %v774 = vld [vmem:[#allocation13 + $0x40] sm:$0xff]
    %v775 = vld [vmem:[#allocation13 + $0x60] sm:$0xff]
    %v776 = vld [vmem:[#allocation13 + $0x80] sm:$0xff]
    %v777 = vld [vmem:[#allocation13 + $0xa0] sm:$0xff]
    %v778 = vld [vmem:[#allocation13 + $0xc0] sm:$0xff]
    %v779 = vld [vmem:[#allocation13 + $0xe0] sm:$0xff]
    %v780 = vld [vmem:[#allocation13 + $0x100] sm:$0xff]
    %v781 = vld [vmem:[#allocation13 + $0x120] sm:$0xff]
    %v782 = vld [vmem:[#allocation13 + $0x140] sm:$0xff]
    %v783 = vld [vmem:[#allocation13 + $0x160] sm:$0xff]
    %v784 = vld [vmem:[#allocation13 + $0x180] sm:$0xff]
    %v785 = vld [vmem:[#allocation13 + $0x1a0] sm:$0xff]
    %v786 = vld [vmem:[#allocation13 + $0x1c0] sm:$0xff]
    %v787 = vld [vmem:[#allocation13 + $0x1e0] sm:$0xff]
    %v788 = vld [vmem:[%s10] sm:$0x3]
    %v790 = vperm.slane %v788, 0
    %v791 = vperm.slane %v788, 1
    %v810 = vunpack.c.l.b16 %v772
    %v811 = vunpack.c.h.b16 %v772
    %v812 = vunpack.c.l.b16 %v773
    %v813 = vunpack.c.h.b16 %v773
    %v814 = vunpack.c.l.b16 %v774
    %v815 = vunpack.c.h.b16 %v774
    %v816 = vunpack.c.l.b16 %v775
    %v817 = vunpack.c.h.b16 %v775
    %v818 = vunpack.c.l.b16 %v776
    %v819 = vunpack.c.h.b16 %v776
    %v820 = vunpack.c.l.b16 %v777
    %v821 = vunpack.c.h.b16 %v777
    %v822 = vunpack.c.l.b16 %v778
    %v823 = vunpack.c.h.b16 %v778
    %v824 = vunpack.c.l.b16 %v779
    %v825 = vunpack.c.h.b16 %v779
    %v826 = vunpack.c.l.b16 %v780
    %v827 = vunpack.c.h.b16 %v780
    %v828 = vunpack.c.l.b16 %v781
    %v829 = vunpack.c.h.b16 %v781
    %v830 = vunpack.c.l.b16 %v782
    %v831 = vunpack.c.h.b16 %v782
    %v832 = vunpack.c.l.b16 %v783
    %v833 = vunpack.c.h.b16 %v783
    %v834 = vunpack.c.l.b16 %v784
    %v835 = vunpack.c.h.b16 %v784
    %v836 = vunpack.c.l.b16 %v785
    %v837 = vunpack.c.h.b16 %v785
    %v838 = vunpack.c.l.b16 %v786
    %v839 = vunpack.c.h.b16 %v786
    %v840 = vunpack.c.l.b16 %v787
    %v841 = vunpack.c.h.b16 %v787
    %v842 = vpack.c.b16 %v812, %v810
    %v843 = vpack.c.b16 %v813, %v811
    %v844 = vpack.c.b16 %v816, %v814
    %v845 = vpack.c.b16 %v817, %v815
    %v846 = vpack.c.b16 %v820, %v818
    %v847 = vpack.c.b16 %v821, %v819
    %v848 = vpack.c.b16 %v824, %v822
    %v849 = vpack.c.b16 %v825, %v823
    %v850 = vpack.c.b16 %v828, %v826
    %v851 = vpack.c.b16 %v829, %v827
    %v852 = vpack.c.b16 %v832, %v830
    %v853 = vpack.c.b16 %v833, %v831
    %v854 = vpack.c.b16 %v836, %v834
    %v855 = vpack.c.b16 %v837, %v835
    %v856 = vpack.c.b16 %v840, %v838
    %v857 = vpack.c.b16 %v841, %v839
    %874 = vmatpush.bf16.msra.mxu0 %v856
    %875 = vmatpush.bf16.msra.mxu0 %v854
    %876 = vmatpush.bf16.msra.mxu0 %v852
    %877 = vmatpush.bf16.msra.mxu0 %v850
    %878 = vmatpush.bf16.msra.mxu0 %v848
    %879 = vmatpush.bf16.msra.mxu0 %v846
    %880 = vmatpush.bf16.msra.mxu0 %v844
    %881 = vmatpush.bf16.msra.mxu0 %v842
    %882 = vmatmul.bf16.gmra.mxu0 %v764
    %v883 = vpop.f32.mrf.mxu0
    %v884 = vadd.f32 %v790, %v883
    %v885 = vpop.f32.mrf.mxu0
    %v886 = vadd.f32 %v790, %v885
    %887 = vmatmul.bf16.gmra.mxu0 %v765
    %v888 = vpop.f32.mrf.mxu0
    %v889 = vadd.f32 %v790, %v888
    %v890 = vpop.f32.mrf.mxu0
    %v891 = vadd.f32 %v790, %v890
    %892 = vmatmul.bf16.gmra.mxu0 %v766
    %v893 = vpop.f32.mrf.mxu0
    %v894 = vadd.f32 %v790, %v893
    %v895 = vpop.f32.mrf.mxu0
    %v896 = vadd.f32 %v790, %v895
    %897 = vmatmul.bf16.gmra.mxu0 %v767
    %v898 = vpop.f32.mrf.mxu0
    %v899 = vadd.f32 %v790, %v898
    %v900 = vpop.f32.mrf.mxu0
    %v901 = vadd.f32 %v790, %v900
    %902 = vmatmul.bf16.gmra.mxu0 %v768
    %v903 = vpop.f32.mrf.mxu0
    %v904 = vadd.f32 %v790, %v903
    %v905 = vpop.f32.mrf.mxu0
    %v906 = vadd.f32 %v790, %v905
    %907 = vmatmul.bf16.gmra.mxu0 %v769
    %v908 = vpop.f32.mrf.mxu0
    %v909 = vadd.f32 %v790, %v908
    %v910 = vpop.f32.mrf.mxu0
    %v911 = vadd.f32 %v790, %v910
    %912 = vmatmul.bf16.gmra.mxu0 %v770
    %v913 = vpop.f32.mrf.mxu0
    %v914 = vadd.f32 %v790, %v913
    %v915 = vpop.f32.mrf.mxu0
    %v916 = vadd.f32 %v790, %v915
    %917 = vmatmul.bf16.gmra.mxu0 %v771
    %v918 = vpop.f32.mrf.mxu0
    %v919 = vadd.f32 %v790, %v918
    %v920 = vpop.f32.mrf.mxu0
    %v921 = vadd.f32 %v790, %v920
    %922 = vdwg.mxu0
    %923 = vmatpush.bf16.msra.mxu0 %v857
    %924 = vmatpush.bf16.msra.mxu0 %v855
    %925 = vmatpush.bf16.msra.mxu0 %v853
    %926 = vmatpush.bf16.msra.mxu0 %v851
    %927 = vmatpush.bf16.msra.mxu0 %v849
    %928 = vmatpush.bf16.msra.mxu0 %v847
    %929 = vmatpush.bf16.msra.mxu0 %v845
    %930 = vmatpush.bf16.msra.mxu0 %v843
    %931 = vmatmul.bf16.gmra.mxu0 %v764
    %v932 = vpop.f32.mrf.mxu0
    %v933 = vadd.f32 %v791, %v932
    %v934 = vpop.f32.mrf.mxu0
    %v935 = vadd.f32 %v791, %v934
    %936 = vmatmul.bf16.gmra.mxu0 %v765
    %v937 = vpop.f32.mrf.mxu0
    %v938 = vadd.f32 %v791, %v937
    %v939 = vpop.f32.mrf.mxu0
    %v940 = vadd.f32 %v791, %v939
    %941 = vmatmul.bf16.gmra.mxu0 %v766
    %v942 = vpop.f32.mrf.mxu0
    %v943 = vadd.f32 %v791, %v942
    %v944 = vpop.f32.mrf.mxu0
    %v945 = vadd.f32 %v791, %v944
    %946 = vmatmul.bf16.gmra.mxu0 %v767
    %v947 = vpop.f32.mrf.mxu0
    %v948 = vadd.f32 %v791, %v947
    %v949 = vpop.f32.mrf.mxu0
    %v950 = vadd.f32 %v791, %v949
    %951 = vmatmul.bf16.gmra.mxu0 %v768
    %v952 = vpop.f32.mrf.mxu0
    %v953 = vadd.f32 %v791, %v952
    %v954 = vpop.f32.mrf.mxu0
    %v955 = vadd.f32 %v791, %v954
    %956 = vmatmul.bf16.gmra.mxu0 %v769
    %v957 = vpop.f32.mrf.mxu0
    %v958 = vadd.f32 %v791, %v957
    %v959 = vpop.f32.mrf.mxu0
    %v960 = vadd.f32 %v791, %v959
    %961 = vmatmul.bf16.gmra.mxu0 %v770
    %v962 = vpop.f32.mrf.mxu0
    %v963 = vadd.f32 %v791, %v962
    %v964 = vpop.f32.mrf.mxu0
    %v965 = vadd.f32 %v791, %v964
    %966 = vmatmul.bf16.gmra.mxu0 %v771
    %v967 = vpop.f32.mrf.mxu0
    %v968 = vadd.f32 %v791, %v967
    %v969 = vpop.f32.mrf.mxu0
    %v970 = vadd.f32 %v791, %v969
    %971 = vdwg.mxu0
    %v972 = vmax.f32 %v884, 0.0
    %v973 = vmax.f32 %v933, 0.0
    %v974 = vmax.f32 %v886, 0.0
    %v975 = vmax.f32 %v935, 0.0
    %v976 = vmax.f32 %v889, 0.0
    %v977 = vmax.f32 %v938, 0.0
    %v978 = vmax.f32 %v891, 0.0
    %v979 = vmax.f32 %v940, 0.0
    %v980 = vmax.f32 %v894, 0.0
    %v981 = vmax.f32 %v943, 0.0
    %v982 = vmax.f32 %v896, 0.0
    %v983 = vmax.f32 %v945, 0.0
    %v984 = vmax.f32 %v899, 0.0
    %v985 = vmax.f32 %v948, 0.0
    %v986 = vmax.f32 %v901, 0.0
    %v987 = vmax.f32 %v950, 0.0
    %v988 = vmax.f32 %v904, 0.0
    %v989 = vmax.f32 %v953, 0.0
    %v990 = vmax.f32 %v906, 0.0
    %v991 = vmax.f32 %v955, 0.0
    %v992 = vmax.f32 %v909, 0.0
    %v993 = vmax.f32 %v958, 0.0
    %v994 = vmax.f32 %v911, 0.0
    %v995 = vmax.f32 %v960, 0.0
    %v996 = vmax.f32 %v914, 0.0
    %v997 = vmax.f32 %v963, 0.0
    %v998 = vmax.f32 %v916, 0.0
    %v999 = vmax.f32 %v965, 0.0
    %v1000 = vmax.f32 %v919, 0.0
    %v1001 = vmax.f32 %v968, 0.0
    %v1002 = vmax.f32 %v921, 0.0
    %v1003 = vmax.f32 %v970, 0.0
    %v1004 = vmax.f32 %v972, %v974
    %v1005 = vmax.f32 %v1004, %v976
    %v1006 = vmax.f32 %v1005, %v978
    %v1007 = vmax.f32 %v1006, %v980
    %v1008 = vmax.f32 %v1007, %v982
    %v1009 = vmax.f32 %v1008, %v984
    %v1010 = vmax.f32 %v1009, %v986
    %v1011 = vrot.slane %v1010, 4
    %v1012 = vmax.f32 %v1010, %v1011
    %v1013 = vrot.slane %v1012, 2
    %v1014 = vmax.f32 %v1012, %v1013
    %v1015 = vrot.slane %v1014, 1
    %v1016 = vmax.f32 %v1014, %v1015
    %v1017 = vmax.f32 %v973, %v975
    %v1018 = vmax.f32 %v1017, %v977
    %v1019 = vmax.f32 %v1018, %v979
    %v1020 = vmax.f32 %v1019, %v981
    %v1021 = vmax.f32 %v1020, %v983
    %v1022 = vmax.f32 %v1021, %v985
    %v1023 = vmax.f32 %v1022, %v987
    %v1024 = vrot.slane %v1023, 4
    %v1025 = vmax.f32 %v1023, %v1024
    %v1026 = vrot.slane %v1025, 2
    %v1027 = vmax.f32 %v1025, %v1026
    %v1028 = vrot.slane %v1027, 1
    %v1029 = vmax.f32 %v1027, %v1028
    %v1030 = vmax.f32 %v988, %v990
    %v1031 = vmax.f32 %v1030, %v992
    %v1032 = vmax.f32 %v1031, %v994
    %v1033 = vmax.f32 %v1032, %v996
    %v1034 = vmax.f32 %v1033, %v998
    %v1035 = vmax.f32 %v1034, %v1000
    %v1036 = vmax.f32 %v1035, %v1002
    %v1037 = vrot.slane %v1036, 4
    %v1038 = vmax.f32 %v1036, %v1037
    %v1039 = vrot.slane %v1038, 2
    %v1040 = vmax.f32 %v1038, %v1039
    %v1041 = vrot.slane %v1040, 1
    %v1042 = vmax.f32 %v1040, %v1041
    %v1043 = vmax.f32 %v989, %v991
    %v1044 = vmax.f32 %v1043, %v993
    %v1045 = vmax.f32 %v1044, %v995
    %v1046 = vmax.f32 %v1045, %v997
    %v1047 = vmax.f32 %v1046, %v999
    %v1048 = vmax.f32 %v1047, %v1001
    %v1049 = vmax.f32 %v1048, %v1003
    %v1050 = vrot.slane %v1049, 4
    %v1051 = vmax.f32 %v1049, %v1050
    %v1052 = vrot.slane %v1051, 2
    %v1053 = vmax.f32 %v1051, %v1052
    %v1054 = vrot.slane %v1053, 1
    %v1055 = vmax.f32 %v1053, %v1054
    %v1056 = vpack.c.bf16 %v1016, %v1016
    %v1057 = vpack.c.bf16 %v1029, %v1029
    %v1058 = vpack.c.bf16 %v1042, %v1042
    %v1059 = vpack.c.bf16 %v1055, %v1055
    %s1060 = smul.u32 4, 32
    %s1061 = smul.u32 %s1060, 4
    %s1062 = sshll.u32 %s1061, 4
    %1063 = dma.done [#allocation5], %s1062
    %v1064 = vld [vmem:[#allocation2] sm:$0xff]
    %v1065 = vld [vmem:[#allocation2 + $0x8] sm:$0xff]
    %v1066 = vld [vmem:[#allocation2 + $0x10] sm:$0xff]
    %v1067 = vld [vmem:[#allocation2 + $0x18] sm:$0xff]
    %v1068 = vld [vmem:[#allocation2 + $0x20] sm:$0xff]
    %v1069 = vld [vmem:[#allocation2 + $0x28] sm:$0xff]
    %v1070 = vld [vmem:[#allocation2 + $0x30] sm:$0xff]
    %v1071 = vld [vmem:[#allocation2 + $0x38] sm:$0xff]
    %v1072 = vld [vmem:[#allocation2 + $0x40] sm:$0xff]
    %v1073 = vld [vmem:[#allocation2 + $0x48] sm:$0xff]
    %v1074 = vld [vmem:[#allocation2 + $0x50] sm:$0xff]
    %v1075 = vld [vmem:[#allocation2 + $0x58] sm:$0xff]
    %v1076 = vld [vmem:[#allocation2 + $0x60] sm:$0xff]
    %v1077 = vld [vmem:[#allocation2 + $0x68] sm:$0xff]
    %v1078 = vld [vmem:[#allocation2 + $0x70] sm:$0xff]
    %v1079 = vld [vmem:[#allocation2 + $0x78] sm:$0xff]
    %v1080 = vld [vmem:[#allocation2 + $0x80] sm:$0xff]
    %v1081 = vld [vmem:[#allocation2 + $0x88] sm:$0xff]
    %v1082 = vld [vmem:[#allocation2 + $0x90] sm:$0xff]
    %v1083 = vld [vmem:[#allocation2 + $0x98] sm:$0xff]
    %v1084 = vld [vmem:[#allocation2 + $0xa0] sm:$0xff]
    %v1085 = vld [vmem:[#allocation2 + $0xa8] sm:$0xff]
    %v1086 = vld [vmem:[#allocation2 + $0xb0] sm:$0xff]
    %v1087 = vld [vmem:[#allocation2 + $0xb8] sm:$0xff]
    %v1088 = vld [vmem:[#allocation2 + $0xc0] sm:$0xff]
    %v1089 = vld [vmem:[#allocation2 + $0xc8] sm:$0xff]
    %v1090 = vld [vmem:[#allocation2 + $0xd0] sm:$0xff]
    %v1091 = vld [vmem:[#allocation2 + $0xd8] sm:$0xff]
    %v1092 = vld [vmem:[#allocation2 + $0xe0] sm:$0xff]
    %v1093 = vld [vmem:[#allocation2 + $0xe8] sm:$0xff]
    %v1094 = vld [vmem:[#allocation2 + $0xf0] sm:$0xff]
    %v1095 = vld [vmem:[#allocation2 + $0xf8] sm:$0xff]
    %v1096 = vld [vmem:[#allocation2 + $0x100] sm:$0xff]
    %v1097 = vld [vmem:[#allocation2 + $0x108] sm:$0xff]
    %v1098 = vld [vmem:[#allocation2 + $0x110] sm:$0xff]
    %v1099 = vld [vmem:[#allocation2 + $0x118] sm:$0xff]
    %v1100 = vld [vmem:[#allocation2 + $0x120] sm:$0xff]
    %v1101 = vld [vmem:[#allocation2 + $0x128] sm:$0xff]
    %v1102 = vld [vmem:[#allocation2 + $0x130] sm:$0xff]
    %v1103 = vld [vmem:[#allocation2 + $0x138] sm:$0xff]
    %v1104 = vld [vmem:[#allocation2 + $0x140] sm:$0xff]
    %v1105 = vld [vmem:[#allocation2 + $0x148] sm:$0xff]
    %v1106 = vld [vmem:[#allocation2 + $0x150] sm:$0xff]
    %v1107 = vld [vmem:[#allocation2 + $0x158] sm:$0xff]
    %v1108 = vld [vmem:[#allocation2 + $0x160] sm:$0xff]
    %v1109 = vld [vmem:[#allocation2 + $0x168] sm:$0xff]
    %v1110 = vld [vmem:[#allocation2 + $0x170] sm:$0xff]
    %v1111 = vld [vmem:[#allocation2 + $0x178] sm:$0xff]
    %v1112 = vld [vmem:[#allocation2 + $0x180] sm:$0xff]
    %v1113 = vld [vmem:[#allocation2 + $0x188] sm:$0xff]
    %v1114 = vld [vmem:[#allocation2 + $0x190] sm:$0xff]
    %v1115 = vld [vmem:[#allocation2 + $0x198] sm:$0xff]
    %v1116 = vld [vmem:[#allocation2 + $0x1a0] sm:$0xff]
    %v1117 = vld [vmem:[#allocation2 + $0x1a8] sm:$0xff]
    %v1118 = vld [vmem:[#allocation2 + $0x1b0] sm:$0xff]
    %v1119 = vld [vmem:[#allocation2 + $0x1b8] sm:$0xff]
    %v1120 = vld [vmem:[#allocation2 + $0x1c0] sm:$0xff]
    %v1121 = vld [vmem:[#allocation2 + $0x1c8] sm:$0xff]
    %v1122 = vld [vmem:[#allocation2 + $0x1d0] sm:$0xff]
    %v1123 = vld [vmem:[#allocation2 + $0x1d8] sm:$0xff]
    %v1124 = vld [vmem:[#allocation2 + $0x1e0] sm:$0xff]
    %v1125 = vld [vmem:[#allocation2 + $0x1e8] sm:$0xff]
    %v1126 = vld [vmem:[#allocation2 + $0x1f0] sm:$0xff]
    %v1127 = vld [vmem:[#allocation2 + $0x1f8] sm:$0xff]
    %v1128 = vld [vmem:[#allocation13 + $0x8] sm:$0xff]
    %v1129 = vld [vmem:[#allocation13 + $0x28] sm:$0xff]
    %v1130 = vld [vmem:[#allocation13 + $0x48] sm:$0xff]
    %v1131 = vld [vmem:[#allocation13 + $0x68] sm:$0xff]
    %v1132 = vld [vmem:[#allocation13 + $0x88] sm:$0xff]
    %v1133 = vld [vmem:[#allocation13 + $0xa8] sm:$0xff]
    %v1134 = vld [vmem:[#allocation13 + $0xc8] sm:$0xff]
    %v1135 = vld [vmem:[#allocation13 + $0xe8] sm:$0xff]
    %v1136 = vld [vmem:[#allocation13 + $0x108] sm:$0xff]
    %v1137 = vld [vmem:[#allocation13 + $0x128] sm:$0xff]
    %v1138 = vld [vmem:[#allocation13 + $0x148] sm:$0xff]
    %v1139 = vld [vmem:[#allocation13 + $0x168] sm:$0xff]
    %v1140 = vld [vmem:[#allocation13 + $0x188] sm:$0xff]
    %v1141 = vld [vmem:[#allocation13 + $0x1a8] sm:$0xff]
    %v1142 = vld [vmem:[#allocation13 + $0x1c8] sm:$0xff]
    %v1143 = vld [vmem:[#allocation13 + $0x1e8] sm:$0xff]
    %v1144 = vld [vmem:[%s10 + $0x2] sm:$0x3]
    %v1146 = vperm.slane %v1144, 0
    %v1147 = vperm.slane %v1144, 1
    %v1166 = vunpack.c.l.b16 %v1128
    %v1167 = vunpack.c.h.b16 %v1128
    %v1168 = vunpack.c.l.b16 %v1129
    %v1169 = vunpack.c.h.b16 %v1129
    %v1170 = vunpack.c.l.b16 %v1130
    %v1171 = vunpack.c.h.b16 %v1130
    %v1172 = vunpack.c.l.b16 %v1131
    %v1173 = vunpack.c.h.b16 %v1131
    %v1174 = vunpack.c.l.b16 %v1132
    %v1175 = vunpack.c.h.b16 %v1132
    %v1176 = vunpack.c.l.b16 %v1133
    %v1177 = vunpack.c.h.b16 %v1133
    %v1178 = vunpack.c.l.b16 %v1134
    %v1179 = vunpack.c.h.b16 %v1134
    %v1180 = vunpack.c.l.b16 %v1135
    %v1181 = vunpack.c.h.b16 %v1135
    %v1182 = vunpack.c.l.b16 %v1136
    %v1183 = vunpack.c.h.b16 %v1136
    %v1184 = vunpack.c.l.b16 %v1137
    %v1185 = vunpack.c.h.b16 %v1137
    %v1186 = vunpack.c.l.b16 %v1138
    %v1187 = vunpack.c.h.b16 %v1138
    %v1188 = vunpack.c.l.b16 %v1139
    %v1189 = vunpack.c.h.b16 %v1139
    %v1190 = vunpack.c.l.b16 %v1140
    %v1191 = vunpack.c.h.b16 %v1140
    %v1192 = vunpack.c.l.b16 %v1141
    %v1193 = vunpack.c.h.b16 %v1141
    %v1194 = vunpack.c.l.b16 %v1142
    %v1195 = vunpack.c.h.b16 %v1142
    %v1196 = vunpack.c.l.b16 %v1143
    %v1197 = vunpack.c.h.b16 %v1143
    %v1198 = vpack.c.b16 %v1168, %v1166
    %v1199 = vpack.c.b16 %v1169, %v1167
    %v1200 = vpack.c.b16 %v1172, %v1170
    %v1201 = vpack.c.b16 %v1173, %v1171
    %v1202 = vpack.c.b16 %v1176, %v1174
    %v1203 = vpack.c.b16 %v1177, %v1175
    %v1204 = vpack.c.b16 %v1180, %v1178
    %v1205 = vpack.c.b16 %v1181, %v1179
    %v1206 = vpack.c.b16 %v1184, %v1182
    %v1207 = vpack.c.b16 %v1185, %v1183
    %v1208 = vpack.c.b16 %v1188, %v1186
    %v1209 = vpack.c.b16 %v1189, %v1187
    %v1210 = vpack.c.b16 %v1192, %v1190
    %v1211 = vpack.c.b16 %v1193, %v1191
    %v1212 = vpack.c.b16 %v1196, %v1194
    %v1213 = vpack.c.b16 %v1197, %v1195
    %1230 = vmatpush.bf16.msra.mxu0 %v1212
    %1231 = vmatpush.bf16.msra.mxu0 %v1210
    %1232 = vmatpush.bf16.msra.mxu0 %v1208
    %1233 = vmatpush.bf16.msra.mxu0 %v1206
    %1234 = vmatpush.bf16.msra.mxu0 %v1204
    %1235 = vmatpush.bf16.msra.mxu0 %v1202
    %1236 = vmatpush.bf16.msra.mxu0 %v1200
    %1237 = vmatpush.bf16.msra.mxu0 %v1198
    %1238 = vmatmul.bf16.gmra.mxu0 %v764
    %v1239 = vpop.f32.mrf.mxu0
    %v1240 = vadd.f32 %v1146, %v1239
    %v1241 = vpop.f32.mrf.mxu0
    %v1242 = vadd.f32 %v1146, %v1241
    %1243 = vmatmul.bf16.gmra.mxu0 %v765
    %v1244 = vpop.f32.mrf.mxu0
    %v1245 = vadd.f32 %v1146, %v1244
    %v1246 = vpop.f32.mrf.mxu0
    %v1247 = vadd.f32 %v1146, %v1246
    %1248 = vmatmul.bf16.gmra.mxu0 %v766
    %v1249 = vpop.f32.mrf.mxu0
    %v1250 = vadd.f32 %v1146, %v1249
    %v1251 = vpop.f32.mrf.mxu0
    %v1252 = vadd.f32 %v1146, %v1251
    %1253 = vmatmul.bf16.gmra.mxu0 %v767
    %v1254 = vpop.f32.mrf.mxu0
    %v1255 = vadd.f32 %v1146, %v1254
    %v1256 = vpop.f32.mrf.mxu0
    %v1257 = vadd.f32 %v1146, %v1256
    %1258 = vmatmul.bf16.gmra.mxu0 %v768
    %v1259 = vpop.f32.mrf.mxu0
    %v1260 = vadd.f32 %v1146, %v1259
    %v1261 = vpop.f32.mrf.mxu0
    %v1262 = vadd.f32 %v1146, %v1261
    %1263 = vmatmul.bf16.gmra.mxu0 %v769
    %v1264 = vpop.f32.mrf.mxu0
    %v1265 = vadd.f32 %v1146, %v1264
    %v1266 = vpop.f32.mrf.mxu0
    %v1267 = vadd.f32 %v1146, %v1266
    %1268 = vmatmul.bf16.gmra.mxu0 %v770
    %v1269 = vpop.f32.mrf.mxu0
    %v1270 = vadd.f32 %v1146, %v1269
    %v1271 = vpop.f32.mrf.mxu0
    %v1272 = vadd.f32 %v1146, %v1271
    %1273 = vmatmul.bf16.gmra.mxu0 %v771
    %v1274 = vpop.f32.mrf.mxu0
    %v1275 = vadd.f32 %v1146, %v1274
    %v1276 = vpop.f32.mrf.mxu0
    %v1277 = vadd.f32 %v1146, %v1276
    %1278 = vdwg.mxu0
    %1279 = vmatpush.bf16.msra.mxu0 %v1213
    %1280 = vmatpush.bf16.msra.mxu0 %v1211
    %1281 = vmatpush.bf16.msra.mxu0 %v1209
    %1282 = vmatpush.bf16.msra.mxu0 %v1207
    %1283 = vmatpush.bf16.msra.mxu0 %v1205
    %1284 = vmatpush.bf16.msra.mxu0 %v1203
    %1285 = vmatpush.bf16.msra.mxu0 %v1201
    %1286 = vmatpush.bf16.msra.mxu0 %v1199
    %1287 = vmatmul.bf16.gmra.mxu0 %v764
    %v1288 = vpop.f32.mrf.mxu0
    %v1289 = vadd.f32 %v1147, %v1288
    %v1290 = vpop.f32.mrf.mxu0
    %v1291 = vadd.f32 %v1147, %v1290
    %1292 = vmatmul.bf16.gmra.mxu0 %v765
    %v1293 = vpop.f32.mrf.mxu0
    %v1294 = vadd.f32 %v1147, %v1293
    %v1295 = vpop.f32.mrf.mxu0
    %v1296 = vadd.f32 %v1147, %v1295
    %1297 = vmatmul.bf16.gmra.mxu0 %v766
    %v1298 = vpop.f32.mrf.mxu0
    %v1299 = vadd.f32 %v1147, %v1298
    %v1300 = vpop.f32.mrf.mxu0
    %v1301 = vadd.f32 %v1147, %v1300
    %1302 = vmatmul.bf16.gmra.mxu0 %v767
    %v1303 = vpop.f32.mrf.mxu0
    %v1304 = vadd.f32 %v1147, %v1303
    %v1305 = vpop.f32.mrf.mxu0
    %v1306 = vadd.f32 %v1147, %v1305
    %1307 = vmatmul.bf16.gmra.mxu0 %v768
    %v1308 = vpop.f32.mrf.mxu0
    %v1309 = vadd.f32 %v1147, %v1308
    %v1310 = vpop.f32.mrf.mxu0
    %v1311 = vadd.f32 %v1147, %v1310
    %1312 = vmatmul.bf16.gmra.mxu0 %v769
    %v1313 = vpop.f32.mrf.mxu0
    %v1314 = vadd.f32 %v1147, %v1313
    %v1315 = vpop.f32.mrf.mxu0
    %v1316 = vadd.f32 %v1147, %v1315
    %1317 = vmatmul.bf16.gmra.mxu0 %v770
    %v1318 = vpop.f32.mrf.mxu0
    %v1319 = vadd.f32 %v1147, %v1318
    %v1320 = vpop.f32.mrf.mxu0
    %v1321 = vadd.f32 %v1147, %v1320
    %1322 = vmatmul.bf16.gmra.mxu0 %v771
    %v1323 = vpop.f32.mrf.mxu0
    %v1324 = vadd.f32 %v1147, %v1323
    %v1325 = vpop.f32.mrf.mxu0
    %v1326 = vadd.f32 %v1147, %v1325
    %1327 = vdwg.mxu0
    %v1328 = vmax.f32 %v1240, 0.0
    %v1329 = vmax.f32 %v1289, 0.0
    %v1330 = vmax.f32 %v1242, 0.0
    %v1331 = vmax.f32 %v1291, 0.0
    %v1332 = vmax.f32 %v1245, 0.0
    %v1333 = vmax.f32 %v1294, 0.0
    %v1334 = vmax.f32 %v1247, 0.0
    %v1335 = vmax.f32 %v1296, 0.0
    %v1336 = vmax.f32 %v1250, 0.0
    %v1337 = vmax.f32 %v1299, 0.0
    %v1338 = vmax.f32 %v1252, 0.0
    %v1339 = vmax.f32 %v1301, 0.0
    %v1340 = vmax.f32 %v1255, 0.0
    %v1341 = vmax.f32 %v1304, 0.0
    %v1342 = vmax.f32 %v1257, 0.0
    %v1343 = vmax.f32 %v1306, 0.0
    %v1344 = vmax.f32 %v1260, 0.0
    %v1345 = vmax.f32 %v1309, 0.0
    %v1346 = vmax.f32 %v1262, 0.0
    %v1347 = vmax.f32 %v1311, 0.0
    %v1348 = vmax.f32 %v1265, 0.0
    %v1349 = vmax.f32 %v1314, 0.0
    %v1350 = vmax.f32 %v1267, 0.0
    %v1351 = vmax.f32 %v1316, 0.0
    %v1352 = vmax.f32 %v1270, 0.0
    %v1353 = vmax.f32 %v1319, 0.0
    %v1354 = vmax.f32 %v1272, 0.0
    %v1355 = vmax.f32 %v1321, 0.0
    %v1356 = vmax.f32 %v1275, 0.0
    %v1357 = vmax.f32 %v1324, 0.0
    %v1358 = vmax.f32 %v1277, 0.0
    %v1359 = vmax.f32 %v1326, 0.0
    %v1360 = vmax.f32 %v1328, %v1330
    %v1361 = vmax.f32 %v1360, %v1332
    %v1362 = vmax.f32 %v1361, %v1334
    %v1363 = vmax.f32 %v1362, %v1336
    %v1364 = vmax.f32 %v1363, %v1338
    %v1365 = vmax.f32 %v1364, %v1340
    %v1366 = vmax.f32 %v1365, %v1342
    %v1367 = vrot.slane %v1366, 4
    %v1368 = vmax.f32 %v1366, %v1367
    %v1369 = vrot.slane %v1368, 2
    %v1370 = vmax.f32 %v1368, %v1369
    %v1371 = vrot.slane %v1370, 1
    %v1372 = vmax.f32 %v1370, %v1371
    %v1373 = vmax.f32 %v1329, %v1331
    %v1374 = vmax.f32 %v1373, %v1333
    %v1375 = vmax.f32 %v1374, %v1335
    %v1376 = vmax.f32 %v1375, %v1337
    %v1377 = vmax.f32 %v1376, %v1339
    %v1378 = vmax.f32 %v1377, %v1341
    %v1379 = vmax.f32 %v1378, %v1343
    %v1380 = vrot.slane %v1379, 4
    %v1381 = vmax.f32 %v1379, %v1380
    %v1382 = vrot.slane %v1381, 2
    %v1383 = vmax.f32 %v1381, %v1382
    %v1384 = vrot.slane %v1383, 1
    %v1385 = vmax.f32 %v1383, %v1384
    %v1386 = vmax.f32 %v1344, %v1346
    %v1387 = vmax.f32 %v1386, %v1348
    %v1388 = vmax.f32 %v1387, %v1350
    %v1389 = vmax.f32 %v1388, %v1352
    %v1390 = vmax.f32 %v1389, %v1354
    %v1391 = vmax.f32 %v1390, %v1356
    %v1392 = vmax.f32 %v1391, %v1358
    %v1393 = vrot.slane %v1392, 4
    %v1394 = vmax.f32 %v1392, %v1393
    %v1395 = vrot.slane %v1394, 2
    %v1396 = vmax.f32 %v1394, %v1395
    %v1397 = vrot.slane %v1396, 1
    %v1398 = vmax.f32 %v1396, %v1397
    %v1399 = vmax.f32 %v1345, %v1347
    %v1400 = vmax.f32 %v1399, %v1349
    %v1401 = vmax.f32 %v1400, %v1351
    %v1402 = vmax.f32 %v1401, %v1353
    %v1403 = vmax.f32 %v1402, %v1355
    %v1404 = vmax.f32 %v1403, %v1357
    %v1405 = vmax.f32 %v1404, %v1359
    %v1406 = vrot.slane %v1405, 4
    %v1407 = vmax.f32 %v1405, %v1406
    %v1408 = vrot.slane %v1407, 2
    %v1409 = vmax.f32 %v1407, %v1408
    %v1410 = vrot.slane %v1409, 1
    %v1411 = vmax.f32 %v1409, %v1410
    %v1412 = vpack.c.bf16 %v1372, %v1372
    %v1413 = vpack.c.bf16 %v1385, %v1385
    %v1414 = vpack.c.bf16 %v1398, %v1398
    %v1415 = vpack.c.bf16 %v1411, %v1411
    %s1416 = sshll.u32 %s1061, 4
    %1417 = dma.done %s130, %s1416
    %v1418 = vld [vmem:[#allocation2 + $0x200] sm:$0xff]
    %v1419 = vld [vmem:[#allocation2 + $0x208] sm:$0xff]
    %v1420 = vld [vmem:[#allocation2 + $0x210] sm:$0xff]
    %v1421 = vld [vmem:[#allocation2 + $0x218] sm:$0xff]
    %v1422 = vld [vmem:[#allocation2 + $0x220] sm:$0xff]
    %v1423 = vld [vmem:[#allocation2 + $0x228] sm:$0xff]
    %v1424 = vld [vmem:[#allocation2 + $0x230] sm:$0xff]
    %v1425 = vld [vmem:[#allocation2 + $0x238] sm:$0xff]
    %v1426 = vld [vmem:[#allocation2 + $0x240] sm:$0xff]
    %v1427 = vld [vmem:[#allocation2 + $0x248] sm:$0xff]
    %v1428 = vld [vmem:[#allocation2 + $0x250] sm:$0xff]
    %v1429 = vld [vmem:[#allocation2 + $0x258] sm:$0xff]
    %v1430 = vld [vmem:[#allocation2 + $0x260] sm:$0xff]
    %v1431 = vld [vmem:[#allocation2 + $0x268] sm:$0xff]
    %v1432 = vld [vmem:[#allocation2 + $0x270] sm:$0xff]
    %v1433 = vld [vmem:[#allocation2 + $0x278] sm:$0xff]
    %v1434 = vld [vmem:[#allocation2 + $0x280] sm:$0xff]
    %v1435 = vld [vmem:[#allocation2 + $0x288] sm:$0xff]
    %v1436 = vld [vmem:[#allocation2 + $0x290] sm:$0xff]
    %v1437 = vld [vmem:[#allocation2 + $0x298] sm:$0xff]
    %v1438 = vld [vmem:[#allocation2 + $0x2a0] sm:$0xff]
    %v1439 = vld [vmem:[#allocation2 + $0x2a8] sm:$0xff]
    %v1440 = vld [vmem:[#allocation2 + $0x2b0] sm:$0xff]
    %v1441 = vld [vmem:[#allocation2 + $0x2b8] sm:$0xff]
    %v1442 = vld [vmem:[#allocation2 + $0x2c0] sm:$0xff]
    %v1443 = vld [vmem:[#allocation2 + $0x2c8] sm:$0xff]
    %v1444 = vld [vmem:[#allocation2 + $0x2d0] sm:$0xff]
    %v1445 = vld [vmem:[#allocation2 + $0x2d8] sm:$0xff]
    %v1446 = vld [vmem:[#allocation2 + $0x2e0] sm:$0xff]
    %v1447 = vld [vmem:[#allocation2 + $0x2e8] sm:$0xff]
    %v1448 = vld [vmem:[#allocation2 + $0x2f0] sm:$0xff]
    %v1449 = vld [vmem:[#allocation2 + $0x2f8] sm:$0xff]
    %v1450 = vld [vmem:[#allocation2 + $0x300] sm:$0xff]
    %v1451 = vld [vmem:[#allocation2 + $0x308] sm:$0xff]
    %v1452 = vld [vmem:[#allocation2 + $0x310] sm:$0xff]
    %v1453 = vld [vmem:[#allocation2 + $0x318] sm:$0xff]
    %v1454 = vld [vmem:[#allocation2 + $0x320] sm:$0xff]
    %v1455 = vld [vmem:[#allocation2 + $0x328] sm:$0xff]
    %v1456 = vld [vmem:[#allocation2 + $0x330] sm:$0xff]
    %v1457 = vld [vmem:[#allocation2 + $0x338] sm:$0xff]
    %v1458 = vld [vmem:[#allocation2 + $0x340] sm:$0xff]
    %v1459 = vld [vmem:[#allocation2 + $0x348] sm:$0xff]
    %v1460 = vld [vmem:[#allocation2 + $0x350] sm:$0xff]
    %v1461 = vld [vmem:[#allocation2 + $0x358] sm:$0xff]
    %v1462 = vld [vmem:[#allocation2 + $0x360] sm:$0xff]
    %v1463 = vld [vmem:[#allocation2 + $0x368] sm:$0xff]
    %v1464 = vld [vmem:[#allocation2 + $0x370] sm:$0xff]
    %v1465 = vld [vmem:[#allocation2 + $0x378] sm:$0xff]
    %v1466 = vld [vmem:[#allocation2 + $0x380] sm:$0xff]
    %v1467 = vld [vmem:[#allocation2 + $0x388] sm:$0xff]
    %v1468 = vld [vmem:[#allocation2 + $0x390] sm:$0xff]
    %v1469 = vld [vmem:[#allocation2 + $0x398] sm:$0xff]
    %v1470 = vld [vmem:[#allocation2 + $0x3a0] sm:$0xff]
    %v1471 = vld [vmem:[#allocation2 + $0x3a8] sm:$0xff]
    %v1472 = vld [vmem:[#allocation2 + $0x3b0] sm:$0xff]
    %v1473 = vld [vmem:[#allocation2 + $0x3b8] sm:$0xff]
    %v1474 = vld [vmem:[#allocation2 + $0x3c0] sm:$0xff]
    %v1475 = vld [vmem:[#allocation2 + $0x3c8] sm:$0xff]
    %v1476 = vld [vmem:[#allocation2 + $0x3d0] sm:$0xff]
    %v1477 = vld [vmem:[#allocation2 + $0x3d8] sm:$0xff]
    %v1478 = vld [vmem:[#allocation2 + $0x3e0] sm:$0xff]
    %v1479 = vld [vmem:[#allocation2 + $0x3e8] sm:$0xff]
    %v1480 = vld [vmem:[#allocation2 + $0x3f0] sm:$0xff]
    %v1481 = vld [vmem:[#allocation2 + $0x3f8] sm:$0xff]
    %v1486 = vunpack.c.l.b16 %v1412
    %v1487 = vunpack.c.l.b16 %v1413
    %v1488 = vunpack.c.l.b16 %v1414
    %v1489 = vunpack.c.l.b16 %v1415
    %vm1490 = vcmask 1041409
    %v1491 = vsel %vm1490, %v1488, %v1486
    %v1492 = vsel %vm1490, %v1489, %v1487
    %v1493 = vpack.c.b16 %v1491, %v1491
    %v1494 = vpack.c.b16 %v1492, %v1492
    %v1561 = vunpack.c.l.b16 %v1418
    %v1562 = vunpack.c.h.b16 %v1418
    %v1563 = vunpack.c.l.b16 %v1419
    %v1564 = vunpack.c.h.b16 %v1419
    %v1565 = vunpack.c.l.b16 %v1420
    %v1566 = vunpack.c.h.b16 %v1420
    %v1567 = vunpack.c.l.b16 %v1421
    %v1568 = vunpack.c.h.b16 %v1421
    %v1569 = vunpack.c.l.b16 %v1422
    %v1570 = vunpack.c.h.b16 %v1422
    %v1571 = vunpack.c.l.b16 %v1423
    %v1572 = vunpack.c.h.b16 %v1423
    %v1573 = vunpack.c.l.b16 %v1424
    %v1574 = vunpack.c.h.b16 %v1424
    %v1575 = vunpack.c.l.b16 %v1425
    %v1576 = vunpack.c.h.b16 %v1425
    %v1577 = vunpack.c.l.b16 %v1426
    %v1578 = vunpack.c.h.b16 %v1426
    %v1579 = vunpack.c.l.b16 %v1427
    %v1580 = vunpack.c.h.b16 %v1427
    %v1581 = vunpack.c.l.b16 %v1428
    %v1582 = vunpack.c.h.b16 %v1428
    %v1583 = vunpack.c.l.b16 %v1429
    %v1584 = vunpack.c.h.b16 %v1429
    %v1585 = vunpack.c.l.b16 %v1430
    %v1586 = vunpack.c.h.b16 %v1430
    %v1587 = vunpack.c.l.b16 %v1431
    %v1588 = vunpack.c.h.b16 %v1431
    %v1589 = vunpack.c.l.b16 %v1432
    %v1590 = vunpack.c.h.b16 %v1432
    %v1591 = vunpack.c.l.b16 %v1433
    %v1592 = vunpack.c.h.b16 %v1433
    %v1593 = vunpack.c.l.b16 %v1434
    %v1594 = vunpack.c.h.b16 %v1434
    %v1595 = vunpack.c.l.b16 %v1435
    %v1596 = vunpack.c.h.b16 %v1435
    %v1597 = vunpack.c.l.b16 %v1436
    %v1598 = vunpack.c.h.b16 %v1436
    %v1599 = vunpack.c.l.b16 %v1437
    %v1600 = vunpack.c.h.b16 %v1437
    %v1601 = vunpack.c.l.b16 %v1438
    %v1602 = vunpack.c.h.b16 %v1438
    %v1603 = vunpack.c.l.b16 %v1439
    %v1604 = vunpack.c.h.b16 %v1439
    %v1605 = vunpack.c.l.b16 %v1440
    %v1606 = vunpack.c.h.b16 %v1440
    %v1607 = vunpack.c.l.b16 %v1441
    %v1608 = vunpack.c.h.b16 %v1441
    %v1609 = vunpack.c.l.b16 %v1442
    %v1610 = vunpack.c.h.b16 %v1442
    %v1611 = vunpack.c.l.b16 %v1443
    %v1612 = vunpack.c.h.b16 %v1443
    %v1613 = vunpack.c.l.b16 %v1444
    %v1614 = vunpack.c.h.b16 %v1444
    %v1615 = vunpack.c.l.b16 %v1445
    %v1616 = vunpack.c.h.b16 %v1445
    %v1617 = vunpack.c.l.b16 %v1446
    %v1618 = vunpack.c.h.b16 %v1446
    %v1619 = vunpack.c.l.b16 %v1447
    %v1620 = vunpack.c.h.b16 %v1447
    %v1621 = vunpack.c.l.b16 %v1448
    %v1622 = vunpack.c.h.b16 %v1448
    %v1623 = vunpack.c.l.b16 %v1449
    %v1624 = vunpack.c.h.b16 %v1449
    %v1625 = vunpack.c.l.b16 %v1450
    %v1626 = vunpack.c.h.b16 %v1450
    %v1627 = vunpack.c.l.b16 %v1451
    %v1628 = vunpack.c.h.b16 %v1451
    %v1629 = vunpack.c.l.b16 %v1452
    %v1630 = vunpack.c.h.b16 %v1452
    %v1631 = vunpack.c.l.b16 %v1453
    %v1632 = vunpack.c.h.b16 %v1453
    %v1633 = vunpack.c.l.b16 %v1454
    %v1634 = vunpack.c.h.b16 %v1454
    %v1635 = vunpack.c.l.b16 %v1455
    %v1636 = vunpack.c.h.b16 %v1455
    %v1637 = vunpack.c.l.b16 %v1456
    %v1638 = vunpack.c.h.b16 %v1456
    %v1639 = vunpack.c.l.b16 %v1457
    %v1640 = vunpack.c.h.b16 %v1457
    %v1641 = vunpack.c.l.b16 %v1458
    %v1642 = vunpack.c.h.b16 %v1458
    %v1643 = vunpack.c.l.b16 %v1459
    %v1644 = vunpack.c.h.b16 %v1459
    %v1645 = vunpack.c.l.b16 %v1460
    %v1646 = vunpack.c.h.b16 %v1460
    %v1647 = vunpack.c.l.b16 %v1461
    %v1648 = vunpack.c.h.b16 %v1461
    %v1649 = vunpack.c.l.b16 %v1462
    %v1650 = vunpack.c.h.b16 %v1462
    %v1651 = vunpack.c.l.b16 %v1463
    %v1652 = vunpack.c.h.b16 %v1463
    %v1653 = vunpack.c.l.b16 %v1464
    %v1654 = vunpack.c.h.b16 %v1464
    %v1655 = vunpack.c.l.b16 %v1465
    %v1656 = vunpack.c.h.b16 %v1465
    %v1657 = vunpack.c.l.b16 %v1466
    %v1658 = vunpack.c.h.b16 %v1466
    %v1659 = vunpack.c.l.b16 %v1467
    %v1660 = vunpack.c.h.b16 %v1467
    %v1661 = vunpack.c.l.b16 %v1468
    %v1662 = vunpack.c.h.b16 %v1468
    %v1663 = vunpack.c.l.b16 %v1469
    %v1664 = vunpack.c.h.b16 %v1469
    %v1665 = vunpack.c.l.b16 %v1470
    %v1666 = vunpack.c.h.b16 %v1470
    %v1667 = vunpack.c.l.b16 %v1471
    %v1668 = vunpack.c.h.b16 %v1471
    %v1669 = vunpack.c.l.b16 %v1472
    %v1670 = vunpack.c.h.b16 %v1472
    %v1671 = vunpack.c.l.b16 %v1473
    %v1672 = vunpack.c.h.b16 %v1473
    %v1673 = vunpack.c.l.b16 %v1474
    %v1674 = vunpack.c.h.b16 %v1474
    %v1675 = vunpack.c.l.b16 %v1475
    %v1676 = vunpack.c.h.b16 %v1475
    %v1677 = vunpack.c.l.b16 %v1476
    %v1678 = vunpack.c.h.b16 %v1476
    %v1679 = vunpack.c.l.b16 %v1477
    %v1680 = vunpack.c.h.b16 %v1477
    %v1681 = vunpack.c.l.b16 %v1478
    %v1682 = vunpack.c.h.b16 %v1478
    %v1683 = vunpack.c.l.b16 %v1479
    %v1684 = vunpack.c.h.b16 %v1479
    %v1685 = vunpack.c.l.b16 %v1480
    %v1686 = vunpack.c.h.b16 %v1480
    %v1687 = vunpack.c.l.b16 %v1481
    %v1688 = vunpack.c.h.b16 %v1481
    %v1689 = vpack.c.b16 %v1565, %v1561
    %v1690 = vpack.c.b16 %v1566, %v1562
    %v1691 = vpack.c.b16 %v1567, %v1563
    %v1692 = vpack.c.b16 %v1568, %v1564
    %v1693 = vpack.c.b16 %v1573, %v1569
    %v1694 = vpack.c.b16 %v1574, %v1570
    %v1695 = vpack.c.b16 %v1575, %v1571
    %v1696 = vpack.c.b16 %v1576, %v1572
    %v1697 = vpack.c.b16 %v1581, %v1577
    %v1698 = vpack.c.b16 %v1582, %v1578
    %v1699 = vpack.c.b16 %v1583, %v1579
    %v1700 = vpack.c.b16 %v1584, %v1580
    %v1701 = vpack.c.b16 %v1589, %v1585
    %v1702 = vpack.c.b16 %v1590, %v1586
    %v1703 = vpack.c.b16 %v1591, %v1587
    %v1704 = vpack.c.b16 %v1592, %v1588
    %v1705 = vpack.c.b16 %v1597, %v1593
    %v1706 = vpack.c.b16 %v1598, %v1594
    %v1707 = vpack.c.b16 %v1599, %v1595
    %v1708 = vpack.c.b16 %v1600, %v1596
    %v1709 = vpack.c.b16 %v1605, %v1601
    %v1710 = vpack.c.b16 %v1606, %v1602
    %v1711 = vpack.c.b16 %v1607, %v1603
    %v1712 = vpack.c.b16 %v1608, %v1604
    %v1713 = vpack.c.b16 %v1613, %v1609
    %v1714 = vpack.c.b16 %v1614, %v1610
    %v1715 = vpack.c.b16 %v1615, %v1611
    %v1716 = vpack.c.b16 %v1616, %v1612
    %v1717 = vpack.c.b16 %v1621, %v1617
    %v1718 = vpack.c.b16 %v1622, %v1618
    %v1719 = vpack.c.b16 %v1623, %v1619
    %v1720 = vpack.c.b16 %v1624, %v1620
    %v1721 = vpack.c.b16 %v1629, %v1625
    %v1722 = vpack.c.b16 %v1630, %v1626
    %v1723 = vpack.c.b16 %v1631, %v1627
    %v1724 = vpack.c.b16 %v1632, %v1628
    %v1725 = vpack.c.b16 %v1637, %v1633
    %v1726 = vpack.c.b16 %v1638, %v1634
    %v1727 = vpack.c.b16 %v1639, %v1635
    %v1728 = vpack.c.b16 %v1640, %v1636
    %v1729 = vpack.c.b16 %v1645, %v1641
    %v1730 = vpack.c.b16 %v1646, %v1642
    %v1731 = vpack.c.b16 %v1647, %v1643
    %v1732 = vpack.c.b16 %v1648, %v1644
    %v1733 = vpack.c.b16 %v1653, %v1649
    %v1734 = vpack.c.b16 %v1654, %v1650
    %v1735 = vpack.c.b16 %v1655, %v1651
    %v1736 = vpack.c.b16 %v1656, %v1652
    %v1737 = vpack.c.b16 %v1661, %v1657
    %v1738 = vpack.c.b16 %v1662, %v1658
    %v1739 = vpack.c.b16 %v1663, %v1659
    %v1740 = vpack.c.b16 %v1664, %v1660
    %v1741 = vpack.c.b16 %v1669, %v1665
    %v1742 = vpack.c.b16 %v1670, %v1666
    %v1743 = vpack.c.b16 %v1671, %v1667
    %v1744 = vpack.c.b16 %v1672, %v1668
    %v1745 = vpack.c.b16 %v1677, %v1673
    %v1746 = vpack.c.b16 %v1678, %v1674
    %v1747 = vpack.c.b16 %v1679, %v1675
    %v1748 = vpack.c.b16 %v1680, %v1676
    %v1749 = vpack.c.b16 %v1685, %v1681
    %v1750 = vpack.c.b16 %v1686, %v1682
    %v1751 = vpack.c.b16 %v1687, %v1683
    %v1752 = vpack.c.b16 %v1688, %v1684
    %1817 = vmatpush.bf16.msra.mxu0 %v1717
    %1818 = vmatpush.bf16.msra.mxu0 %v1713
    %1819 = vmatpush.bf16.msra.mxu0 %v1709
    %1820 = vmatpush.bf16.msra.mxu0 %v1705
    %1821 = vmatpush.bf16.msra.mxu0 %v1701
    %1822 = vmatpush.bf16.msra.mxu0 %v1697
    %1823 = vmatpush.bf16.msra.mxu0 %v1693
    %1824 = vmatpush.bf16.msra.mxu0 %v1689
    %1825 = vmatmul.bf16.gmra.mxu0 %v1493
    %v1826 = vpop.f32.mrf.mxu0
    %v1827 = vadd.f32 0.0, %v1826
    %v1828 = vpop.f32.mrf.mxu0
    %1829 = vdwg.mxu0
    %1830 = vmatpush.bf16.msra.mxu0 %v1749
    %1831 = vmatpush.bf16.msra.mxu0 %v1745
    %1832 = vmatpush.bf16.msra.mxu0 %v1741
    %1833 = vmatpush.bf16.msra.mxu0 %v1737
    %1834 = vmatpush.bf16.msra.mxu0 %v1733
    %1835 = vmatpush.bf16.msra.mxu0 %v1729
    %1836 = vmatpush.bf16.msra.mxu0 %v1725
    %1837 = vmatpush.bf16.msra.mxu0 %v1721
    %1838 = vmatmul.bf16.gmra.mxu0 %v1494
    %v1839 = vpop.f32.mrf.mxu0
    %v1840 = vadd.f32 %v1827, %v1839
    %v1841 = vpop.f32.mrf.mxu0
    %1842 = vdwg.mxu0
    %1843 = vmatpush.bf16.msra.mxu0 %v1718
    %1844 = vmatpush.bf16.msra.mxu0 %v1714
    %1845 = vmatpush.bf16.msra.mxu0 %v1710
    %1846 = vmatpush.bf16.msra.mxu0 %v1706
    %1847 = vmatpush.bf16.msra.mxu0 %v1702
    %1848 = vmatpush.bf16.msra.mxu0 %v1698
    %1849 = vmatpush.bf16.msra.mxu0 %v1694
    %1850 = vmatpush.bf16.msra.mxu0 %v1690
    %1851 = vmatmul.bf16.gmra.mxu0 %v1493
    %v1852 = vpop.f32.mrf.mxu0
    %v1853 = vadd.f32 0.0, %v1852
    %v1854 = vpop.f32.mrf.mxu0
    %1855 = vdwg.mxu0
    %1856 = vmatpush.bf16.msra.mxu0 %v1750
    %1857 = vmatpush.bf16.msra.mxu0 %v1746
    %1858 = vmatpush.bf16.msra.mxu0 %v1742
    %1859 = vmatpush.bf16.msra.mxu0 %v1738
    %1860 = vmatpush.bf16.msra.mxu0 %v1734
    %1861 = vmatpush.bf16.msra.mxu0 %v1730
    %1862 = vmatpush.bf16.msra.mxu0 %v1726
    %1863 = vmatpush.bf16.msra.mxu0 %v1722
    %1864 = vmatmul.bf16.gmra.mxu0 %v1494
    %v1865 = vpop.f32.mrf.mxu0
    %v1866 = vadd.f32 %v1853, %v1865
    %v1867 = vpop.f32.mrf.mxu0
    %1868 = vdwg.mxu0
    %1869 = vmatpush.bf16.msra.mxu0 %v1719
    %1870 = vmatpush.bf16.msra.mxu0 %v1715
    %1871 = vmatpush.bf16.msra.mxu0 %v1711
    %1872 = vmatpush.bf16.msra.mxu0 %v1707
    %1873 = vmatpush.bf16.msra.mxu0 %v1703
    %1874 = vmatpush.bf16.msra.mxu0 %v1699
    %1875 = vmatpush.bf16.msra.mxu0 %v1695
    %1876 = vmatpush.bf16.msra.mxu0 %v1691
    %1877 = vmatmul.bf16.gmra.mxu0 %v1493
    %v1878 = vpop.f32.mrf.mxu0
    %v1879 = vadd.f32 0.0, %v1878
    %v1880 = vpop.f32.mrf.mxu0
    %1881 = vdwg.mxu0
    %1882 = vmatpush.bf16.msra.mxu0 %v1751
    %1883 = vmatpush.bf16.msra.mxu0 %v1747
    %1884 = vmatpush.bf16.msra.mxu0 %v1743
    %1885 = vmatpush.bf16.msra.mxu0 %v1739
    %1886 = vmatpush.bf16.msra.mxu0 %v1735
    %1887 = vmatpush.bf16.msra.mxu0 %v1731
    %1888 = vmatpush.bf16.msra.mxu0 %v1727
    %1889 = vmatpush.bf16.msra.mxu0 %v1723
    %1890 = vmatmul.bf16.gmra.mxu0 %v1494
    %v1891 = vpop.f32.mrf.mxu0
    %v1892 = vadd.f32 %v1879, %v1891
    %v1893 = vpop.f32.mrf.mxu0
    %1894 = vdwg.mxu0
    %1895 = vmatpush.bf16.msra.mxu0 %v1720
    %1896 = vmatpush.bf16.msra.mxu0 %v1716
    %1897 = vmatpush.bf16.msra.mxu0 %v1712
    %1898 = vmatpush.bf16.msra.mxu0 %v1708
    %1899 = vmatpush.bf16.msra.mxu0 %v1704
    %1900 = vmatpush.bf16.msra.mxu0 %v1700
    %1901 = vmatpush.bf16.msra.mxu0 %v1696
    %1902 = vmatpush.bf16.msra.mxu0 %v1692
    %1903 = vmatmul.bf16.gmra.mxu0 %v1493
    %v1904 = vpop.f32.mrf.mxu0
    %v1905 = vadd.f32 0.0, %v1904
    %v1906 = vpop.f32.mrf.mxu0
    %1907 = vdwg.mxu0
    %1908 = vmatpush.bf16.msra.mxu0 %v1752
    %1909 = vmatpush.bf16.msra.mxu0 %v1748
    %1910 = vmatpush.bf16.msra.mxu0 %v1744
    %1911 = vmatpush.bf16.msra.mxu0 %v1740
    %1912 = vmatpush.bf16.msra.mxu0 %v1736
    %1913 = vmatpush.bf16.msra.mxu0 %v1732
    %1914 = vmatpush.bf16.msra.mxu0 %v1728
    %1915 = vmatpush.bf16.msra.mxu0 %v1724
    %1916 = vmatmul.bf16.gmra.mxu0 %v1494
    %v1917 = vpop.f32.mrf.mxu0
    %v1918 = vadd.f32 %v1905, %v1917
    %v1919 = vpop.f32.mrf.mxu0
    %1920 = vdwg.mxu0
    %v1925 = vunpack.c.l.b16 %v1056
    %v1926 = vunpack.c.l.b16 %v1057
    %v1927 = vunpack.c.l.b16 %v1058
    %v1928 = vunpack.c.l.b16 %v1059
    %v1929 = vsel %vm1490, %v1927, %v1925
    %v1930 = vsel %vm1490, %v1928, %v1926
    %v1931 = vpack.c.b16 %v1929, %v1929
    %v1932 = vpack.c.b16 %v1930, %v1930
    %v1999 = vunpack.c.l.b16 %v1064
    %v2000 = vunpack.c.h.b16 %v1064
    %v2001 = vunpack.c.l.b16 %v1065
    %v2002 = vunpack.c.h.b16 %v1065
    %v2003 = vunpack.c.l.b16 %v1066
    %v2004 = vunpack.c.h.b16 %v1066
    %v2005 = vunpack.c.l.b16 %v1067
    %v2006 = vunpack.c.h.b16 %v1067
    %v2007 = vunpack.c.l.b16 %v1068
    %v2008 = vunpack.c.h.b16 %v1068
    %v2009 = vunpack.c.l.b16 %v1069
    %v2010 = vunpack.c.h.b16 %v1069
    %v2011 = vunpack.c.l.b16 %v1070
    %v2012 = vunpack.c.h.b16 %v1070
    %v2013 = vunpack.c.l.b16 %v1071
    %v2014 = vunpack.c.h.b16 %v1071
    %v2015 = vunpack.c.l.b16 %v1072
    %v2016 = vunpack.c.h.b16 %v1072
    %v2017 = vunpack.c.l.b16 %v1073
    %v2018 = vunpack.c.h.b16 %v1073
    %v2019 = vunpack.c.l.b16 %v1074
    %v2020 = vunpack.c.h.b16 %v1074
    %v2021 = vunpack.c.l.b16 %v1075
    %v2022 = vunpack.c.h.b16 %v1075
    %v2023 = vunpack.c.l.b16 %v1076
    %v2024 = vunpack.c.h.b16 %v1076
    %v2025 = vunpack.c.l.b16 %v1077
    %v2026 = vunpack.c.h.b16 %v1077
    %v2027 = vunpack.c.l.b16 %v1078
    %v2028 = vunpack.c.h.b16 %v1078
    %v2029 = vunpack.c.l.b16 %v1079
    %v2030 = vunpack.c.h.b16 %v1079
    %v2031 = vunpack.c.l.b16 %v1080
    %v2032 = vunpack.c.h.b16 %v1080
    %v2033 = vunpack.c.l.b16 %v1081
    %v2034 = vunpack.c.h.b16 %v1081
    %v2035 = vunpack.c.l.b16 %v1082
    %v2036 = vunpack.c.h.b16 %v1082
    %v2037 = vunpack.c.l.b16 %v1083
    %v2038 = vunpack.c.h.b16 %v1083
    %v2039 = vunpack.c.l.b16 %v1084
    %v2040 = vunpack.c.h.b16 %v1084
    %v2041 = vunpack.c.l.b16 %v1085
    %v2042 = vunpack.c.h.b16 %v1085
    %v2043 = vunpack.c.l.b16 %v1086
    %v2044 = vunpack.c.h.b16 %v1086
    %v2045 = vunpack.c.l.b16 %v1087
    %v2046 = vunpack.c.h.b16 %v1087
    %v2047 = vunpack.c.l.b16 %v1088
    %v2048 = vunpack.c.h.b16 %v1088
    %v2049 = vunpack.c.l.b16 %v1089
    %v2050 = vunpack.c.h.b16 %v1089
    %v2051 = vunpack.c.l.b16 %v1090
    %v2052 = vunpack.c.h.b16 %v1090
    %v2053 = vunpack.c.l.b16 %v1091
    %v2054 = vunpack.c.h.b16 %v1091
    %v2055 = vunpack.c.l.b16 %v1092
    %v2056 = vunpack.c.h.b16 %v1092
    %v2057 = vunpack.c.l.b16 %v1093
    %v2058 = vunpack.c.h.b16 %v1093
    %v2059 = vunpack.c.l.b16 %v1094
    %v2060 = vunpack.c.h.b16 %v1094
    %v2061 = vunpack.c.l.b16 %v1095
    %v2062 = vunpack.c.h.b16 %v1095
    %v2063 = vunpack.c.l.b16 %v1096
    %v2064 = vunpack.c.h.b16 %v1096
    %v2065 = vunpack.c.l.b16 %v1097
    %v2066 = vunpack.c.h.b16 %v1097
    %v2067 = vunpack.c.l.b16 %v1098
    %v2068 = vunpack.c.h.b16 %v1098
    %v2069 = vunpack.c.l.b16 %v1099
    %v2070 = vunpack.c.h.b16 %v1099
    %v2071 = vunpack.c.l.b16 %v1100
    %v2072 = vunpack.c.h.b16 %v1100
    %v2073 = vunpack.c.l.b16 %v1101
    %v2074 = vunpack.c.h.b16 %v1101
    %v2075 = vunpack.c.l.b16 %v1102
    %v2076 = vunpack.c.h.b16 %v1102
    %v2077 = vunpack.c.l.b16 %v1103
    %v2078 = vunpack.c.h.b16 %v1103
    %v2079 = vunpack.c.l.b16 %v1104
    %v2080 = vunpack.c.h.b16 %v1104
    %v2081 = vunpack.c.l.b16 %v1105
    %v2082 = vunpack.c.h.b16 %v1105
    %v2083 = vunpack.c.l.b16 %v1106
    %v2084 = vunpack.c.h.b16 %v1106
    %v2085 = vunpack.c.l.b16 %v1107
    %v2086 = vunpack.c.h.b16 %v1107
    %v2087 = vunpack.c.l.b16 %v1108
    %v2088 = vunpack.c.h.b16 %v1108
    %v2089 = vunpack.c.l.b16 %v1109
    %v2090 = vunpack.c.h.b16 %v1109
    %v2091 = vunpack.c.l.b16 %v1110
    %v2092 = vunpack.c.h.b16 %v1110
    %v2093 = vunpack.c.l.b16 %v1111
    %v2094 = vunpack.c.h.b16 %v1111
    %v2095 = vunpack.c.l.b16 %v1112
    %v2096 = vunpack.c.h.b16 %v1112
    %v2097 = vunpack.c.l.b16 %v1113
    %v2098 = vunpack.c.h.b16 %v1113
    %v2099 = vunpack.c.l.b16 %v1114
    %v2100 = vunpack.c.h.b16 %v1114
    %v2101 = vunpack.c.l.b16 %v1115
    %v2102 = vunpack.c.h.b16 %v1115
    %v2103 = vunpack.c.l.b16 %v1116
    %v2104 = vunpack.c.h.b16 %v1116
    %v2105 = vunpack.c.l.b16 %v1117
    %v2106 = vunpack.c.h.b16 %v1117
    %v2107 = vunpack.c.l.b16 %v1118
    %v2108 = vunpack.c.h.b16 %v1118
    %v2109 = vunpack.c.l.b16 %v1119
    %v2110 = vunpack.c.h.b16 %v1119
    %v2111 = vunpack.c.l.b16 %v1120
    %v2112 = vunpack.c.h.b16 %v1120
    %v2113 = vunpack.c.l.b16 %v1121
    %v2114 = vunpack.c.h.b16 %v1121
    %v2115 = vunpack.c.l.b16 %v1122
    %v2116 = vunpack.c.h.b16 %v1122
    %v2117 = vunpack.c.l.b16 %v1123
    %v2118 = vunpack.c.h.b16 %v1123
    %v2119 = vunpack.c.l.b16 %v1124
    %v2120 = vunpack.c.h.b16 %v1124
    %v2121 = vunpack.c.l.b16 %v1125
    %v2122 = vunpack.c.h.b16 %v1125
    %v2123 = vunpack.c.l.b16 %v1126
    %v2124 = vunpack.c.h.b16 %v1126
    %v2125 = vunpack.c.l.b16 %v1127
    %v2126 = vunpack.c.h.b16 %v1127
    %v2127 = vpack.c.b16 %v2003, %v1999
    %v2128 = vpack.c.b16 %v2004, %v2000
    %v2129 = vpack.c.b16 %v2005, %v2001
    %v2130 = vpack.c.b16 %v2006, %v2002
    %v2131 = vpack.c.b16 %v2011, %v2007
    %v2132 = vpack.c.b16 %v2012, %v2008
    %v2133 = vpack.c.b16 %v2013, %v2009
    %v2134 = vpack.c.b16 %v2014, %v2010
    %v2135 = vpack.c.b16 %v2019, %v2015
    %v2136 = vpack.c.b16 %v2020, %v2016
    %v2137 = vpack.c.b16 %v2021, %v2017
    %v2138 = vpack.c.b16 %v2022, %v2018
    %v2139 = vpack.c.b16 %v2027, %v2023
    %v2140 = vpack.c.b16 %v2028, %v2024
    %v2141 = vpack.c.b16 %v2029, %v2025
    %v2142 = vpack.c.b16 %v2030, %v2026
    %v2143 = vpack.c.b16 %v2035, %v2031
    %v2144 = vpack.c.b16 %v2036, %v2032
    %v2145 = vpack.c.b16 %v2037, %v2033
    %v2146 = vpack.c.b16 %v2038, %v2034
    %v2147 = vpack.c.b16 %v2043, %v2039
    %v2148 = vpack.c.b16 %v2044, %v2040
    %v2149 = vpack.c.b16 %v2045, %v2041
    %v2150 = vpack.c.b16 %v2046, %v2042
    %v2151 = vpack.c.b16 %v2051, %v2047
    %v2152 = vpack.c.b16 %v2052, %v2048
    %v2153 = vpack.c.b16 %v2053, %v2049
    %v2154 = vpack.c.b16 %v2054, %v2050
    %v2155 = vpack.c.b16 %v2059, %v2055
    %v2156 = vpack.c.b16 %v2060, %v2056
    %v2157 = vpack.c.b16 %v2061, %v2057
    %v2158 = vpack.c.b16 %v2062, %v2058
    %v2159 = vpack.c.b16 %v2067, %v2063
    %v2160 = vpack.c.b16 %v2068, %v2064
    %v2161 = vpack.c.b16 %v2069, %v2065
    %v2162 = vpack.c.b16 %v2070, %v2066
    %v2163 = vpack.c.b16 %v2075, %v2071
    %v2164 = vpack.c.b16 %v2076, %v2072
    %v2165 = vpack.c.b16 %v2077, %v2073
    %v2166 = vpack.c.b16 %v2078, %v2074
    %v2167 = vpack.c.b16 %v2083, %v2079
    %v2168 = vpack.c.b16 %v2084, %v2080
    %v2169 = vpack.c.b16 %v2085, %v2081
    %v2170 = vpack.c.b16 %v2086, %v2082
    %v2171 = vpack.c.b16 %v2091, %v2087
    %v2172 = vpack.c.b16 %v2092, %v2088
    %v2173 = vpack.c.b16 %v2093, %v2089
    %v2174 = vpack.c.b16 %v2094, %v2090
    %v2175 = vpack.c.b16 %v2099, %v2095
    %v2176 = vpack.c.b16 %v2100, %v2096
    %v2177 = vpack.c.b16 %v2101, %v2097
    %v2178 = vpack.c.b16 %v2102, %v2098
    %v2179 = vpack.c.b16 %v2107, %v2103
    %v2180 = vpack.c.b16 %v2108, %v2104
    %v2181 = vpack.c.b16 %v2109, %v2105
    %v2182 = vpack.c.b16 %v2110, %v2106
    %v2183 = vpack.c.b16 %v2115, %v2111
    %v2184 = vpack.c.b16 %v2116, %v2112
    %v2185 = vpack.c.b16 %v2117, %v2113
    %v2186 = vpack.c.b16 %v2118, %v2114
    %v2187 = vpack.c.b16 %v2123, %v2119
    %v2188 = vpack.c.b16 %v2124, %v2120
    %v2189 = vpack.c.b16 %v2125, %v2121
    %v2190 = vpack.c.b16 %v2126, %v2122
    %2255 = vmatpush.bf16.msra.mxu0 %v2155
    %2256 = vmatpush.bf16.msra.mxu0 %v2151
    %2257 = vmatpush.bf16.msra.mxu0 %v2147
    %2258 = vmatpush.bf16.msra.mxu0 %v2143
    %2259 = vmatpush.bf16.msra.mxu0 %v2139
    %2260 = vmatpush.bf16.msra.mxu0 %v2135
    %2261 = vmatpush.bf16.msra.mxu0 %v2131
    %2262 = vmatpush.bf16.msra.mxu0 %v2127
    %2263 = vmatmul.bf16.gmra.mxu0 %v1931
    %v2264 = vpop.f32.mrf.mxu0
    %v2265 = vadd.f32 %v1840, %v2264
    %v2266 = vpop.f32.mrf.mxu0
    %2267 = vdwg.mxu0
    %2268 = vmatpush.bf16.msra.mxu0 %v2187
    %2269 = vmatpush.bf16.msra.mxu0 %v2183
    %2270 = vmatpush.bf16.msra.mxu0 %v2179
    %2271 = vmatpush.bf16.msra.mxu0 %v2175
    %2272 = vmatpush.bf16.msra.mxu0 %v2171
    %2273 = vmatpush.bf16.msra.mxu0 %v2167
    %2274 = vmatpush.bf16.msra.mxu0 %v2163
    %2275 = vmatpush.bf16.msra.mxu0 %v2159
    %2276 = vmatmul.bf16.gmra.mxu0 %v1932
    %v2277 = vpop.f32.mrf.mxu0
    %v2278 = vadd.f32 %v2265, %v2277
    %v2279 = vpop.f32.mrf.mxu0
    %2280 = vdwg.mxu0
    %2281 = vmatpush.bf16.msra.mxu0 %v2156
    %2282 = vmatpush.bf16.msra.mxu0 %v2152
    %2283 = vmatpush.bf16.msra.mxu0 %v2148
    %2284 = vmatpush.bf16.msra.mxu0 %v2144
    %2285 = vmatpush.bf16.msra.mxu0 %v2140
    %2286 = vmatpush.bf16.msra.mxu0 %v2136
    %2287 = vmatpush.bf16.msra.mxu0 %v2132
    %2288 = vmatpush.bf16.msra.mxu0 %v2128
    %2289 = vmatmul.bf16.gmra.mxu0 %v1931
    %v2290 = vpop.f32.mrf.mxu0
    %v2291 = vadd.f32 %v1866, %v2290
    %v2292 = vpop.f32.mrf.mxu0
    %2293 = vdwg.mxu0
    %2294 = vmatpush.bf16.msra.mxu0 %v2188
    %2295 = vmatpush.bf16.msra.mxu0 %v2184
    %2296 = vmatpush.bf16.msra.mxu0 %v2180
    %2297 = vmatpush.bf16.msra.mxu0 %v2176
    %2298 = vmatpush.bf16.msra.mxu0 %v2172
    %2299 = vmatpush.bf16.msra.mxu0 %v2168
    %2300 = vmatpush.bf16.msra.mxu0 %v2164
    %2301 = vmatpush.bf16.msra.mxu0 %v2160
    %2302 = vmatmul.bf16.gmra.mxu0 %v1932
    %v2303 = vpop.f32.mrf.mxu0
    %v2304 = vadd.f32 %v2291, %v2303
    %v2305 = vpop.f32.mrf.mxu0
    %2306 = vdwg.mxu0
    %2307 = vmatpush.bf16.msra.mxu0 %v2157
    %2308 = vmatpush.bf16.msra.mxu0 %v2153
    %2309 = vmatpush.bf16.msra.mxu0 %v2149
    %2310 = vmatpush.bf16.msra.mxu0 %v2145
    %2311 = vmatpush.bf16.msra.mxu0 %v2141
    %2312 = vmatpush.bf16.msra.mxu0 %v2137
    %2313 = vmatpush.bf16.msra.mxu0 %v2133
    %2314 = vmatpush.bf16.msra.mxu0 %v2129
    %2315 = vmatmul.bf16.gmra.mxu0 %v1931
    %v2316 = vpop.f32.mrf.mxu0
    %v2317 = vadd.f32 %v1892, %v2316
    %v2318 = vpop.f32.mrf.mxu0
    %2319 = vdwg.mxu0
    %2320 = vmatpush.bf16.msra.mxu0 %v2189
    %2321 = vmatpush.bf16.msra.mxu0 %v2185
    %2322 = vmatpush.bf16.msra.mxu0 %v2181
    %2323 = vmatpush.bf16.msra.mxu0 %v2177
    %2324 = vmatpush.bf16.msra.mxu0 %v2173
    %2325 = vmatpush.bf16.msra.mxu0 %v2169
    %2326 = vmatpush.bf16.msra.mxu0 %v2165
    %2327 = vmatpush.bf16.msra.mxu0 %v2161
    %2328 = vmatmul.bf16.gmra.mxu0 %v1932
    %v2329 = vpop.f32.mrf.mxu0
    %v2330 = vadd.f32 %v2317, %v2329
    %v2331 = vpop.f32.mrf.mxu0
    %2332 = vdwg.mxu0
    %2333 = vmatpush.bf16.msra.mxu0 %v2158
    %2334 = vmatpush.bf16.msra.mxu0 %v2154
    %2335 = vmatpush.bf16.msra.mxu0 %v2150
    %2336 = vmatpush.bf16.msra.mxu0 %v2146
    %2337 = vmatpush.bf16.msra.mxu0 %v2142
    %2338 = vmatpush.bf16.msra.mxu0 %v2138
    %2339 = vmatpush.bf16.msra.mxu0 %v2134
    %2340 = vmatpush.bf16.msra.mxu0 %v2130
    %2341 = vmatmul.bf16.gmra.mxu0 %v1931
    %v2342 = vpop.f32.mrf.mxu0
    %v2343 = vadd.f32 %v1918, %v2342
    %v2344 = vpop.f32.mrf.mxu0
    %2345 = vdwg.mxu0
    %2346 = vmatpush.bf16.msra.mxu0 %v2190
    %2347 = vmatpush.bf16.msra.mxu0 %v2186
    %2348 = vmatpush.bf16.msra.mxu0 %v2182
    %2349 = vmatpush.bf16.msra.mxu0 %v2178
    %2350 = vmatpush.bf16.msra.mxu0 %v2174
    %2351 = vmatpush.bf16.msra.mxu0 %v2170
    %2352 = vmatpush.bf16.msra.mxu0 %v2166
    %2353 = vmatpush.bf16.msra.mxu0 %v2162
    %2354 = vmatmul.bf16.gmra.mxu0 %v1932
    %v2355 = vpop.f32.mrf.mxu0
    %v2356 = vadd.f32 %v2343, %v2355
    %v2357 = vpop.f32.mrf.mxu0
    %2358 = vdwg.mxu0
    %v2359 = vld [vmem:[#allocation13 + $0x10] sm:$0xff]
    %v2360 = vld [vmem:[#allocation13 + $0x30] sm:$0xff]
    %v2361 = vld [vmem:[#allocation13 + $0x50] sm:$0xff]
    %v2362 = vld [vmem:[#allocation13 + $0x70] sm:$0xff]
    %v2363 = vld [vmem:[#allocation13 + $0x90] sm:$0xff]
    %v2364 = vld [vmem:[#allocation13 + $0xb0] sm:$0xff]
    %v2365 = vld [vmem:[#allocation13 + $0xd0] sm:$0xff]
    %v2366 = vld [vmem:[#allocation13 + $0xf0] sm:$0xff]
    %v2367 = vld [vmem:[#allocation13 + $0x110] sm:$0xff]
    %v2368 = vld [vmem:[#allocation13 + $0x130] sm:$0xff]
    %v2369 = vld [vmem:[#allocation13 + $0x150] sm:$0xff]
    %v2370 = vld [vmem:[#allocation13 + $0x170] sm:$0xff]
    %v2371 = vld [vmem:[#allocation13 + $0x190] sm:$0xff]
    %v2372 = vld [vmem:[#allocation13 + $0x1b0] sm:$0xff]
    %v2373 = vld [vmem:[#allocation13 + $0x1d0] sm:$0xff]
    %v2374 = vld [vmem:[#allocation13 + $0x1f0] sm:$0xff]
    %v2375 = vld [vmem:[%s10 + $0x4] sm:$0x3]
    %v2377 = vperm.slane %v2375, 0
    %v2378 = vperm.slane %v2375, 1
    %v2397 = vunpack.c.l.b16 %v2359
    %v2398 = vunpack.c.h.b16 %v2359
    %v2399 = vunpack.c.l.b16 %v2360
    %v2400 = vunpack.c.h.b16 %v2360
    %v2401 = vunpack.c.l.b16 %v2361
    %v2402 = vunpack.c.h.b16 %v2361
    %v2403 = vunpack.c.l.b16 %v2362
    %v2404 = vunpack.c.h.b16 %v2362
    %v2405 = vunpack.c.l.b16 %v2363
    %v2406 = vunpack.c.h.b16 %v2363
    %v2407 = vunpack.c.l.b16 %v2364
    %v2408 = vunpack.c.h.b16 %v2364
    %v2409 = vunpack.c.l.b16 %v2365
    %v2410 = vunpack.c.h.b16 %v2365
    %v2411 = vunpack.c.l.b16 %v2366
    %v2412 = vunpack.c.h.b16 %v2366
    %v2413 = vunpack.c.l.b16 %v2367
    %v2414 = vunpack.c.h.b16 %v2367
    %v2415 = vunpack.c.l.b16 %v2368
    %v2416 = vunpack.c.h.b16 %v2368
    %v2417 = vunpack.c.l.b16 %v2369
    %v2418 = vunpack.c.h.b16 %v2369
    %v2419 = vunpack.c.l.b16 %v2370
    %v2420 = vunpack.c.h.b16 %v2370
    %v2421 = vunpack.c.l.b16 %v2371
    %v2422 = vunpack.c.h.b16 %v2371
    %v2423 = vunpack.c.l.b16 %v2372
    %v2424 = vunpack.c.h.b16 %v2372
    %v2425 = vunpack.c.l.b16 %v2373
    %v2426 = vunpack.c.h.b16 %v2373
    %v2427 = vunpack.c.l.b16 %v2374
    %v2428 = vunpack.c.h.b16 %v2374
    %v2429 = vpack.c.b16 %v2399, %v2397
    %v2430 = vpack.c.b16 %v2400, %v2398
    %v2431 = vpack.c.b16 %v2403, %v2401
    %v2432 = vpack.c.b16 %v2404, %v2402
    %v2433 = vpack.c.b16 %v2407, %v2405
    %v2434 = vpack.c.b16 %v2408, %v2406
    %v2435 = vpack.c.b16 %v2411, %v2409
    %v2436 = vpack.c.b16 %v2412, %v2410
    %v2437 = vpack.c.b16 %v2415, %v2413
    %v2438 = vpack.c.b16 %v2416, %v2414
    %v2439 = vpack.c.b16 %v2419, %v2417
    %v2440 = vpack.c.b16 %v2420, %v2418
    %v2441 = vpack.c.b16 %v2423, %v2421
    %v2442 = vpack.c.b16 %v2424, %v2422
    %v2443 = vpack.c.b16 %v2427, %v2425
    %v2444 = vpack.c.b16 %v2428, %v2426
    %2461 = vmatpush.bf16.msra.mxu0 %v2443
    %2462 = vmatpush.bf16.msra.mxu0 %v2441
    %2463 = vmatpush.bf16.msra.mxu0 %v2439
    %2464 = vmatpush.bf16.msra.mxu0 %v2437
    %2465 = vmatpush.bf16.msra.mxu0 %v2435
    %2466 = vmatpush.bf16.msra.mxu0 %v2433
    %2467 = vmatpush.bf16.msra.mxu0 %v2431
    %2468 = vmatpush.bf16.msra.mxu0 %v2429
    %2469 = vmatmul.bf16.gmra.mxu0 %v764
    %v2470 = vpop.f32.mrf.mxu0
    %v2471 = vadd.f32 %v2377, %v2470
    %v2472 = vpop.f32.mrf.mxu0
    %v2473 = vadd.f32 %v2377, %v2472
    %2474 = vmatmul.bf16.gmra.mxu0 %v765
    %v2475 = vpop.f32.mrf.mxu0
    %v2476 = vadd.f32 %v2377, %v2475
    %v2477 = vpop.f32.mrf.mxu0
    %v2478 = vadd.f32 %v2377, %v2477
    %2479 = vmatmul.bf16.gmra.mxu0 %v766
    %v2480 = vpop.f32.mrf.mxu0
    %v2481 = vadd.f32 %v2377, %v2480
    %v2482 = vpop.f32.mrf.mxu0
    %v2483 = vadd.f32 %v2377, %v2482
    %2484 = vmatmul.bf16.gmra.mxu0 %v767
    %v2485 = vpop.f32.mrf.mxu0
    %v2486 = vadd.f32 %v2377, %v2485
    %v2487 = vpop.f32.mrf.mxu0
    %v2488 = vadd.f32 %v2377, %v2487
    %2489 = vmatmul.bf16.gmra.mxu0 %v768
    %v2490 = vpop.f32.mrf.mxu0
    %v2491 = vadd.f32 %v2377, %v2490
    %v2492 = vpop.f32.mrf.mxu0
    %v2493 = vadd.f32 %v2377, %v2492
    %2494 = vmatmul.bf16.gmra.mxu0 %v769
    %v2495 = vpop.f32.mrf.mxu0
    %v2496 = vadd.f32 %v2377, %v2495
    %v2497 = vpop.f32.mrf.mxu0
    %v2498 = vadd.f32 %v2377, %v2497
    %2499 = vmatmul.bf16.gmra.mxu0 %v770
    %v2500 = vpop.f32.mrf.mxu0
    %v2501 = vadd.f32 %v2377, %v2500
    %v2502 = vpop.f32.mrf.mxu0
    %v2503 = vadd.f32 %v2377, %v2502
    %2504 = vmatmul.bf16.gmra.mxu0 %v771
    %v2505 = vpop.f32.mrf.mxu0
    %v2506 = vadd.f32 %v2377, %v2505
    %v2507 = vpop.f32.mrf.mxu0
    %v2508 = vadd.f32 %v2377, %v2507
    %2509 = vdwg.mxu0
    %2510 = vmatpush.bf16.msra.mxu0 %v2444
    %2511 = vmatpush.bf16.msra.mxu0 %v2442
    %2512 = vmatpush.bf16.msra.mxu0 %v2440
    %2513 = vmatpush.bf16.msra.mxu0 %v2438
    %2514 = vmatpush.bf16.msra.mxu0 %v2436
    %2515 = vmatpush.bf16.msra.mxu0 %v2434
    %2516 = vmatpush.bf16.msra.mxu0 %v2432
    %2517 = vmatpush.bf16.msra.mxu0 %v2430
    %2518 = vmatmul.bf16.gmra.mxu0 %v764
    %v2519 = vpop.f32.mrf.mxu0
    %v2520 = vadd.f32 %v2378, %v2519
    %v2521 = vpop.f32.mrf.mxu0
    %v2522 = vadd.f32 %v2378, %v2521
    %2523 = vmatmul.bf16.gmra.mxu0 %v765
    %v2524 = vpop.f32.mrf.mxu0
    %v2525 = vadd.f32 %v2378, %v2524
    %v2526 = vpop.f32.mrf.mxu0
    %v2527 = vadd.f32 %v2378, %v2526
    %2528 = vmatmul.bf16.gmra.mxu0 %v766
    %v2529 = vpop.f32.mrf.mxu0
    %v2530 = vadd.f32 %v2378, %v2529
    %v2531 = vpop.f32.mrf.mxu0
    %v2532 = vadd.f32 %v2378, %v2531
    %2533 = vmatmul.bf16.gmra.mxu0 %v767
    %v2534 = vpop.f32.mrf.mxu0
    %v2535 = vadd.f32 %v2378, %v2534
    %v2536 = vpop.f32.mrf.mxu0
    %v2537 = vadd.f32 %v2378, %v2536
    %2538 = vmatmul.bf16.gmra.mxu0 %v768
    %v2539 = vpop.f32.mrf.mxu0
    %v2540 = vadd.f32 %v2378, %v2539
    %v2541 = vpop.f32.mrf.mxu0
    %v2542 = vadd.f32 %v2378, %v2541
    %2543 = vmatmul.bf16.gmra.mxu0 %v769
    %v2544 = vpop.f32.mrf.mxu0
    %v2545 = vadd.f32 %v2378, %v2544
    %v2546 = vpop.f32.mrf.mxu0
    %v2547 = vadd.f32 %v2378, %v2546
    %2548 = vmatmul.bf16.gmra.mxu0 %v770
    %v2549 = vpop.f32.mrf.mxu0
    %v2550 = vadd.f32 %v2378, %v2549
    %v2551 = vpop.f32.mrf.mxu0
    %v2552 = vadd.f32 %v2378, %v2551
    %2553 = vmatmul.bf16.gmra.mxu0 %v771
    %v2554 = vpop.f32.mrf.mxu0
    %v2555 = vadd.f32 %v2378, %v2554
    %v2556 = vpop.f32.mrf.mxu0
    %v2557 = vadd.f32 %v2378, %v2556
    %2558 = vdwg.mxu0
    %v2559 = vmax.f32 %v2471, 0.0
    %v2560 = vmax.f32 %v2520, 0.0
    %v2561 = vmax.f32 %v2473, 0.0
    %v2562 = vmax.f32 %v2522, 0.0
    %v2563 = vmax.f32 %v2476, 0.0
    %v2564 = vmax.f32 %v2525, 0.0
    %v2565 = vmax.f32 %v2478, 0.0
    %v2566 = vmax.f32 %v2527, 0.0
    %v2567 = vmax.f32 %v2481, 0.0
    %v2568 = vmax.f32 %v2530, 0.0
    %v2569 = vmax.f32 %v2483, 0.0
    %v2570 = vmax.f32 %v2532, 0.0
    %v2571 = vmax.f32 %v2486, 0.0
    %v2572 = vmax.f32 %v2535, 0.0
    %v2573 = vmax.f32 %v2488, 0.0
    %v2574 = vmax.f32 %v2537, 0.0
    %v2575 = vmax.f32 %v2491, 0.0
    %v2576 = vmax.f32 %v2540, 0.0
    %v2577 = vmax.f32 %v2493, 0.0
    %v2578 = vmax.f32 %v2542, 0.0
    %v2579 = vmax.f32 %v2496, 0.0
    %v2580 = vmax.f32 %v2545, 0.0
    %v2581 = vmax.f32 %v2498, 0.0
    %v2582 = vmax.f32 %v2547, 0.0
    %v2583 = vmax.f32 %v2501, 0.0
    %v2584 = vmax.f32 %v2550, 0.0
    %v2585 = vmax.f32 %v2503, 0.0
    %v2586 = vmax.f32 %v2552, 0.0
    %v2587 = vmax.f32 %v2506, 0.0
    %v2588 = vmax.f32 %v2555, 0.0
    %v2589 = vmax.f32 %v2508, 0.0
    %v2590 = vmax.f32 %v2557, 0.0
    %v2591 = vmax.f32 %v2559, %v2561
    %v2592 = vmax.f32 %v2591, %v2563
    %v2593 = vmax.f32 %v2592, %v2565
    %v2594 = vmax.f32 %v2593, %v2567
    %v2595 = vmax.f32 %v2594, %v2569
    %v2596 = vmax.f32 %v2595, %v2571
    %v2597 = vmax.f32 %v2596, %v2573
    %v2598 = vrot.slane %v2597, 4
    %v2599 = vmax.f32 %v2597, %v2598
    %v2600 = vrot.slane %v2599, 2
    %v2601 = vmax.f32 %v2599, %v2600
    %v2602 = vrot.slane %v2601, 1
    %v2603 = vmax.f32 %v2601, %v2602
    %v2604 = vmax.f32 %v2560, %v2562
    %v2605 = vmax.f32 %v2604, %v2564
    %v2606 = vmax.f32 %v2605, %v2566
    %v2607 = vmax.f32 %v2606, %v2568
    %v2608 = vmax.f32 %v2607, %v2570
    %v2609 = vmax.f32 %v2608, %v2572
    %v2610 = vmax.f32 %v2609, %v2574
    %v2611 = vrot.slane %v2610, 4
    %v2612 = vmax.f32 %v2610, %v2611
    %v2613 = vrot.slane %v2612, 2
    %v2614 = vmax.f32 %v2612, %v2613
    %v2615 = vrot.slane %v2614, 1
    %v2616 = vmax.f32 %v2614, %v2615
    %v2617 = vmax.f32 %v2575, %v2577
    %v2618 = vmax.f32 %v2617, %v2579
    %v2619 = vmax.f32 %v2618, %v2581
    %v2620 = vmax.f32 %v2619, %v2583
    %v2621 = vmax.f32 %v2620, %v2585
    %v2622 = vmax.f32 %v2621, %v2587
    %v2623 = vmax.f32 %v2622, %v2589
    %v2624 = vrot.slane %v2623, 4
    %v2625 = vmax.f32 %v2623, %v2624
    %v2626 = vrot.slane %v2625, 2
    %v2627 = vmax.f32 %v2625, %v2626
    %v2628 = vrot.slane %v2627, 1
    %v2629 = vmax.f32 %v2627, %v2628
    %v2630 = vmax.f32 %v2576, %v2578
    %v2631 = vmax.f32 %v2630, %v2580
    %v2632 = vmax.f32 %v2631, %v2582
    %v2633 = vmax.f32 %v2632, %v2584
    %v2634 = vmax.f32 %v2633, %v2586
    %v2635 = vmax.f32 %v2634, %v2588
    %v2636 = vmax.f32 %v2635, %v2590
    %v2637 = vrot.slane %v2636, 4
    %v2638 = vmax.f32 %v2636, %v2637
    %v2639 = vrot.slane %v2638, 2
    %v2640 = vmax.f32 %v2638, %v2639
    %v2641 = vrot.slane %v2640, 1
    %v2642 = vmax.f32 %v2640, %v2641
    %v2643 = vpack.c.bf16 %v2603, %v2603
    %v2644 = vpack.c.bf16 %v2616, %v2616
    %v2645 = vpack.c.bf16 %v2629, %v2629
    %v2646 = vpack.c.bf16 %v2642, %v2642
    %s2647 = sshll.u32 %s1061, 4
    %2648 = dma.done %s146, %s2647
    %v2649 = vld [vmem:[#allocation2 + $0x400] sm:$0xff]
    %v2650 = vld [vmem:[#allocation2 + $0x408] sm:$0xff]
    %v2651 = vld [vmem:[#allocation2 + $0x410] sm:$0xff]
    %v2652 = vld [vmem:[#allocation2 + $0x418] sm:$0xff]
    %v2653 = vld [vmem:[#allocation2 + $0x420] sm:$0xff]
    %v2654 = vld [vmem:[#allocation2 + $0x428] sm:$0xff]
    %v2655 = vld [vmem:[#allocation2 + $0x430] sm:$0xff]
    %v2656 = vld [vmem:[#allocation2 + $0x438] sm:$0xff]
    %v2657 = vld [vmem:[#allocation2 + $0x440] sm:$0xff]
    %v2658 = vld [vmem:[#allocation2 + $0x448] sm:$0xff]
    %v2659 = vld [vmem:[#allocation2 + $0x450] sm:$0xff]
    %v2660 = vld [vmem:[#allocation2 + $0x458] sm:$0xff]
    %v2661 = vld [vmem:[#allocation2 + $0x460] sm:$0xff]
    %v2662 = vld [vmem:[#allocation2 + $0x468] sm:$0xff]
    %v2663 = vld [vmem:[#allocation2 + $0x470] sm:$0xff]
    %v2664 = vld [vmem:[#allocation2 + $0x478] sm:$0xff]
    %v2665 = vld [vmem:[#allocation2 + $0x480] sm:$0xff]
    %v2666 = vld [vmem:[#allocation2 + $0x488] sm:$0xff]
    %v2667 = vld [vmem:[#allocation2 + $0x490] sm:$0xff]
    %v2668 = vld [vmem:[#allocation2 + $0x498] sm:$0xff]
    %v2669 = vld [vmem:[#allocation2 + $0x4a0] sm:$0xff]
    %v2670 = vld [vmem:[#allocation2 + $0x4a8] sm:$0xff]
    %v2671 = vld [vmem:[#allocation2 + $0x4b0] sm:$0xff]
    %v2672 = vld [vmem:[#allocation2 + $0x4b8] sm:$0xff]
    %v2673 = vld [vmem:[#allocation2 + $0x4c0] sm:$0xff]
    %v2674 = vld [vmem:[#allocation2 + $0x4c8] sm:$0xff]
    %v2675 = vld [vmem:[#allocation2 + $0x4d0] sm:$0xff]
    %v2676 = vld [vmem:[#allocation2 + $0x4d8] sm:$0xff]
    %v2677 = vld [vmem:[#allocation2 + $0x4e0] sm:$0xff]
    %v2678 = vld [vmem:[#allocation2 + $0x4e8] sm:$0xff]
    %v2679 = vld [vmem:[#allocation2 + $0x4f0] sm:$0xff]
    %v2680 = vld [vmem:[#allocation2 + $0x4f8] sm:$0xff]
    %v2681 = vld [vmem:[#allocation2 + $0x500] sm:$0xff]
    %v2682 = vld [vmem:[#allocation2 + $0x508] sm:$0xff]
    %v2683 = vld [vmem:[#allocation2 + $0x510] sm:$0xff]
    %v2684 = vld [vmem:[#allocation2 + $0x518] sm:$0xff]
    %v2685 = vld [vmem:[#allocation2 + $0x520] sm:$0xff]
    %v2686 = vld [vmem:[#allocation2 + $0x528] sm:$0xff]
    %v2687 = vld [vmem:[#allocation2 + $0x530] sm:$0xff]
    %v2688 = vld [vmem:[#allocation2 + $0x538] sm:$0xff]
    %v2689 = vld [vmem:[#allocation2 + $0x540] sm:$0xff]
    %v2690 = vld [vmem:[#allocation2 + $0x548] sm:$0xff]
    %v2691 = vld [vmem:[#allocation2 + $0x550] sm:$0xff]
    %v2692 = vld [vmem:[#allocation2 + $0x558] sm:$0xff]
    %v2693 = vld [vmem:[#allocation2 + $0x560] sm:$0xff]
    %v2694 = vld [vmem:[#allocation2 + $0x568] sm:$0xff]
    %v2695 = vld [vmem:[#allocation2 + $0x570] sm:$0xff]
    %v2696 = vld [vmem:[#allocation2 + $0x578] sm:$0xff]
    %v2697 = vld [vmem:[#allocation2 + $0x580] sm:$0xff]
    %v2698 = vld [vmem:[#allocation2 + $0x588] sm:$0xff]
    %v2699 = vld [vmem:[#allocation2 + $0x590] sm:$0xff]
    %v2700 = vld [vmem:[#allocation2 + $0x598] sm:$0xff]
    %v2701 = vld [vmem:[#allocation2 + $0x5a0] sm:$0xff]
    %v2702 = vld [vmem:[#allocation2 + $0x5a8] sm:$0xff]
    %v2703 = vld [vmem:[#allocation2 + $0x5b0] sm:$0xff]
    %v2704 = vld [vmem:[#allocation2 + $0x5b8] sm:$0xff]
    %v2705 = vld [vmem:[#allocation2 + $0x5c0] sm:$0xff]
    %v2706 = vld [vmem:[#allocation2 + $0x5c8] sm:$0xff]
    %v2707 = vld [vmem:[#allocation2 + $0x5d0] sm:$0xff]
    %v2708 = vld [vmem:[#allocation2 + $0x5d8] sm:$0xff]
    %v2709 = vld [vmem:[#allocation2 + $0x5e0] sm:$0xff]
    %v2710 = vld [vmem:[#allocation2 + $0x5e8] sm:$0xff]
    %v2711 = vld [vmem:[#allocation2 + $0x5f0] sm:$0xff]
    %v2712 = vld [vmem:[#allocation2 + $0x5f8] sm:$0xff]
    %v2717 = vunpack.c.l.b16 %v2643
    %v2718 = vunpack.c.l.b16 %v2644
    %v2719 = vunpack.c.l.b16 %v2645
    %v2720 = vunpack.c.l.b16 %v2646
    %v2721 = vsel %vm1490, %v2719, %v2717
    %v2722 = vsel %vm1490, %v2720, %v2718
    %v2723 = vpack.c.b16 %v2721, %v2721
    %v2724 = vpack.c.b16 %v2722, %v2722
    %v2791 = vunpack.c.l.b16 %v2649
    %v2792 = vunpack.c.h.b16 %v2649
    %v2793 = vunpack.c.l.b16 %v2650
    %v2794 = vunpack.c.h.b16 %v2650
    %v2795 = vunpack.c.l.b16 %v2651
    %v2796 = vunpack.c.h.b16 %v2651
    %v2797 = vunpack.c.l.b16 %v2652
    %v2798 = vunpack.c.h.b16 %v2652
    %v2799 = vunpack.c.l.b16 %v2653
    %v2800 = vunpack.c.h.b16 %v2653
    %v2801 = vunpack.c.l.b16 %v2654
    %v2802 = vunpack.c.h.b16 %v2654
    %v2803 = vunpack.c.l.b16 %v2655
    %v2804 = vunpack.c.h.b16 %v2655
    %v2805 = vunpack.c.l.b16 %v2656
    %v2806 = vunpack.c.h.b16 %v2656
    %v2807 = vunpack.c.l.b16 %v2657
    %v2808 = vunpack.c.h.b16 %v2657
    %v2809 = vunpack.c.l.b16 %v2658
    %v2810 = vunpack.c.h.b16 %v2658
    %v2811 = vunpack.c.l.b16 %v2659
    %v2812 = vunpack.c.h.b16 %v2659
    %v2813 = vunpack.c.l.b16 %v2660
    %v2814 = vunpack.c.h.b16 %v2660
    %v2815 = vunpack.c.l.b16 %v2661
    %v2816 = vunpack.c.h.b16 %v2661
    %v2817 = vunpack.c.l.b16 %v2662
    %v2818 = vunpack.c.h.b16 %v2662
    %v2819 = vunpack.c.l.b16 %v2663
    %v2820 = vunpack.c.h.b16 %v2663
    %v2821 = vunpack.c.l.b16 %v2664
    %v2822 = vunpack.c.h.b16 %v2664
    %v2823 = vunpack.c.l.b16 %v2665
    %v2824 = vunpack.c.h.b16 %v2665
    %v2825 = vunpack.c.l.b16 %v2666
    %v2826 = vunpack.c.h.b16 %v2666
    %v2827 = vunpack.c.l.b16 %v2667
    %v2828 = vunpack.c.h.b16 %v2667
    %v2829 = vunpack.c.l.b16 %v2668
    %v2830 = vunpack.c.h.b16 %v2668
    %v2831 = vunpack.c.l.b16 %v2669
    %v2832 = vunpack.c.h.b16 %v2669
    %v2833 = vunpack.c.l.b16 %v2670
    %v2834 = vunpack.c.h.b16 %v2670
    %v2835 = vunpack.c.l.b16 %v2671
    %v2836 = vunpack.c.h.b16 %v2671
    %v2837 = vunpack.c.l.b16 %v2672
    %v2838 = vunpack.c.h.b16 %v2672
    %v2839 = vunpack.c.l.b16 %v2673
    %v2840 = vunpack.c.h.b16 %v2673
    %v2841 = vunpack.c.l.b16 %v2674
    %v2842 = vunpack.c.h.b16 %v2674
    %v2843 = vunpack.c.l.b16 %v2675
    %v2844 = vunpack.c.h.b16 %v2675
    %v2845 = vunpack.c.l.b16 %v2676
    %v2846 = vunpack.c.h.b16 %v2676
    %v2847 = vunpack.c.l.b16 %v2677
    %v2848 = vunpack.c.h.b16 %v2677
    %v2849 = vunpack.c.l.b16 %v2678
    %v2850 = vunpack.c.h.b16 %v2678
    %v2851 = vunpack.c.l.b16 %v2679
    %v2852 = vunpack.c.h.b16 %v2679
    %v2853 = vunpack.c.l.b16 %v2680
    %v2854 = vunpack.c.h.b16 %v2680
    %v2855 = vunpack.c.l.b16 %v2681
    %v2856 = vunpack.c.h.b16 %v2681
    %v2857 = vunpack.c.l.b16 %v2682
    %v2858 = vunpack.c.h.b16 %v2682
    %v2859 = vunpack.c.l.b16 %v2683
    %v2860 = vunpack.c.h.b16 %v2683
    %v2861 = vunpack.c.l.b16 %v2684
    %v2862 = vunpack.c.h.b16 %v2684
    %v2863 = vunpack.c.l.b16 %v2685
    %v2864 = vunpack.c.h.b16 %v2685
    %v2865 = vunpack.c.l.b16 %v2686
    %v2866 = vunpack.c.h.b16 %v2686
    %v2867 = vunpack.c.l.b16 %v2687
    %v2868 = vunpack.c.h.b16 %v2687
    %v2869 = vunpack.c.l.b16 %v2688
    %v2870 = vunpack.c.h.b16 %v2688
    %v2871 = vunpack.c.l.b16 %v2689
    %v2872 = vunpack.c.h.b16 %v2689
    %v2873 = vunpack.c.l.b16 %v2690
    %v2874 = vunpack.c.h.b16 %v2690
    %v2875 = vunpack.c.l.b16 %v2691
    %v2876 = vunpack.c.h.b16 %v2691
    %v2877 = vunpack.c.l.b16 %v2692
    %v2878 = vunpack.c.h.b16 %v2692
    %v2879 = vunpack.c.l.b16 %v2693
    %v2880 = vunpack.c.h.b16 %v2693
    %v2881 = vunpack.c.l.b16 %v2694
    %v2882 = vunpack.c.h.b16 %v2694
    %v2883 = vunpack.c.l.b16 %v2695
    %v2884 = vunpack.c.h.b16 %v2695
    %v2885 = vunpack.c.l.b16 %v2696
    %v2886 = vunpack.c.h.b16 %v2696
    %v2887 = vunpack.c.l.b16 %v2697
    %v2888 = vunpack.c.h.b16 %v2697
    %v2889 = vunpack.c.l.b16 %v2698
    %v2890 = vunpack.c.h.b16 %v2698
    %v2891 = vunpack.c.l.b16 %v2699
    %v2892 = vunpack.c.h.b16 %v2699
    %v2893 = vunpack.c.l.b16 %v2700
    %v2894 = vunpack.c.h.b16 %v2700
    %v2895 = vunpack.c.l.b16 %v2701
    %v2896 = vunpack.c.h.b16 %v2701
    %v2897 = vunpack.c.l.b16 %v2702
    %v2898 = vunpack.c.h.b16 %v2702
    %v2899 = vunpack.c.l.b16 %v2703
    %v2900 = vunpack.c.h.b16 %v2703
    %v2901 = vunpack.c.l.b16 %v2704
    %v2902 = vunpack.c.h.b16 %v2704
    %v2903 = vunpack.c.l.b16 %v2705
    %v2904 = vunpack.c.h.b16 %v2705
    %v2905 = vunpack.c.l.b16 %v2706
    %v2906 = vunpack.c.h.b16 %v2706
    %v2907 = vunpack.c.l.b16 %v2707
    %v2908 = vunpack.c.h.b16 %v2707
    %v2909 = vunpack.c.l.b16 %v2708
    %v2910 = vunpack.c.h.b16 %v2708
    %v2911 = vunpack.c.l.b16 %v2709
    %v2912 = vunpack.c.h.b16 %v2709
    %v2913 = vunpack.c.l.b16 %v2710
    %v2914 = vunpack.c.h.b16 %v2710
    %v2915 = vunpack.c.l.b16 %v2711
    %v2916 = vunpack.c.h.b16 %v2711
    %v2917 = vunpack.c.l.b16 %v2712
    %v2918 = vunpack.c.h.b16 %v2712
    %v2919 = vpack.c.b16 %v2795, %v2791
    %v2920 = vpack.c.b16 %v2796, %v2792
    %v2921 = vpack.c.b16 %v2797, %v2793
    %v2922 = vpack.c.b16 %v2798, %v2794
    %v2923 = vpack.c.b16 %v2803, %v2799
    %v2924 = vpack.c.b16 %v2804, %v2800
    %v2925 = vpack.c.b16 %v2805, %v2801
    %v2926 = vpack.c.b16 %v2806, %v2802
    %v2927 = vpack.c.b16 %v2811, %v2807
    %v2928 = vpack.c.b16 %v2812, %v2808
    %v2929 = vpack.c.b16 %v2813, %v2809
    %v2930 = vpack.c.b16 %v2814, %v2810
    %v2931 = vpack.c.b16 %v2819, %v2815
    %v2932 = vpack.c.b16 %v2820, %v2816
    %v2933 = vpack.c.b16 %v2821, %v2817
    %v2934 = vpack.c.b16 %v2822, %v2818
    %v2935 = vpack.c.b16 %v2827, %v2823
    %v2936 = vpack.c.b16 %v2828, %v2824
    %v2937 = vpack.c.b16 %v2829, %v2825
    %v2938 = vpack.c.b16 %v2830, %v2826
    %v2939 = vpack.c.b16 %v2835, %v2831
    %v2940 = vpack.c.b16 %v2836, %v2832
    %v2941 = vpack.c.b16 %v2837, %v2833
    %v2942 = vpack.c.b16 %v2838, %v2834
    %v2943 = vpack.c.b16 %v2843, %v2839
    %v2944 = vpack.c.b16 %v2844, %v2840
    %v2945 = vpack.c.b16 %v2845, %v2841
    %v2946 = vpack.c.b16 %v2846, %v2842
    %v2947 = vpack.c.b16 %v2851, %v2847
    %v2948 = vpack.c.b16 %v2852, %v2848
    %v2949 = vpack.c.b16 %v2853, %v2849
    %v2950 = vpack.c.b16 %v2854, %v2850
    %v2951 = vpack.c.b16 %v2859, %v2855
    %v2952 = vpack.c.b16 %v2860, %v2856
    %v2953 = vpack.c.b16 %v2861, %v2857
    %v2954 = vpack.c.b16 %v2862, %v2858
    %v2955 = vpack.c.b16 %v2867, %v2863
    %v2956 = vpack.c.b16 %v2868, %v2864
    %v2957 = vpack.c.b16 %v2869, %v2865
    %v2958 = vpack.c.b16 %v2870, %v2866
    %v2959 = vpack.c.b16 %v2875, %v2871
    %v2960 = vpack.c.b16 %v2876, %v2872
    %v2961 = vpack.c.b16 %v2877, %v2873
    %v2962 = vpack.c.b16 %v2878, %v2874
    %v2963 = vpack.c.b16 %v2883, %v2879
    %v2964 = vpack.c.b16 %v2884, %v2880
    %v2965 = vpack.c.b16 %v2885, %v2881
    %v2966 = vpack.c.b16 %v2886, %v2882
    %v2967 = vpack.c.b16 %v2891, %v2887
    %v2968 = vpack.c.b16 %v2892, %v2888
    %v2969 = vpack.c.b16 %v2893, %v2889
    %v2970 = vpack.c.b16 %v2894, %v2890
    %v2971 = vpack.c.b16 %v2899, %v2895
    %v2972 = vpack.c.b16 %v2900, %v2896
    %v2973 = vpack.c.b16 %v2901, %v2897
    %v2974 = vpack.c.b16 %v2902, %v2898
    %v2975 = vpack.c.b16 %v2907, %v2903
    %v2976 = vpack.c.b16 %v2908, %v2904
    %v2977 = vpack.c.b16 %v2909, %v2905
    %v2978 = vpack.c.b16 %v2910, %v2906
    %v2979 = vpack.c.b16 %v2915, %v2911
    %v2980 = vpack.c.b16 %v2916, %v2912
    %v2981 = vpack.c.b16 %v2917, %v2913
    %v2982 = vpack.c.b16 %v2918, %v2914
    %3047 = vmatpush.bf16.msra.mxu0 %v2947
    %3048 = vmatpush.bf16.msra.mxu0 %v2943
    %3049 = vmatpush.bf16.msra.mxu0 %v2939
    %3050 = vmatpush.bf16.msra.mxu0 %v2935
    %3051 = vmatpush.bf16.msra.mxu0 %v2931
    %3052 = vmatpush.bf16.msra.mxu0 %v2927
    %3053 = vmatpush.bf16.msra.mxu0 %v2923
    %3054 = vmatpush.bf16.msra.mxu0 %v2919
    %3055 = vmatmul.bf16.gmra.mxu0 %v2723
    %v3056 = vpop.f32.mrf.mxu0
    %v3057 = vadd.f32 0.0, %v3056
    %v3058 = vpop.f32.mrf.mxu0
    %3059 = vdwg.mxu0
    %3060 = vmatpush.bf16.msra.mxu0 %v2979
    %3061 = vmatpush.bf16.msra.mxu0 %v2975
    %3062 = vmatpush.bf16.msra.mxu0 %v2971
    %3063 = vmatpush.bf16.msra.mxu0 %v2967
    %3064 = vmatpush.bf16.msra.mxu0 %v2963
    %3065 = vmatpush.bf16.msra.mxu0 %v2959
    %3066 = vmatpush.bf16.msra.mxu0 %v2955
    %3067 = vmatpush.bf16.msra.mxu0 %v2951
    %3068 = vmatmul.bf16.gmra.mxu0 %v2724
    %v3069 = vpop.f32.mrf.mxu0
    %v3070 = vadd.f32 %v3057, %v3069
    %v3071 = vpop.f32.mrf.mxu0
    %3072 = vdwg.mxu0
    %3073 = vmatpush.bf16.msra.mxu0 %v2948
    %3074 = vmatpush.bf16.msra.mxu0 %v2944
    %3075 = vmatpush.bf16.msra.mxu0 %v2940
    %3076 = vmatpush.bf16.msra.mxu0 %v2936
    %3077 = vmatpush.bf16.msra.mxu0 %v2932
    %3078 = vmatpush.bf16.msra.mxu0 %v2928
    %3079 = vmatpush.bf16.msra.mxu0 %v2924
    %3080 = vmatpush.bf16.msra.mxu0 %v2920
    %3081 = vmatmul.bf16.gmra.mxu0 %v2723
    %v3082 = vpop.f32.mrf.mxu0
    %v3083 = vadd.f32 0.0, %v3082
    %v3084 = vpop.f32.mrf.mxu0
    %3085 = vdwg.mxu0
    %3086 = vmatpush.bf16.msra.mxu0 %v2980
    %3087 = vmatpush.bf16.msra.mxu0 %v2976
    %3088 = vmatpush.bf16.msra.mxu0 %v2972
    %3089 = vmatpush.bf16.msra.mxu0 %v2968
    %3090 = vmatpush.bf16.msra.mxu0 %v2964
    %3091 = vmatpush.bf16.msra.mxu0 %v2960
    %3092 = vmatpush.bf16.msra.mxu0 %v2956
    %3093 = vmatpush.bf16.msra.mxu0 %v2952
    %3094 = vmatmul.bf16.gmra.mxu0 %v2724
    %v3095 = vpop.f32.mrf.mxu0
    %v3096 = vadd.f32 %v3083, %v3095
    %v3097 = vpop.f32.mrf.mxu0
    %3098 = vdwg.mxu0
    %3099 = vmatpush.bf16.msra.mxu0 %v2949
    %3100 = vmatpush.bf16.msra.mxu0 %v2945
    %3101 = vmatpush.bf16.msra.mxu0 %v2941
    %3102 = vmatpush.bf16.msra.mxu0 %v2937
    %3103 = vmatpush.bf16.msra.mxu0 %v2933
    %3104 = vmatpush.bf16.msra.mxu0 %v2929
    %3105 = vmatpush.bf16.msra.mxu0 %v2925
    %3106 = vmatpush.bf16.msra.mxu0 %v2921
    %3107 = vmatmul.bf16.gmra.mxu0 %v2723
    %v3108 = vpop.f32.mrf.mxu0
    %v3109 = vadd.f32 0.0, %v3108
    %v3110 = vpop.f32.mrf.mxu0
    %3111 = vdwg.mxu0
    %3112 = vmatpush.bf16.msra.mxu0 %v2981
    %3113 = vmatpush.bf16.msra.mxu0 %v2977
    %3114 = vmatpush.bf16.msra.mxu0 %v2973
    %3115 = vmatpush.bf16.msra.mxu0 %v2969
    %3116 = vmatpush.bf16.msra.mxu0 %v2965
    %3117 = vmatpush.bf16.msra.mxu0 %v2961
    %3118 = vmatpush.bf16.msra.mxu0 %v2957
    %3119 = vmatpush.bf16.msra.mxu0 %v2953
    %3120 = vmatmul.bf16.gmra.mxu0 %v2724
    %v3121 = vpop.f32.mrf.mxu0
    %v3122 = vadd.f32 %v3109, %v3121
    %v3123 = vpop.f32.mrf.mxu0
    %3124 = vdwg.mxu0
    %3125 = vmatpush.bf16.msra.mxu0 %v2950
    %3126 = vmatpush.bf16.msra.mxu0 %v2946
    %3127 = vmatpush.bf16.msra.mxu0 %v2942
    %3128 = vmatpush.bf16.msra.mxu0 %v2938
    %3129 = vmatpush.bf16.msra.mxu0 %v2934
    %3130 = vmatpush.bf16.msra.mxu0 %v2930
    %3131 = vmatpush.bf16.msra.mxu0 %v2926
    %3132 = vmatpush.bf16.msra.mxu0 %v2922
    %3133 = vmatmul.bf16.gmra.mxu0 %v2723
    %v3134 = vpop.f32.mrf.mxu0
    %v3135 = vadd.f32 0.0, %v3134
    %v3136 = vpop.f32.mrf.mxu0
    %3137 = vdwg.mxu0
    %3138 = vmatpush.bf16.msra.mxu0 %v2982
    %3139 = vmatpush.bf16.msra.mxu0 %v2978
    %3140 = vmatpush.bf16.msra.mxu0 %v2974
    %3141 = vmatpush.bf16.msra.mxu0 %v2970
    %3142 = vmatpush.bf16.msra.mxu0 %v2966
    %3143 = vmatpush.bf16.msra.mxu0 %v2962
    %3144 = vmatpush.bf16.msra.mxu0 %v2958
    %3145 = vmatpush.bf16.msra.mxu0 %v2954
    %3146 = vmatmul.bf16.gmra.mxu0 %v2724
    %v3147 = vpop.f32.mrf.mxu0
    %v3148 = vadd.f32 %v3135, %v3147
    %v3149 = vpop.f32.mrf.mxu0
    %3150 = vdwg.mxu0
    %v3151 = vadd.f32 %v2278, %v3070
    %v3152 = vadd.f32 %v2304, %v3096
    %v3153 = vadd.f32 %v2330, %v3122
    %v3154 = vadd.f32 %v2356, %v3148
    %v3155 = vld [vmem:[#allocation13 + $0x18] sm:$0xff]
    %v3156 = vld [vmem:[#allocation13 + $0x38] sm:$0xff]
    %v3157 = vld [vmem:[#allocation13 + $0x58] sm:$0xff]
    %v3158 = vld [vmem:[#allocation13 + $0x78] sm:$0xff]
    %v3159 = vld [vmem:[#allocation13 + $0x98] sm:$0xff]
    %v3160 = vld [vmem:[#allocation13 + $0xb8] sm:$0xff]
    %v3161 = vld [vmem:[#allocation13 + $0xd8] sm:$0xff]
    %v3162 = vld [vmem:[#allocation13 + $0xf8] sm:$0xff]
    %v3163 = vld [vmem:[#allocation13 + $0x118] sm:$0xff]
    %v3164 = vld [vmem:[#allocation13 + $0x138] sm:$0xff]
    %v3165 = vld [vmem:[#allocation13 + $0x158] sm:$0xff]
    %v3166 = vld [vmem:[#allocation13 + $0x178] sm:$0xff]
    %v3167 = vld [vmem:[#allocation13 + $0x198] sm:$0xff]
    %v3168 = vld [vmem:[#allocation13 + $0x1b8] sm:$0xff]
    %v3169 = vld [vmem:[#allocation13 + $0x1d8] sm:$0xff]
    %v3170 = vld [vmem:[#allocation13 + $0x1f8] sm:$0xff]
    %v3171 = vld [vmem:[%s10 + $0x6] sm:$0x3]
    %v3173 = vperm.slane %v3171, 0
    %v3174 = vperm.slane %v3171, 1
    %v3193 = vunpack.c.l.b16 %v3155
    %v3194 = vunpack.c.h.b16 %v3155
    %v3195 = vunpack.c.l.b16 %v3156
    %v3196 = vunpack.c.h.b16 %v3156
    %v3197 = vunpack.c.l.b16 %v3157
    %v3198 = vunpack.c.h.b16 %v3157
    %v3199 = vunpack.c.l.b16 %v3158
    %v3200 = vunpack.c.h.b16 %v3158
    %v3201 = vunpack.c.l.b16 %v3159
    %v3202 = vunpack.c.h.b16 %v3159
    %v3203 = vunpack.c.l.b16 %v3160
    %v3204 = vunpack.c.h.b16 %v3160
    %v3205 = vunpack.c.l.b16 %v3161
    %v3206 = vunpack.c.h.b16 %v3161
    %v3207 = vunpack.c.l.b16 %v3162
    %v3208 = vunpack.c.h.b16 %v3162
    %v3209 = vunpack.c.l.b16 %v3163
    %v3210 = vunpack.c.h.b16 %v3163
    %v3211 = vunpack.c.l.b16 %v3164
    %v3212 = vunpack.c.h.b16 %v3164
    %v3213 = vunpack.c.l.b16 %v3165
    %v3214 = vunpack.c.h.b16 %v3165
    %v3215 = vunpack.c.l.b16 %v3166
    %v3216 = vunpack.c.h.b16 %v3166
    %v3217 = vunpack.c.l.b16 %v3167
    %v3218 = vunpack.c.h.b16 %v3167
    %v3219 = vunpack.c.l.b16 %v3168
    %v3220 = vunpack.c.h.b16 %v3168
    %v3221 = vunpack.c.l.b16 %v3169
    %v3222 = vunpack.c.h.b16 %v3169
    %v3223 = vunpack.c.l.b16 %v3170
    %v3224 = vunpack.c.h.b16 %v3170
    %v3225 = vpack.c.b16 %v3195, %v3193
    %v3226 = vpack.c.b16 %v3196, %v3194
    %v3227 = vpack.c.b16 %v3199, %v3197
    %v3228 = vpack.c.b16 %v3200, %v3198
    %v3229 = vpack.c.b16 %v3203, %v3201
    %v3230 = vpack.c.b16 %v3204, %v3202
    %v3231 = vpack.c.b16 %v3207, %v3205
    %v3232 = vpack.c.b16 %v3208, %v3206
    %v3233 = vpack.c.b16 %v3211, %v3209
    %v3234 = vpack.c.b16 %v3212, %v3210
    %v3235 = vpack.c.b16 %v3215, %v3213
    %v3236 = vpack.c.b16 %v3216, %v3214
    %v3237 = vpack.c.b16 %v3219, %v3217
    %v3238 = vpack.c.b16 %v3220, %v3218
    %v3239 = vpack.c.b16 %v3223, %v3221
    %v3240 = vpack.c.b16 %v3224, %v3222
    %3257 = vmatpush.bf16.msra.mxu0 %v3239
    %3258 = vmatpush.bf16.msra.mxu0 %v3237
    %3259 = vmatpush.bf16.msra.mxu0 %v3235
    %3260 = vmatpush.bf16.msra.mxu0 %v3233
    %3261 = vmatpush.bf16.msra.mxu0 %v3231
    %3262 = vmatpush.bf16.msra.mxu0 %v3229
    %3263 = vmatpush.bf16.msra.mxu0 %v3227
    %3264 = vmatpush.bf16.msra.mxu0 %v3225
    %3265 = vmatmul.bf16.gmra.mxu0 %v764
    %v3266 = vpop.f32.mrf.mxu0
    %v3267 = vadd.f32 %v3173, %v3266
    %v3268 = vpop.f32.mrf.mxu0
    %v3269 = vadd.f32 %v3173, %v3268
    %3270 = vmatmul.bf16.gmra.mxu0 %v765
    %v3271 = vpop.f32.mrf.mxu0
    %v3272 = vadd.f32 %v3173, %v3271
    %v3273 = vpop.f32.mrf.mxu0
    %v3274 = vadd.f32 %v3173, %v3273
    %3275 = vmatmul.bf16.gmra.mxu0 %v766
    %v3276 = vpop.f32.mrf.mxu0
    %v3277 = vadd.f32 %v3173, %v3276
    %v3278 = vpop.f32.mrf.mxu0
    %v3279 = vadd.f32 %v3173, %v3278
    %3280 = vmatmul.bf16.gmra.mxu0 %v767
    %v3281 = vpop.f32.mrf.mxu0
    %v3282 = vadd.f32 %v3173, %v3281
    %v3283 = vpop.f32.mrf.mxu0
    %v3284 = vadd.f32 %v3173, %v3283
    %3285 = vmatmul.bf16.gmra.mxu0 %v768
    %v3286 = vpop.f32.mrf.mxu0
    %v3287 = vadd.f32 %v3173, %v3286
    %v3288 = vpop.f32.mrf.mxu0
    %v3289 = vadd.f32 %v3173, %v3288
    %3290 = vmatmul.bf16.gmra.mxu0 %v769
    %v3291 = vpop.f32.mrf.mxu0
    %v3292 = vadd.f32 %v3173, %v3291
    %v3293 = vpop.f32.mrf.mxu0
    %v3294 = vadd.f32 %v3173, %v3293
    %3295 = vmatmul.bf16.gmra.mxu0 %v770
    %v3296 = vpop.f32.mrf.mxu0
    %v3297 = vadd.f32 %v3173, %v3296
    %v3298 = vpop.f32.mrf.mxu0
    %v3299 = vadd.f32 %v3173, %v3298
    %3300 = vmatmul.bf16.gmra.mxu0 %v771
    %v3301 = vpop.f32.mrf.mxu0
    %v3302 = vadd.f32 %v3173, %v3301
    %v3303 = vpop.f32.mrf.mxu0
    %v3304 = vadd.f32 %v3173, %v3303
    %3305 = vdwg.mxu0
    %3306 = vmatpush.bf16.msra.mxu0 %v3240
    %3307 = vmatpush.bf16.msra.mxu0 %v3238
    %3308 = vmatpush.bf16.msra.mxu0 %v3236
    %3309 = vmatpush.bf16.msra.mxu0 %v3234
    %3310 = vmatpush.bf16.msra.mxu0 %v3232
    %3311 = vmatpush.bf16.msra.mxu0 %v3230
    %3312 = vmatpush.bf16.msra.mxu0 %v3228
    %3313 = vmatpush.bf16.msra.mxu0 %v3226
    %3314 = vmatmul.bf16.gmra.mxu0 %v764
    %v3315 = vpop.f32.mrf.mxu0
    %v3316 = vadd.f32 %v3174, %v3315
    %v3317 = vpop.f32.mrf.mxu0
    %v3318 = vadd.f32 %v3174, %v3317
    %3319 = vmatmul.bf16.gmra.mxu0 %v765
    %v3320 = vpop.f32.mrf.mxu0
    %v3321 = vadd.f32 %v3174, %v3320
    %v3322 = vpop.f32.mrf.mxu0
    %v3323 = vadd.f32 %v3174, %v3322
    %3324 = vmatmul.bf16.gmra.mxu0 %v766
    %v3325 = vpop.f32.mrf.mxu0
    %v3326 = vadd.f32 %v3174, %v3325
    %v3327 = vpop.f32.mrf.mxu0
    %v3328 = vadd.f32 %v3174, %v3327
    %3329 = vmatmul.bf16.gmra.mxu0 %v767
    %v3330 = vpop.f32.mrf.mxu0
    %v3331 = vadd.f32 %v3174, %v3330
    %v3332 = vpop.f32.mrf.mxu0
    %v3333 = vadd.f32 %v3174, %v3332
    %3334 = vmatmul.bf16.gmra.mxu0 %v768
    %v3335 = vpop.f32.mrf.mxu0
    %v3336 = vadd.f32 %v3174, %v3335
    %v3337 = vpop.f32.mrf.mxu0
    %v3338 = vadd.f32 %v3174, %v3337
    %3339 = vmatmul.bf16.gmra.mxu0 %v769
    %v3340 = vpop.f32.mrf.mxu0
    %v3341 = vadd.f32 %v3174, %v3340
    %v3342 = vpop.f32.mrf.mxu0
    %v3343 = vadd.f32 %v3174, %v3342
    %3344 = vmatmul.bf16.gmra.mxu0 %v770
    %v3345 = vpop.f32.mrf.mxu0
    %v3346 = vadd.f32 %v3174, %v3345
    %v3347 = vpop.f32.mrf.mxu0
    %v3348 = vadd.f32 %v3174, %v3347
    %3349 = vmatmul.bf16.gmra.mxu0 %v771
    %v3350 = vpop.f32.mrf.mxu0
    %v3351 = vadd.f32 %v3174, %v3350
    %v3352 = vpop.f32.mrf.mxu0
    %v3353 = vadd.f32 %v3174, %v3352
    %3354 = vdwg.mxu0
    %v3355 = vmax.f32 %v3267, 0.0
    %v3356 = vmax.f32 %v3316, 0.0
    %v3357 = vmax.f32 %v3269, 0.0
    %v3358 = vmax.f32 %v3318, 0.0
    %v3359 = vmax.f32 %v3272, 0.0
    %v3360 = vmax.f32 %v3321, 0.0
    %v3361 = vmax.f32 %v3274, 0.0
    %v3362 = vmax.f32 %v3323, 0.0
    %v3363 = vmax.f32 %v3277, 0.0
    %v3364 = vmax.f32 %v3326, 0.0
    %v3365 = vmax.f32 %v3279, 0.0
    %v3366 = vmax.f32 %v3328, 0.0
    %v3367 = vmax.f32 %v3282, 0.0
    %v3368 = vmax.f32 %v3331, 0.0
    %v3369 = vmax.f32 %v3284, 0.0
    %v3370 = vmax.f32 %v3333, 0.0
    %v3371 = vmax.f32 %v3287, 0.0
    %v3372 = vmax.f32 %v3336, 0.0
    %v3373 = vmax.f32 %v3289, 0.0
    %v3374 = vmax.f32 %v3338, 0.0
    %v3375 = vmax.f32 %v3292, 0.0
    %v3376 = vmax.f32 %v3341, 0.0
    %v3377 = vmax.f32 %v3294, 0.0
    %v3378 = vmax.f32 %v3343, 0.0
    %v3379 = vmax.f32 %v3297, 0.0
    %v3380 = vmax.f32 %v3346, 0.0
    %v3381 = vmax.f32 %v3299, 0.0
    %v3382 = vmax.f32 %v3348, 0.0
    %v3383 = vmax.f32 %v3302, 0.0
    %v3384 = vmax.f32 %v3351, 0.0
    %v3385 = vmax.f32 %v3304, 0.0
    %v3386 = vmax.f32 %v3353, 0.0
    %v3387 = vmax.f32 %v3355, %v3357
    %v3388 = vmax.f32 %v3387, %v3359
    %v3389 = vmax.f32 %v3388, %v3361
    %v3390 = vmax.f32 %v3389, %v3363
    %v3391 = vmax.f32 %v3390, %v3365
    %v3392 = vmax.f32 %v3391, %v3367
    %v3393 = vmax.f32 %v3392, %v3369
    %v3394 = vrot.slane %v3393, 4
    %v3395 = vmax.f32 %v3393, %v3394
    %v3396 = vrot.slane %v3395, 2
    %v3397 = vmax.f32 %v3395, %v3396
    %v3398 = vrot.slane %v3397, 1
    %v3399 = vmax.f32 %v3397, %v3398
    %v3400 = vmax.f32 %v3356, %v3358
    %v3401 = vmax.f32 %v3400, %v3360
    %v3402 = vmax.f32 %v3401, %v3362
    %v3403 = vmax.f32 %v3402, %v3364
    %v3404 = vmax.f32 %v3403, %v3366
    %v3405 = vmax.f32 %v3404, %v3368
    %v3406 = vmax.f32 %v3405, %v3370
    %v3407 = vrot.slane %v3406, 4
    %v3408 = vmax.f32 %v3406, %v3407
    %v3409 = vrot.slane %v3408, 2
    %v3410 = vmax.f32 %v3408, %v3409
    %v3411 = vrot.slane %v3410, 1
    %v3412 = vmax.f32 %v3410, %v3411
    %v3413 = vmax.f32 %v3371, %v3373
    %v3414 = vmax.f32 %v3413, %v3375
    %v3415 = vmax.f32 %v3414, %v3377
    %v3416 = vmax.f32 %v3415, %v3379
    %v3417 = vmax.f32 %v3416, %v3381
    %v3418 = vmax.f32 %v3417, %v3383
    %v3419 = vmax.f32 %v3418, %v3385
    %v3420 = vrot.slane %v3419, 4
    %v3421 = vmax.f32 %v3419, %v3420
    %v3422 = vrot.slane %v3421, 2
    %v3423 = vmax.f32 %v3421, %v3422
    %v3424 = vrot.slane %v3423, 1
    %v3425 = vmax.f32 %v3423, %v3424
    %v3426 = vmax.f32 %v3372, %v3374
    %v3427 = vmax.f32 %v3426, %v3376
    %v3428 = vmax.f32 %v3427, %v3378
    %v3429 = vmax.f32 %v3428, %v3380
    %v3430 = vmax.f32 %v3429, %v3382
    %v3431 = vmax.f32 %v3430, %v3384
    %v3432 = vmax.f32 %v3431, %v3386
    %v3433 = vrot.slane %v3432, 4
    %v3434 = vmax.f32 %v3432, %v3433
    %v3435 = vrot.slane %v3434, 2
    %v3436 = vmax.f32 %v3434, %v3435
    %v3437 = vrot.slane %v3436, 1
    %v3438 = vmax.f32 %v3436, %v3437
    %v3439 = vpack.c.bf16 %v3399, %v3399
    %v3440 = vpack.c.bf16 %v3412, %v3412
    %v3441 = vpack.c.bf16 %v3425, %v3425
    %v3442 = vpack.c.bf16 %v3438, %v3438
    %s3443 = sshll.u32 %s1061, 4
    %3444 = dma.done %s162, %s3443
    %v3445 = vld [vmem:[#allocation2 + $0x600] sm:$0xff]
    %v3446 = vld [vmem:[#allocation2 + $0x608] sm:$0xff]
    %v3447 = vld [vmem:[#allocation2 + $0x610] sm:$0xff]
    %v3448 = vld [vmem:[#allocation2 + $0x618] sm:$0xff]
    %v3449 = vld [vmem:[#allocation2 + $0x620] sm:$0xff]
    %v3450 = vld [vmem:[#allocation2 + $0x628] sm:$0xff]
    %v3451 = vld [vmem:[#allocation2 + $0x630] sm:$0xff]
    %v3452 = vld [vmem:[#allocation2 + $0x638] sm:$0xff]
    %v3453 = vld [vmem:[#allocation2 + $0x640] sm:$0xff]
    %v3454 = vld [vmem:[#allocation2 + $0x648] sm:$0xff]
    %v3455 = vld [vmem:[#allocation2 + $0x650] sm:$0xff]
    %v3456 = vld [vmem:[#allocation2 + $0x658] sm:$0xff]
    %v3457 = vld [vmem:[#allocation2 + $0x660] sm:$0xff]
    %v3458 = vld [vmem:[#allocation2 + $0x668] sm:$0xff]
    %v3459 = vld [vmem:[#allocation2 + $0x670] sm:$0xff]
    %v3460 = vld [vmem:[#allocation2 + $0x678] sm:$0xff]
    %v3461 = vld [vmem:[#allocation2 + $0x680] sm:$0xff]
    %v3462 = vld [vmem:[#allocation2 + $0x688] sm:$0xff]
    %v3463 = vld [vmem:[#allocation2 + $0x690] sm:$0xff]
    %v3464 = vld [vmem:[#allocation2 + $0x698] sm:$0xff]
    %v3465 = vld [vmem:[#allocation2 + $0x6a0] sm:$0xff]
    %v3466 = vld [vmem:[#allocation2 + $0x6a8] sm:$0xff]
    %v3467 = vld [vmem:[#allocation2 + $0x6b0] sm:$0xff]
    %v3468 = vld [vmem:[#allocation2 + $0x6b8] sm:$0xff]
    %v3469 = vld [vmem:[#allocation2 + $0x6c0] sm:$0xff]
    %v3470 = vld [vmem:[#allocation2 + $0x6c8] sm:$0xff]
    %v3471 = vld [vmem:[#allocation2 + $0x6d0] sm:$0xff]
    %v3472 = vld [vmem:[#allocation2 + $0x6d8] sm:$0xff]
    %v3473 = vld [vmem:[#allocation2 + $0x6e0] sm:$0xff]
    %v3474 = vld [vmem:[#allocation2 + $0x6e8] sm:$0xff]
    %v3475 = vld [vmem:[#allocation2 + $0x6f0] sm:$0xff]
    %v3476 = vld [vmem:[#allocation2 + $0x6f8] sm:$0xff]
    %v3477 = vld [vmem:[#allocation2 + $0x700] sm:$0xff]
    %v3478 = vld [vmem:[#allocation2 + $0x708] sm:$0xff]
    %v3479 = vld [vmem:[#allocation2 + $0x710] sm:$0xff]
    %v3480 = vld [vmem:[#allocation2 + $0x718] sm:$0xff]
    %v3481 = vld [vmem:[#allocation2 + $0x720] sm:$0xff]
    %v3482 = vld [vmem:[#allocation2 + $0x728] sm:$0xff]
    %v3483 = vld [vmem:[#allocation2 + $0x730] sm:$0xff]
    %v3484 = vld [vmem:[#allocation2 + $0x738] sm:$0xff]
    %v3485 = vld [vmem:[#allocation2 + $0x740] sm:$0xff]
    %v3486 = vld [vmem:[#allocation2 + $0x748] sm:$0xff]
    %v3487 = vld [vmem:[#allocation2 + $0x750] sm:$0xff]
    %v3488 = vld [vmem:[#allocation2 + $0x758] sm:$0xff]
    %v3489 = vld [vmem:[#allocation2 + $0x760] sm:$0xff]
    %v3490 = vld [vmem:[#allocation2 + $0x768] sm:$0xff]
    %v3491 = vld [vmem:[#allocation2 + $0x770] sm:$0xff]
    %v3492 = vld [vmem:[#allocation2 + $0x778] sm:$0xff]
    %v3493 = vld [vmem:[#allocation2 + $0x780] sm:$0xff]
    %v3494 = vld [vmem:[#allocation2 + $0x788] sm:$0xff]
    %v3495 = vld [vmem:[#allocation2 + $0x790] sm:$0xff]
    %v3496 = vld [vmem:[#allocation2 + $0x798] sm:$0xff]
    %v3497 = vld [vmem:[#allocation2 + $0x7a0] sm:$0xff]
    %v3498 = vld [vmem:[#allocation2 + $0x7a8] sm:$0xff]
    %v3499 = vld [vmem:[#allocation2 + $0x7b0] sm:$0xff]
    %v3500 = vld [vmem:[#allocation2 + $0x7b8] sm:$0xff]
    %v3501 = vld [vmem:[#allocation2 + $0x7c0] sm:$0xff]
    %v3502 = vld [vmem:[#allocation2 + $0x7c8] sm:$0xff]
    %v3503 = vld [vmem:[#allocation2 + $0x7d0] sm:$0xff]
    %v3504 = vld [vmem:[#allocation2 + $0x7d8] sm:$0xff]
    %v3505 = vld [vmem:[#allocation2 + $0x7e0] sm:$0xff]
    %v3506 = vld [vmem:[#allocation2 + $0x7e8] sm:$0xff]
    %v3507 = vld [vmem:[#allocation2 + $0x7f0] sm:$0xff]
    %v3508 = vld [vmem:[#allocation2 + $0x7f8] sm:$0xff]
    %v3513 = vunpack.c.l.b16 %v3439
    %v3514 = vunpack.c.l.b16 %v3440
    %v3515 = vunpack.c.l.b16 %v3441
    %v3516 = vunpack.c.l.b16 %v3442
    %v3517 = vsel %vm1490, %v3515, %v3513
    %v3518 = vsel %vm1490, %v3516, %v3514
    %v3519 = vpack.c.b16 %v3517, %v3517
    %v3520 = vpack.c.b16 %v3518, %v3518
    %v3587 = vunpack.c.l.b16 %v3445
    %v3588 = vunpack.c.h.b16 %v3445
    %v3589 = vunpack.c.l.b16 %v3446
    %v3590 = vunpack.c.h.b16 %v3446
    %v3591 = vunpack.c.l.b16 %v3447
    %v3592 = vunpack.c.h.b16 %v3447
    %v3593 = vunpack.c.l.b16 %v3448
    %v3594 = vunpack.c.h.b16 %v3448
    %v3595 = vunpack.c.l.b16 %v3449
    %v3596 = vunpack.c.h.b16 %v3449
    %v3597 = vunpack.c.l.b16 %v3450
    %v3598 = vunpack.c.h.b16 %v3450
    %v3599 = vunpack.c.l.b16 %v3451
    %v3600 = vunpack.c.h.b16 %v3451
    %v3601 = vunpack.c.l.b16 %v3452
    %v3602 = vunpack.c.h.b16 %v3452
    %v3603 = vunpack.c.l.b16 %v3453
    %v3604 = vunpack.c.h.b16 %v3453
    %v3605 = vunpack.c.l.b16 %v3454
    %v3606 = vunpack.c.h.b16 %v3454
    %v3607 = vunpack.c.l.b16 %v3455
    %v3608 = vunpack.c.h.b16 %v3455
    %v3609 = vunpack.c.l.b16 %v3456
    %v3610 = vunpack.c.h.b16 %v3456
    %v3611 = vunpack.c.l.b16 %v3457
    %v3612 = vunpack.c.h.b16 %v3457
    %v3613 = vunpack.c.l.b16 %v3458
    %v3614 = vunpack.c.h.b16 %v3458
    %v3615 = vunpack.c.l.b16 %v3459
    %v3616 = vunpack.c.h.b16 %v3459
    %v3617 = vunpack.c.l.b16 %v3460
    %v3618 = vunpack.c.h.b16 %v3460
    %v3619 = vunpack.c.l.b16 %v3461
    %v3620 = vunpack.c.h.b16 %v3461
    %v3621 = vunpack.c.l.b16 %v3462
    %v3622 = vunpack.c.h.b16 %v3462
    %v3623 = vunpack.c.l.b16 %v3463
    %v3624 = vunpack.c.h.b16 %v3463
    %v3625 = vunpack.c.l.b16 %v3464
    %v3626 = vunpack.c.h.b16 %v3464
    %v3627 = vunpack.c.l.b16 %v3465
    %v3628 = vunpack.c.h.b16 %v3465
    %v3629 = vunpack.c.l.b16 %v3466
    %v3630 = vunpack.c.h.b16 %v3466
    %v3631 = vunpack.c.l.b16 %v3467
    %v3632 = vunpack.c.h.b16 %v3467
    %v3633 = vunpack.c.l.b16 %v3468
    %v3634 = vunpack.c.h.b16 %v3468
    %v3635 = vunpack.c.l.b16 %v3469
    %v3636 = vunpack.c.h.b16 %v3469
    %v3637 = vunpack.c.l.b16 %v3470
    %v3638 = vunpack.c.h.b16 %v3470
    %v3639 = vunpack.c.l.b16 %v3471
    %v3640 = vunpack.c.h.b16 %v3471
    %v3641 = vunpack.c.l.b16 %v3472
    %v3642 = vunpack.c.h.b16 %v3472
    %v3643 = vunpack.c.l.b16 %v3473
    %v3644 = vunpack.c.h.b16 %v3473
    %v3645 = vunpack.c.l.b16 %v3474
    %v3646 = vunpack.c.h.b16 %v3474
    %v3647 = vunpack.c.l.b16 %v3475
    %v3648 = vunpack.c.h.b16 %v3475
    %v3649 = vunpack.c.l.b16 %v3476
    %v3650 = vunpack.c.h.b16 %v3476
    %v3651 = vunpack.c.l.b16 %v3477
    %v3652 = vunpack.c.h.b16 %v3477
    %v3653 = vunpack.c.l.b16 %v3478
    %v3654 = vunpack.c.h.b16 %v3478
    %v3655 = vunpack.c.l.b16 %v3479
    %v3656 = vunpack.c.h.b16 %v3479
    %v3657 = vunpack.c.l.b16 %v3480
    %v3658 = vunpack.c.h.b16 %v3480
    %v3659 = vunpack.c.l.b16 %v3481
    %v3660 = vunpack.c.h.b16 %v3481
    %v3661 = vunpack.c.l.b16 %v3482
    %v3662 = vunpack.c.h.b16 %v3482
    %v3663 = vunpack.c.l.b16 %v3483
    %v3664 = vunpack.c.h.b16 %v3483
    %v3665 = vunpack.c.l.b16 %v3484
    %v3666 = vunpack.c.h.b16 %v3484
    %v3667 = vunpack.c.l.b16 %v3485
    %v3668 = vunpack.c.h.b16 %v3485
    %v3669 = vunpack.c.l.b16 %v3486
    %v3670 = vunpack.c.h.b16 %v3486
    %v3671 = vunpack.c.l.b16 %v3487
    %v3672 = vunpack.c.h.b16 %v3487
    %v3673 = vunpack.c.l.b16 %v3488
    %v3674 = vunpack.c.h.b16 %v3488
    %v3675 = vunpack.c.l.b16 %v3489
    %v3676 = vunpack.c.h.b16 %v3489
    %v3677 = vunpack.c.l.b16 %v3490
    %v3678 = vunpack.c.h.b16 %v3490
    %v3679 = vunpack.c.l.b16 %v3491
    %v3680 = vunpack.c.h.b16 %v3491
    %v3681 = vunpack.c.l.b16 %v3492
    %v3682 = vunpack.c.h.b16 %v3492
    %v3683 = vunpack.c.l.b16 %v3493
    %v3684 = vunpack.c.h.b16 %v3493
    %v3685 = vunpack.c.l.b16 %v3494
    %v3686 = vunpack.c.h.b16 %v3494
    %v3687 = vunpack.c.l.b16 %v3495
    %v3688 = vunpack.c.h.b16 %v3495
    %v3689 = vunpack.c.l.b16 %v3496
    %v3690 = vunpack.c.h.b16 %v3496
    %v3691 = vunpack.c.l.b16 %v3497
    %v3692 = vunpack.c.h.b16 %v3497
    %v3693 = vunpack.c.l.b16 %v3498
    %v3694 = vunpack.c.h.b16 %v3498
    %v3695 = vunpack.c.l.b16 %v3499
    %v3696 = vunpack.c.h.b16 %v3499
    %v3697 = vunpack.c.l.b16 %v3500
    %v3698 = vunpack.c.h.b16 %v3500
    %v3699 = vunpack.c.l.b16 %v3501
    %v3700 = vunpack.c.h.b16 %v3501
    %v3701 = vunpack.c.l.b16 %v3502
    %v3702 = vunpack.c.h.b16 %v3502
    %v3703 = vunpack.c.l.b16 %v3503
    %v3704 = vunpack.c.h.b16 %v3503
    %v3705 = vunpack.c.l.b16 %v3504
    %v3706 = vunpack.c.h.b16 %v3504
    %v3707 = vunpack.c.l.b16 %v3505
    %v3708 = vunpack.c.h.b16 %v3505
    %v3709 = vunpack.c.l.b16 %v3506
    %v3710 = vunpack.c.h.b16 %v3506
    %v3711 = vunpack.c.l.b16 %v3507
    %v3712 = vunpack.c.h.b16 %v3507
    %v3713 = vunpack.c.l.b16 %v3508
    %v3714 = vunpack.c.h.b16 %v3508
    %v3715 = vpack.c.b16 %v3591, %v3587
    %v3716 = vpack.c.b16 %v3592, %v3588
    %v3717 = vpack.c.b16 %v3593, %v3589
    %v3718 = vpack.c.b16 %v3594, %v3590
    %v3719 = vpack.c.b16 %v3599, %v3595
    %v3720 = vpack.c.b16 %v3600, %v3596
    %v3721 = vpack.c.b16 %v3601, %v3597
    %v3722 = vpack.c.b16 %v3602, %v3598
    %v3723 = vpack.c.b16 %v3607, %v3603
    %v3724 = vpack.c.b16 %v3608, %v3604
    %v3725 = vpack.c.b16 %v3609, %v3605
    %v3726 = vpack.c.b16 %v3610, %v3606
    %v3727 = vpack.c.b16 %v3615, %v3611
    %v3728 = vpack.c.b16 %v3616, %v3612
    %v3729 = vpack.c.b16 %v3617, %v3613
    %v3730 = vpack.c.b16 %v3618, %v3614
    %v3731 = vpack.c.b16 %v3623, %v3619
    %v3732 = vpack.c.b16 %v3624, %v3620
    %v3733 = vpack.c.b16 %v3625, %v3621
    %v3734 = vpack.c.b16 %v3626, %v3622
    %v3735 = vpack.c.b16 %v3631, %v3627
    %v3736 = vpack.c.b16 %v3632, %v3628
    %v3737 = vpack.c.b16 %v3633, %v3629
    %v3738 = vpack.c.b16 %v3634, %v3630
    %v3739 = vpack.c.b16 %v3639, %v3635
    %v3740 = vpack.c.b16 %v3640, %v3636
    %v3741 = vpack.c.b16 %v3641, %v3637
    %v3742 = vpack.c.b16 %v3642, %v3638
    %v3743 = vpack.c.b16 %v3647, %v3643
    %v3744 = vpack.c.b16 %v3648, %v3644
    %v3745 = vpack.c.b16 %v3649, %v3645
    %v3746 = vpack.c.b16 %v3650, %v3646
    %v3747 = vpack.c.b16 %v3655, %v3651
    %v3748 = vpack.c.b16 %v3656, %v3652
    %v3749 = vpack.c.b16 %v3657, %v3653
    %v3750 = vpack.c.b16 %v3658, %v3654
    %v3751 = vpack.c.b16 %v3663, %v3659
    %v3752 = vpack.c.b16 %v3664, %v3660
    %v3753 = vpack.c.b16 %v3665, %v3661
    %v3754 = vpack.c.b16 %v3666, %v3662
    %v3755 = vpack.c.b16 %v3671, %v3667
    %v3756 = vpack.c.b16 %v3672, %v3668
    %v3757 = vpack.c.b16 %v3673, %v3669
    %v3758 = vpack.c.b16 %v3674, %v3670
    %v3759 = vpack.c.b16 %v3679, %v3675
    %v3760 = vpack.c.b16 %v3680, %v3676
    %v3761 = vpack.c.b16 %v3681, %v3677
    %v3762 = vpack.c.b16 %v3682, %v3678
    %v3763 = vpack.c.b16 %v3687, %v3683
    %v3764 = vpack.c.b16 %v3688, %v3684
    %v3765 = vpack.c.b16 %v3689, %v3685
    %v3766 = vpack.c.b16 %v3690, %v3686
    %v3767 = vpack.c.b16 %v3695, %v3691
    %v3768 = vpack.c.b16 %v3696, %v3692
    %v3769 = vpack.c.b16 %v3697, %v3693
    %v3770 = vpack.c.b16 %v3698, %v3694
    %v3771 = vpack.c.b16 %v3703, %v3699
    %v3772 = vpack.c.b16 %v3704, %v3700
    %v3773 = vpack.c.b16 %v3705, %v3701
    %v3774 = vpack.c.b16 %v3706, %v3702
    %v3775 = vpack.c.b16 %v3711, %v3707
    %v3776 = vpack.c.b16 %v3712, %v3708
    %v3777 = vpack.c.b16 %v3713, %v3709
    %v3778 = vpack.c.b16 %v3714, %v3710
    %3843 = vmatpush.bf16.msra.mxu0 %v3743
    %3844 = vmatpush.bf16.msra.mxu0 %v3739
    %3845 = vmatpush.bf16.msra.mxu0 %v3735
    %3846 = vmatpush.bf16.msra.mxu0 %v3731
    %3847 = vmatpush.bf16.msra.mxu0 %v3727
    %3848 = vmatpush.bf16.msra.mxu0 %v3723
    %3849 = vmatpush.bf16.msra.mxu0 %v3719
    %3850 = vmatpush.bf16.msra.mxu0 %v3715
    %3851 = vmatmul.bf16.gmra.mxu0 %v3519
    %v3852 = vpop.f32.mrf.mxu0
    %v3853 = vadd.f32 0.0, %v3852
    %v3854 = vpop.f32.mrf.mxu0
    %3855 = vdwg.mxu0
    %3856 = vmatpush.bf16.msra.mxu0 %v3775
    %3857 = vmatpush.bf16.msra.mxu0 %v3771
    %3858 = vmatpush.bf16.msra.mxu0 %v3767
    %3859 = vmatpush.bf16.msra.mxu0 %v3763
    %3860 = vmatpush.bf16.msra.mxu0 %v3759
    %3861 = vmatpush.bf16.msra.mxu0 %v3755
    %3862 = vmatpush.bf16.msra.mxu0 %v3751
    %3863 = vmatpush.bf16.msra.mxu0 %v3747
    %3864 = vmatmul.bf16.gmra.mxu0 %v3520
    %v3865 = vpop.f32.mrf.mxu0
    %v3866 = vadd.f32 %v3853, %v3865
    %v3867 = vpop.f32.mrf.mxu0
    %3868 = vdwg.mxu0
    %3869 = vmatpush.bf16.msra.mxu0 %v3744
    %3870 = vmatpush.bf16.msra.mxu0 %v3740
    %3871 = vmatpush.bf16.msra.mxu0 %v3736
    %3872 = vmatpush.bf16.msra.mxu0 %v3732
    %3873 = vmatpush.bf16.msra.mxu0 %v3728
    %3874 = vmatpush.bf16.msra.mxu0 %v3724
    %3875 = vmatpush.bf16.msra.mxu0 %v3720
    %3876 = vmatpush.bf16.msra.mxu0 %v3716
    %3877 = vmatmul.bf16.gmra.mxu0 %v3519
    %v3878 = vpop.f32.mrf.mxu0
    %v3879 = vadd.f32 0.0, %v3878
    %v3880 = vpop.f32.mrf.mxu0
    %3881 = vdwg.mxu0
    %3882 = vmatpush.bf16.msra.mxu0 %v3776
    %3883 = vmatpush.bf16.msra.mxu0 %v3772
    %3884 = vmatpush.bf16.msra.mxu0 %v3768
    %3885 = vmatpush.bf16.msra.mxu0 %v3764
    %3886 = vmatpush.bf16.msra.mxu0 %v3760
    %3887 = vmatpush.bf16.msra.mxu0 %v3756
    %3888 = vmatpush.bf16.msra.mxu0 %v3752
    %3889 = vmatpush.bf16.msra.mxu0 %v3748
    %3890 = vmatmul.bf16.gmra.mxu0 %v3520
    %v3891 = vpop.f32.mrf.mxu0
    %v3892 = vadd.f32 %v3879, %v3891
    %v3893 = vpop.f32.mrf.mxu0
    %3894 = vdwg.mxu0
    %3895 = vmatpush.bf16.msra.mxu0 %v3745
    %3896 = vmatpush.bf16.msra.mxu0 %v3741
    %3897 = vmatpush.bf16.msra.mxu0 %v3737
    %3898 = vmatpush.bf16.msra.mxu0 %v3733
    %3899 = vmatpush.bf16.msra.mxu0 %v3729
    %3900 = vmatpush.bf16.msra.mxu0 %v3725
    %3901 = vmatpush.bf16.msra.mxu0 %v3721
    %3902 = vmatpush.bf16.msra.mxu0 %v3717
    %3903 = vmatmul.bf16.gmra.mxu0 %v3519
    %v3904 = vpop.f32.mrf.mxu0
    %v3905 = vadd.f32 0.0, %v3904
    %v3906 = vpop.f32.mrf.mxu0
    %3907 = vdwg.mxu0
    %3908 = vmatpush.bf16.msra.mxu0 %v3777
    %3909 = vmatpush.bf16.msra.mxu0 %v3773
    %3910 = vmatpush.bf16.msra.mxu0 %v3769
    %3911 = vmatpush.bf16.msra.mxu0 %v3765
    %3912 = vmatpush.bf16.msra.mxu0 %v3761
    %3913 = vmatpush.bf16.msra.mxu0 %v3757
    %3914 = vmatpush.bf16.msra.mxu0 %v3753
    %3915 = vmatpush.bf16.msra.mxu0 %v3749
    %3916 = vmatmul.bf16.gmra.mxu0 %v3520
    %v3917 = vpop.f32.mrf.mxu0
    %v3918 = vadd.f32 %v3905, %v3917
    %v3919 = vpop.f32.mrf.mxu0
    %3920 = vdwg.mxu0
    %3921 = vmatpush.bf16.msra.mxu0 %v3746
    %3922 = vmatpush.bf16.msra.mxu0 %v3742
    %3923 = vmatpush.bf16.msra.mxu0 %v3738
    %3924 = vmatpush.bf16.msra.mxu0 %v3734
    %3925 = vmatpush.bf16.msra.mxu0 %v3730
    %3926 = vmatpush.bf16.msra.mxu0 %v3726
    %3927 = vmatpush.bf16.msra.mxu0 %v3722
    %3928 = vmatpush.bf16.msra.mxu0 %v3718
    %3929 = vmatmul.bf16.gmra.mxu0 %v3519
    %v3930 = vpop.f32.mrf.mxu0
    %v3931 = vadd.f32 0.0, %v3930
    %v3932 = vpop.f32.mrf.mxu0
    %3933 = vdwg.mxu0
    %3934 = vmatpush.bf16.msra.mxu0 %v3778
    %3935 = vmatpush.bf16.msra.mxu0 %v3774
    %3936 = vmatpush.bf16.msra.mxu0 %v3770
    %3937 = vmatpush.bf16.msra.mxu0 %v3766
    %3938 = vmatpush.bf16.msra.mxu0 %v3762
    %3939 = vmatpush.bf16.msra.mxu0 %v3758
    %3940 = vmatpush.bf16.msra.mxu0 %v3754
    %3941 = vmatpush.bf16.msra.mxu0 %v3750
    %3942 = vmatmul.bf16.gmra.mxu0 %v3520
    %v3943 = vpop.f32.mrf.mxu0
    %v3944 = vadd.f32 %v3931, %v3943
    %v3945 = vpop.f32.mrf.mxu0
    %3946 = vdwg.mxu0
    %v3947 = vadd.f32 %v3151, %v3866
    %v3948 = vadd.f32 %v3152, %v3892
    %v3949 = vadd.f32 %v3153, %v3918
    %v3950 = vadd.f32 %v3154, %v3944
    %v3951 = vld [vmem:[%s12] sm:$0xf]
    %v3953 = vperm.slane %v3951, 0
    %v3954 = vperm.slane %v3951, 1
    %v3955 = vperm.slane %v3951, 2
    %v3956 = vperm.slane %v3951, 3
    %v3961 = vadd.f32 %v3947, %v3953
    %v3962 = vadd.f32 %v3948, %v3954
    %v3963 = vadd.f32 %v3949, %v3955
    %v3964 = vadd.f32 %v3950, %v3956
    %v3965 = vmax.f32 %v3961, 0.0
    %v3966 = vmax.f32 %v3962, 0.0
    %v3967 = vmax.f32 %v3963, 0.0
    %v3968 = vmax.f32 %v3964, 0.0
    %v3969 = vpack.c.bf16 %v3965, %v3965
    %v3970 = vpack.c.bf16 %v3966, %v3966
    %v3971 = vpack.c.bf16 %v3967, %v3967
    %v3972 = vpack.c.bf16 %v3968, %v3968
    %s3973 = smul.u32 4, 64
    %s3974 = smul.u32 %s3973, 2
    %s3975 = sshll.u32 %s3974, 4
    %3976 = dma.done [#allocation6], %s3975
    %v3977 = vld [vmem:[#allocation3] sm:$0xff]
    %v3978 = vld [vmem:[#allocation3 + $0x8] sm:$0xff]
    %v3979 = vld [vmem:[#allocation3 + $0x10] sm:$0xff]
    %v3980 = vld [vmem:[#allocation3 + $0x18] sm:$0xff]
    %v3981 = vld [vmem:[#allocation3 + $0x20] sm:$0xff]
    %v3982 = vld [vmem:[#allocation3 + $0x28] sm:$0xff]
    %v3983 = vld [vmem:[#allocation3 + $0x30] sm:$0xff]
    %v3984 = vld [vmem:[#allocation3 + $0x38] sm:$0xff]
    %v3985 = vld [vmem:[#allocation3 + $0x40] sm:$0xff]
    %v3986 = vld [vmem:[#allocation3 + $0x48] sm:$0xff]
    %v3987 = vld [vmem:[#allocation3 + $0x50] sm:$0xff]
    %v3988 = vld [vmem:[#allocation3 + $0x58] sm:$0xff]
    %v3989 = vld [vmem:[#allocation3 + $0x60] sm:$0xff]
    %v3990 = vld [vmem:[#allocation3 + $0x68] sm:$0xff]
    %v3991 = vld [vmem:[#allocation3 + $0x70] sm:$0xff]
    %v3992 = vld [vmem:[#allocation3 + $0x78] sm:$0xff]
    %v3993 = vld [vmem:[#allocation3 + $0x80] sm:$0xff]
    %v3994 = vld [vmem:[#allocation3 + $0x88] sm:$0xff]
    %v3995 = vld [vmem:[#allocation3 + $0x90] sm:$0xff]
    %v3996 = vld [vmem:[#allocation3 + $0x98] sm:$0xff]
    %v3997 = vld [vmem:[#allocation3 + $0xa0] sm:$0xff]
    %v3998 = vld [vmem:[#allocation3 + $0xa8] sm:$0xff]
    %v3999 = vld [vmem:[#allocation3 + $0xb0] sm:$0xff]
    %v4000 = vld [vmem:[#allocation3 + $0xb8] sm:$0xff]
    %v4001 = vld [vmem:[#allocation3 + $0xc0] sm:$0xff]
    %v4002 = vld [vmem:[#allocation3 + $0xc8] sm:$0xff]
    %v4003 = vld [vmem:[#allocation3 + $0xd0] sm:$0xff]
    %v4004 = vld [vmem:[#allocation3 + $0xd8] sm:$0xff]
    %v4005 = vld [vmem:[#allocation3 + $0xe0] sm:$0xff]
    %v4006 = vld [vmem:[#allocation3 + $0xe8] sm:$0xff]
    %v4007 = vld [vmem:[#allocation3 + $0xf0] sm:$0xff]
    %v4008 = vld [vmem:[#allocation3 + $0xf8] sm:$0xff]
    %v4009 = vld [vmem:[#allocation3 + $0x100] sm:$0xff]
    %v4010 = vld [vmem:[#allocation3 + $0x108] sm:$0xff]
    %v4011 = vld [vmem:[#allocation3 + $0x110] sm:$0xff]
    %v4012 = vld [vmem:[#allocation3 + $0x118] sm:$0xff]
    %v4013 = vld [vmem:[#allocation3 + $0x120] sm:$0xff]
    %v4014 = vld [vmem:[#allocation3 + $0x128] sm:$0xff]
    %v4015 = vld [vmem:[#allocation3 + $0x130] sm:$0xff]
    %v4016 = vld [vmem:[#allocation3 + $0x138] sm:$0xff]
    %v4017 = vld [vmem:[#allocation3 + $0x140] sm:$0xff]
    %v4018 = vld [vmem:[#allocation3 + $0x148] sm:$0xff]
    %v4019 = vld [vmem:[#allocation3 + $0x150] sm:$0xff]
    %v4020 = vld [vmem:[#allocation3 + $0x158] sm:$0xff]
    %v4021 = vld [vmem:[#allocation3 + $0x160] sm:$0xff]
    %v4022 = vld [vmem:[#allocation3 + $0x168] sm:$0xff]
    %v4023 = vld [vmem:[#allocation3 + $0x170] sm:$0xff]
    %v4024 = vld [vmem:[#allocation3 + $0x178] sm:$0xff]
    %v4025 = vld [vmem:[#allocation3 + $0x180] sm:$0xff]
    %v4026 = vld [vmem:[#allocation3 + $0x188] sm:$0xff]
    %v4027 = vld [vmem:[#allocation3 + $0x190] sm:$0xff]
    %v4028 = vld [vmem:[#allocation3 + $0x198] sm:$0xff]
    %v4029 = vld [vmem:[#allocation3 + $0x1a0] sm:$0xff]
    %v4030 = vld [vmem:[#allocation3 + $0x1a8] sm:$0xff]
    %v4031 = vld [vmem:[#allocation3 + $0x1b0] sm:$0xff]
    %v4032 = vld [vmem:[#allocation3 + $0x1b8] sm:$0xff]
    %v4033 = vld [vmem:[#allocation3 + $0x1c0] sm:$0xff]
    %v4034 = vld [vmem:[#allocation3 + $0x1c8] sm:$0xff]
    %v4035 = vld [vmem:[#allocation3 + $0x1d0] sm:$0xff]
    %v4036 = vld [vmem:[#allocation3 + $0x1d8] sm:$0xff]
    %v4037 = vld [vmem:[#allocation3 + $0x1e0] sm:$0xff]
    %v4038 = vld [vmem:[#allocation3 + $0x1e8] sm:$0xff]
    %v4039 = vld [vmem:[#allocation3 + $0x1f0] sm:$0xff]
    %v4040 = vld [vmem:[#allocation3 + $0x1f8] sm:$0xff]
    %v4041 = vld [vmem:[%s14] sm:$0x3]
    %v4043 = vperm.slane %v4041, 0
    %v4044 = vperm.slane %v4041, 1
    %v4111 = vunpack.c.l.b16 %v3977
    %v4112 = vunpack.c.h.b16 %v3977
    %v4113 = vunpack.c.l.b16 %v3978
    %v4114 = vunpack.c.h.b16 %v3978
    %v4115 = vunpack.c.l.b16 %v3979
    %v4116 = vunpack.c.h.b16 %v3979
    %v4117 = vunpack.c.l.b16 %v3980
    %v4118 = vunpack.c.h.b16 %v3980
    %v4119 = vunpack.c.l.b16 %v3981
    %v4120 = vunpack.c.h.b16 %v3981
    %v4121 = vunpack.c.l.b16 %v3982
    %v4122 = vunpack.c.h.b16 %v3982
    %v4123 = vunpack.c.l.b16 %v3983
    %v4124 = vunpack.c.h.b16 %v3983
    %v4125 = vunpack.c.l.b16 %v3984
    %v4126 = vunpack.c.h.b16 %v3984
    %v4127 = vunpack.c.l.b16 %v3985
    %v4128 = vunpack.c.h.b16 %v3985
    %v4129 = vunpack.c.l.b16 %v3986
    %v4130 = vunpack.c.h.b16 %v3986
    %v4131 = vunpack.c.l.b16 %v3987
    %v4132 = vunpack.c.h.b16 %v3987
    %v4133 = vunpack.c.l.b16 %v3988
    %v4134 = vunpack.c.h.b16 %v3988
    %v4135 = vunpack.c.l.b16 %v3989
    %v4136 = vunpack.c.h.b16 %v3989
    %v4137 = vunpack.c.l.b16 %v3990
    %v4138 = vunpack.c.h.b16 %v3990
    %v4139 = vunpack.c.l.b16 %v3991
    %v4140 = vunpack.c.h.b16 %v3991
    %v4141 = vunpack.c.l.b16 %v3992
    %v4142 = vunpack.c.h.b16 %v3992
    %v4143 = vunpack.c.l.b16 %v3993
    %v4144 = vunpack.c.h.b16 %v3993
    %v4145 = vunpack.c.l.b16 %v3994
    %v4146 = vunpack.c.h.b16 %v3994
    %v4147 = vunpack.c.l.b16 %v3995
    %v4148 = vunpack.c.h.b16 %v3995
    %v4149 = vunpack.c.l.b16 %v3996
    %v4150 = vunpack.c.h.b16 %v3996
    %v4151 = vunpack.c.l.b16 %v3997
    %v4152 = vunpack.c.h.b16 %v3997
    %v4153 = vunpack.c.l.b16 %v3998
    %v4154 = vunpack.c.h.b16 %v3998
    %v4155 = vunpack.c.l.b16 %v3999
    %v4156 = vunpack.c.h.b16 %v3999
    %v4157 = vunpack.c.l.b16 %v4000
    %v4158 = vunpack.c.h.b16 %v4000
    %v4159 = vunpack.c.l.b16 %v4001
    %v4160 = vunpack.c.h.b16 %v4001
    %v4161 = vunpack.c.l.b16 %v4002
    %v4162 = vunpack.c.h.b16 %v4002
    %v4163 = vunpack.c.l.b16 %v4003
    %v4164 = vunpack.c.h.b16 %v4003
    %v4165 = vunpack.c.l.b16 %v4004
    %v4166 = vunpack.c.h.b16 %v4004
    %v4167 = vunpack.c.l.b16 %v4005
    %v4168 = vunpack.c.h.b16 %v4005
    %v4169 = vunpack.c.l.b16 %v4006
    %v4170 = vunpack.c.h.b16 %v4006
    %v4171 = vunpack.c.l.b16 %v4007
    %v4172 = vunpack.c.h.b16 %v4007
    %v4173 = vunpack.c.l.b16 %v4008
    %v4174 = vunpack.c.h.b16 %v4008
    %v4175 = vunpack.c.l.b16 %v4009
    %v4176 = vunpack.c.h.b16 %v4009
    %v4177 = vunpack.c.l.b16 %v4010
    %v4178 = vunpack.c.h.b16 %v4010
    %v4179 = vunpack.c.l.b16 %v4011
    %v4180 = vunpack.c.h.b16 %v4011
    %v4181 = vunpack.c.l.b16 %v4012
    %v4182 = vunpack.c.h.b16 %v4012
    %v4183 = vunpack.c.l.b16 %v4013
    %v4184 = vunpack.c.h.b16 %v4013
    %v4185 = vunpack.c.l.b16 %v4014
    %v4186 = vunpack.c.h.b16 %v4014
    %v4187 = vunpack.c.l.b16 %v4015
    %v4188 = vunpack.c.h.b16 %v4015
    %v4189 = vunpack.c.l.b16 %v4016
    %v4190 = vunpack.c.h.b16 %v4016
    %v4191 = vunpack.c.l.b16 %v4017
    %v4192 = vunpack.c.h.b16 %v4017
    %v4193 = vunpack.c.l.b16 %v4018
    %v4194 = vunpack.c.h.b16 %v4018
    %v4195 = vunpack.c.l.b16 %v4019
    %v4196 = vunpack.c.h.b16 %v4019
    %v4197 = vunpack.c.l.b16 %v4020
    %v4198 = vunpack.c.h.b16 %v4020
    %v4199 = vunpack.c.l.b16 %v4021
    %v4200 = vunpack.c.h.b16 %v4021
    %v4201 = vunpack.c.l.b16 %v4022
    %v4202 = vunpack.c.h.b16 %v4022
    %v4203 = vunpack.c.l.b16 %v4023
    %v4204 = vunpack.c.h.b16 %v4023
    %v4205 = vunpack.c.l.b16 %v4024
    %v4206 = vunpack.c.h.b16 %v4024
    %v4207 = vunpack.c.l.b16 %v4025
    %v4208 = vunpack.c.h.b16 %v4025
    %v4209 = vunpack.c.l.b16 %v4026
    %v4210 = vunpack.c.h.b16 %v4026
    %v4211 = vunpack.c.l.b16 %v4027
    %v4212 = vunpack.c.h.b16 %v4027
    %v4213 = vunpack.c.l.b16 %v4028
    %v4214 = vunpack.c.h.b16 %v4028
    %v4215 = vunpack.c.l.b16 %v4029
    %v4216 = vunpack.c.h.b16 %v4029
    %v4217 = vunpack.c.l.b16 %v4030
    %v4218 = vunpack.c.h.b16 %v4030
    %v4219 = vunpack.c.l.b16 %v4031
    %v4220 = vunpack.c.h.b16 %v4031
    %v4221 = vunpack.c.l.b16 %v4032
    %v4222 = vunpack.c.h.b16 %v4032
    %v4223 = vunpack.c.l.b16 %v4033
    %v4224 = vunpack.c.h.b16 %v4033
    %v4225 = vunpack.c.l.b16 %v4034
    %v4226 = vunpack.c.h.b16 %v4034
    %v4227 = vunpack.c.l.b16 %v4035
    %v4228 = vunpack.c.h.b16 %v4035
    %v4229 = vunpack.c.l.b16 %v4036
    %v4230 = vunpack.c.h.b16 %v4036
    %v4231 = vunpack.c.l.b16 %v4037
    %v4232 = vunpack.c.h.b16 %v4037
    %v4233 = vunpack.c.l.b16 %v4038
    %v4234 = vunpack.c.h.b16 %v4038
    %v4235 = vunpack.c.l.b16 %v4039
    %v4236 = vunpack.c.h.b16 %v4039
    %v4237 = vunpack.c.l.b16 %v4040
    %v4238 = vunpack.c.h.b16 %v4040
    %v4239 = vpack.c.b16 %v4113, %v4111
    %v4240 = vpack.c.b16 %v4114, %v4112
    %v4241 = vpack.c.b16 %v4117, %v4115
    %v4242 = vpack.c.b16 %v4118, %v4116
    %v4243 = vpack.c.b16 %v4121, %v4119
    %v4244 = vpack.c.b16 %v4122, %v4120
    %v4245 = vpack.c.b16 %v4125, %v4123
    %v4246 = vpack.c.b16 %v4126, %v4124
    %v4247 = vpack.c.b16 %v4129, %v4127
    %v4248 = vpack.c.b16 %v4130, %v4128
    %v4249 = vpack.c.b16 %v4133, %v4131
    %v4250 = vpack.c.b16 %v4134, %v4132
    %v4251 = vpack.c.b16 %v4137, %v4135
    %v4252 = vpack.c.b16 %v4138, %v4136
    %v4253 = vpack.c.b16 %v4141, %v4139
    %v4254 = vpack.c.b16 %v4142, %v4140
    %v4255 = vpack.c.b16 %v4145, %v4143
    %v4256 = vpack.c.b16 %v4146, %v4144
    %v4257 = vpack.c.b16 %v4149, %v4147
    %v4258 = vpack.c.b16 %v4150, %v4148
    %v4259 = vpack.c.b16 %v4153, %v4151
    %v4260 = vpack.c.b16 %v4154, %v4152
    %v4261 = vpack.c.b16 %v4157, %v4155
    %v4262 = vpack.c.b16 %v4158, %v4156
    %v4263 = vpack.c.b16 %v4161, %v4159
    %v4264 = vpack.c.b16 %v4162, %v4160
    %v4265 = vpack.c.b16 %v4165, %v4163
    %v4266 = vpack.c.b16 %v4166, %v4164
    %v4267 = vpack.c.b16 %v4169, %v4167
    %v4268 = vpack.c.b16 %v4170, %v4168
    %v4269 = vpack.c.b16 %v4173, %v4171
    %v4270 = vpack.c.b16 %v4174, %v4172
    %v4271 = vpack.c.b16 %v4177, %v4175
    %v4272 = vpack.c.b16 %v4178, %v4176
    %v4273 = vpack.c.b16 %v4181, %v4179
    %v4274 = vpack.c.b16 %v4182, %v4180
    %v4275 = vpack.c.b16 %v4185, %v4183
    %v4276 = vpack.c.b16 %v4186, %v4184
    %v4277 = vpack.c.b16 %v4189, %v4187
    %v4278 = vpack.c.b16 %v4190, %v4188
    %v4279 = vpack.c.b16 %v4193, %v4191
    %v4280 = vpack.c.b16 %v4194, %v4192
    %v4281 = vpack.c.b16 %v4197, %v4195
    %v4282 = vpack.c.b16 %v4198, %v4196
    %v4283 = vpack.c.b16 %v4201, %v4199
    %v4284 = vpack.c.b16 %v4202, %v4200
    %v4285 = vpack.c.b16 %v4205, %v4203
    %v4286 = vpack.c.b16 %v4206, %v4204
    %v4287 = vpack.c.b16 %v4209, %v4207
    %v4288 = vpack.c.b16 %v4210, %v4208
    %v4289 = vpack.c.b16 %v4213, %v4211
    %v4290 = vpack.c.b16 %v4214, %v4212
    %v4291 = vpack.c.b16 %v4217, %v4215
    %v4292 = vpack.c.b16 %v4218, %v4216
    %v4293 = vpack.c.b16 %v4221, %v4219
    %v4294 = vpack.c.b16 %v4222, %v4220
    %v4295 = vpack.c.b16 %v4225, %v4223
    %v4296 = vpack.c.b16 %v4226, %v4224
    %v4297 = vpack.c.b16 %v4229, %v4227
    %v4298 = vpack.c.b16 %v4230, %v4228
    %v4299 = vpack.c.b16 %v4233, %v4231
    %v4300 = vpack.c.b16 %v4234, %v4232
    %v4301 = vpack.c.b16 %v4237, %v4235
    %v4302 = vpack.c.b16 %v4238, %v4236
    %4367 = vmatpush.bf16.msra.mxu0 %v4253
    %4368 = vmatpush.bf16.msra.mxu0 %v4251
    %4369 = vmatpush.bf16.msra.mxu0 %v4249
    %4370 = vmatpush.bf16.msra.mxu0 %v4247
    %4371 = vmatpush.bf16.msra.mxu0 %v4245
    %4372 = vmatpush.bf16.msra.mxu0 %v4243
    %4373 = vmatpush.bf16.msra.mxu0 %v4241
    %4374 = vmatpush.bf16.msra.mxu0 %v4239
    %4375 = vmatmul.bf16.gmra.mxu0 %v3969
    %v4376 = vpop.f32.mrf.mxu0
    %v4377 = vadd.f32 %v4043, %v4376
    %v4378 = vpop.f32.mrf.mxu0
    %4379 = vdwg.mxu0
    %4380 = vmatpush.bf16.msra.mxu0 %v4269
    %4381 = vmatpush.bf16.msra.mxu0 %v4267
    %4382 = vmatpush.bf16.msra.mxu0 %v4265
    %4383 = vmatpush.bf16.msra.mxu0 %v4263
    %4384 = vmatpush.bf16.msra.mxu0 %v4261
    %4385 = vmatpush.bf16.msra.mxu0 %v4259
    %4386 = vmatpush.bf16.msra.mxu0 %v4257
    %4387 = vmatpush.bf16.msra.mxu0 %v4255
    %4388 = vmatmul.bf16.gmra.mxu0 %v3970
    %v4389 = vpop.f32.mrf.mxu0
    %v4390 = vadd.f32 %v4377, %v4389
    %v4391 = vpop.f32.mrf.mxu0
    %4392 = vdwg.mxu0
    %4393 = vmatpush.bf16.msra.mxu0 %v4285
    %4394 = vmatpush.bf16.msra.mxu0 %v4283
    %4395 = vmatpush.bf16.msra.mxu0 %v4281
    %4396 = vmatpush.bf16.msra.mxu0 %v4279
    %4397 = vmatpush.bf16.msra.mxu0 %v4277
    %4398 = vmatpush.bf16.msra.mxu0 %v4275
    %4399 = vmatpush.bf16.msra.mxu0 %v4273
    %4400 = vmatpush.bf16.msra.mxu0 %v4271
    %4401 = vmatmul.bf16.gmra.mxu0 %v3971
    %v4402 = vpop.f32.mrf.mxu0
    %v4403 = vadd.f32 %v4390, %v4402
    %v4404 = vpop.f32.mrf.mxu0
    %4405 = vdwg.mxu0
    %4406 = vmatpush.bf16.msra.mxu0 %v4301
    %4407 = vmatpush.bf16.msra.mxu0 %v4299
    %4408 = vmatpush.bf16.msra.mxu0 %v4297
    %4409 = vmatpush.bf16.msra.mxu0 %v4295
    %4410 = vmatpush.bf16.msra.mxu0 %v4293
    %4411 = vmatpush.bf16.msra.mxu0 %v4291
    %4412 = vmatpush.bf16.msra.mxu0 %v4289
    %4413 = vmatpush.bf16.msra.mxu0 %v4287
    %4414 = vmatmul.bf16.gmra.mxu0 %v3972
    %v4415 = vpop.f32.mrf.mxu0
    %v4416 = vadd.f32 %v4403, %v4415
    %v4417 = vpop.f32.mrf.mxu0
    %4418 = vdwg.mxu0
    %4419 = vmatpush.bf16.msra.mxu0 %v4254
    %4420 = vmatpush.bf16.msra.mxu0 %v4252
    %4421 = vmatpush.bf16.msra.mxu0 %v4250
    %4422 = vmatpush.bf16.msra.mxu0 %v4248
    %4423 = vmatpush.bf16.msra.mxu0 %v4246
    %4424 = vmatpush.bf16.msra.mxu0 %v4244
    %4425 = vmatpush.bf16.msra.mxu0 %v4242
    %4426 = vmatpush.bf16.msra.mxu0 %v4240
    %4427 = vmatmul.bf16.gmra.mxu0 %v3969
    %v4428 = vpop.f32.mrf.mxu0
    %v4429 = vadd.f32 %v4044, %v4428
    %v4430 = vpop.f32.mrf.mxu0
    %4431 = vdwg.mxu0
    %4432 = vmatpush.bf16.msra.mxu0 %v4270
    %4433 = vmatpush.bf16.msra.mxu0 %v4268
    %4434 = vmatpush.bf16.msra.mxu0 %v4266
    %4435 = vmatpush.bf16.msra.mxu0 %v4264
    %4436 = vmatpush.bf16.msra.mxu0 %v4262
    %4437 = vmatpush.bf16.msra.mxu0 %v4260
    %4438 = vmatpush.bf16.msra.mxu0 %v4258
    %4439 = vmatpush.bf16.msra.mxu0 %v4256
    %4440 = vmatmul.bf16.gmra.mxu0 %v3970
    %v4441 = vpop.f32.mrf.mxu0
    %v4442 = vadd.f32 %v4429, %v4441
    %v4443 = vpop.f32.mrf.mxu0
    %4444 = vdwg.mxu0
    %4445 = vmatpush.bf16.msra.mxu0 %v4286
    %4446 = vmatpush.bf16.msra.mxu0 %v4284
    %4447 = vmatpush.bf16.msra.mxu0 %v4282
    %4448 = vmatpush.bf16.msra.mxu0 %v4280
    %4449 = vmatpush.bf16.msra.mxu0 %v4278
    %4450 = vmatpush.bf16.msra.mxu0 %v4276
    %4451 = vmatpush.bf16.msra.mxu0 %v4274
    %4452 = vmatpush.bf16.msra.mxu0 %v4272
    %4453 = vmatmul.bf16.gmra.mxu0 %v3971
    %v4454 = vpop.f32.mrf.mxu0
    %v4455 = vadd.f32 %v4442, %v4454
    %v4456 = vpop.f32.mrf.mxu0
    %4457 = vdwg.mxu0
    %4458 = vmatpush.bf16.msra.mxu0 %v4302
    %4459 = vmatpush.bf16.msra.mxu0 %v4300
    %4460 = vmatpush.bf16.msra.mxu0 %v4298
    %4461 = vmatpush.bf16.msra.mxu0 %v4296
    %4462 = vmatpush.bf16.msra.mxu0 %v4294
    %4463 = vmatpush.bf16.msra.mxu0 %v4292
    %4464 = vmatpush.bf16.msra.mxu0 %v4290
    %4465 = vmatpush.bf16.msra.mxu0 %v4288
    %4466 = vmatmul.bf16.gmra.mxu0 %v3972
    %v4467 = vpop.f32.mrf.mxu0
    %v4468 = vadd.f32 %v4455, %v4467
    %v4469 = vpop.f32.mrf.mxu0
    %4470 = vdwg.mxu0
    %v4471 = vmax.f32 %v4416, 0.0
    %v4472 = vmax.f32 %v4468, 0.0
    %v4473 = vpack.c.bf16 %v4471, %v4471
    %v4474 = vpack.c.bf16 %v4472, %v4472
    %s4475 = smul.u32 %s1060, 1
    %s4476 = sshll.u32 %s4475, 4
    %4477 = dma.done %s189, %s4476
    %v4478 = vld [vmem:[#allocation4] sm:$0xf]
    %v4479 = vld [vmem:[#allocation4 + $0x4] sm:$0xf]
    %v4480 = vld [vmem:[#allocation4 + $0x8] sm:$0xf]
    %v4481 = vld [vmem:[#allocation4 + $0xc] sm:$0xf]
    %v4482 = vld [vmem:[#allocation4 + $0x10] sm:$0xf]
    %v4483 = vld [vmem:[#allocation4 + $0x14] sm:$0xf]
    %v4484 = vld [vmem:[#allocation4 + $0x18] sm:$0xf]
    %v4485 = vld [vmem:[#allocation4 + $0x1c] sm:$0xf]
    %v4486 = vld [vmem:[#allocation4 + $0x20] sm:$0xf]
    %v4487 = vld [vmem:[#allocation4 + $0x24] sm:$0xf]
    %v4488 = vld [vmem:[#allocation4 + $0x28] sm:$0xf]
    %v4489 = vld [vmem:[#allocation4 + $0x2c] sm:$0xf]
    %v4490 = vld [vmem:[#allocation4 + $0x30] sm:$0xf]
    %v4491 = vld [vmem:[#allocation4 + $0x34] sm:$0xf]
    %v4492 = vld [vmem:[#allocation4 + $0x38] sm:$0xf]
    %v4493 = vld [vmem:[#allocation4 + $0x3c] sm:$0xf]
    %v4494 = vld [vmem:[#allocation4 + $0x40] sm:$0xf]
    %v4495 = vld [vmem:[#allocation4 + $0x44] sm:$0xf]
    %v4496 = vld [vmem:[#allocation4 + $0x48] sm:$0xf]
    %v4497 = vld [vmem:[#allocation4 + $0x4c] sm:$0xf]
    %v4498 = vld [vmem:[#allocation4 + $0x50] sm:$0xf]
    %v4499 = vld [vmem:[#allocation4 + $0x54] sm:$0xf]
    %v4500 = vld [vmem:[#allocation4 + $0x58] sm:$0xf]
    %v4501 = vld [vmem:[#allocation4 + $0x5c] sm:$0xf]
    %v4502 = vld [vmem:[#allocation4 + $0x60] sm:$0xf]
    %v4503 = vld [vmem:[#allocation4 + $0x64] sm:$0xf]
    %v4504 = vld [vmem:[#allocation4 + $0x68] sm:$0xf]
    %v4505 = vld [vmem:[#allocation4 + $0x6c] sm:$0xf]
    %v4506 = vld [vmem:[#allocation4 + $0x70] sm:$0xf]
    %v4507 = vld [vmem:[#allocation4 + $0x74] sm:$0xf]
    %v4508 = vld [vmem:[#allocation4 + $0x78] sm:$0xf]
    %v4509 = vld [vmem:[#allocation4 + $0x7c] sm:$0xf]
    %v4510 = vld [vmem:[%s16] sm:$0x1]
    %v4512 = vperm.slane %v4510, 0
    %v4546 = vunpack.c.l.b16 %v4478
    %v4547 = vunpack.c.l.b16 %v4479
    %v4548 = vunpack.c.l.b16 %v4480
    %v4549 = vunpack.c.l.b16 %v4481
    %v4550 = vunpack.c.l.b16 %v4482
    %v4551 = vunpack.c.l.b16 %v4483
    %v4552 = vunpack.c.l.b16 %v4484
    %v4553 = vunpack.c.l.b16 %v4485
    %v4554 = vunpack.c.l.b16 %v4486
    %v4555 = vunpack.c.l.b16 %v4487
    %v4556 = vunpack.c.l.b16 %v4488
    %v4557 = vunpack.c.l.b16 %v4489
    %v4558 = vunpack.c.l.b16 %v4490
    %v4559 = vunpack.c.l.b16 %v4491
    %v4560 = vunpack.c.l.b16 %v4492
    %v4561 = vunpack.c.l.b16 %v4493
    %v4562 = vunpack.c.l.b16 %v4494
    %v4563 = vunpack.c.l.b16 %v4495
    %v4564 = vunpack.c.l.b16 %v4496
    %v4565 = vunpack.c.l.b16 %v4497
    %v4566 = vunpack.c.l.b16 %v4498
    %v4567 = vunpack.c.l.b16 %v4499
    %v4568 = vunpack.c.l.b16 %v4500
    %v4569 = vunpack.c.l.b16 %v4501
    %v4570 = vunpack.c.l.b16 %v4502
    %v4571 = vunpack.c.l.b16 %v4503
    %v4572 = vunpack.c.l.b16 %v4504
    %v4573 = vunpack.c.l.b16 %v4505
    %v4574 = vunpack.c.l.b16 %v4506
    %v4575 = vunpack.c.l.b16 %v4507
    %v4576 = vunpack.c.l.b16 %v4508
    %v4577 = vunpack.c.l.b16 %v4509
    %v4578 = vpack.c.b16 %v4547, %v4546
    %v4579 = vpack.c.b16 %v4549, %v4548
    %v4580 = vpack.c.b16 %v4551, %v4550
    %v4581 = vpack.c.b16 %v4553, %v4552
    %v4582 = vpack.c.b16 %v4555, %v4554
    %v4583 = vpack.c.b16 %v4557, %v4556
    %v4584 = vpack.c.b16 %v4559, %v4558
    %v4585 = vpack.c.b16 %v4561, %v4560
    %v4586 = vpack.c.b16 %v4563, %v4562
    %v4587 = vpack.c.b16 %v4565, %v4564
    %v4588 = vpack.c.b16 %v4567, %v4566
    %v4589 = vpack.c.b16 %v4569, %v4568
    %v4590 = vpack.c.b16 %v4571, %v4570
    %v4591 = vpack.c.b16 %v4573, %v4572
    %v4592 = vpack.c.b16 %v4575, %v4574
    %v4593 = vpack.c.b16 %v4577, %v4576
    %4610 = vmatpush.bf16.msra.mxu0 %v4585
    %4611 = vmatpush.bf16.msra.mxu0 %v4584
    %4612 = vmatpush.bf16.msra.mxu0 %v4583
    %4613 = vmatpush.bf16.msra.mxu0 %v4582
    %4614 = vmatpush.bf16.msra.mxu0 %v4581
    %4615 = vmatpush.bf16.msra.mxu0 %v4580
    %4616 = vmatpush.bf16.msra.mxu0 %v4579
    %4617 = vmatpush.bf16.msra.mxu0 %v4578
    %4618 = vmatmul.bf16.gmra.mxu0 %v4473
    %v4619 = vpop.f32.mrf.mxu0
    %v4620 = vadd.f32 %v4512, %v4619
    %v4621 = vpop.f32.mrf.mxu0
    %4622 = vdwg.mxu0
    %4623 = vmatpush.bf16.msra.mxu0 %v4593
    %4624 = vmatpush.bf16.msra.mxu0 %v4592
    %4625 = vmatpush.bf16.msra.mxu0 %v4591
    %4626 = vmatpush.bf16.msra.mxu0 %v4590
    %4627 = vmatpush.bf16.msra.mxu0 %v4589
    %4628 = vmatpush.bf16.msra.mxu0 %v4588
    %4629 = vmatpush.bf16.msra.mxu0 %v4587
    %4630 = vmatpush.bf16.msra.mxu0 %v4586
    %4631 = vmatmul.bf16.gmra.mxu0 %v4474
    %v4632 = vpop.f32.mrf.mxu0
    %v4633 = vadd.f32 %v4620, %v4632
    %v4634 = vpop.f32.mrf.mxu0
    %4635 = vdwg.mxu0
    %4636 = vst [vmem:[#allocation15] sm:$0x3] %v4633
    // Predicated region
    $region113: #{tpu_custom_call.1} parent=1 // pred_check
      _
    $region114: #{tpu_custom_call.1} parent=1 // pred_check_branch
      %4638 = sbr.rel (0) target = $region116
    $region115: #{tpu_custom_call.1} parent=1 // pred_region
      %4640 = vsyncadd [#allocation9], 0
      %s4642 = sshll.u32 [#allocation15], 4
      %s4643 = int_to_ptr.vmem [resolvable:$true] %s4642
      %s4644 = sshll.u32 %s17, 4
      %s4645 = int_to_ptr.hbm [resolvable:$true] %s4644
      %4647 = dma.vmem_to_hbm [thread:$0]  %s4643, 32, %s4645, [#allocation9]
    $region116: #{tpu_custom_call.1} parent=1 // pred_fallthru
      _
    // Predicated region
    $region117: #{tpu_custom_call.1} parent=1 // pred_check
      _
    $region118: #{tpu_custom_call.1} parent=1 // pred_check_branch
      %4649 = sbr.rel (0) target = $region120
    $region119: #{tpu_custom_call.1} parent=1 // pred_region
      %4651 = dma.done [#allocation9], 32
    $region120: #{tpu_custom_call.1} parent=1 // pred_fallthru
      _
    %4652 = vsyncpa [#allocation8], 1
    %4653 = vsyncpa [#allocation11], 1
    %4654 = vsyncpa [#allocation14], 1
    %4655 = vsyncpa [#allocation9], 1
  %4656 = vsyncmov [#allocation5]
  %s4657 = vpop.sfrf %4656
  %p4658 = scmp.eq.s32.totalorder %s4657, 0
  %p4659 = pneg %p4658
  %4661 = shalt.err (%p4659)
  %s4662 = scalar_lea.sflag [#allocation5], 1
  %4663 = vsyncmov %s4662
  %s4664 = vpop.sfrf %4663
  %p4665 = scmp.eq.s32.totalorder %s4664, 0
  %p4666 = pneg %p4665
  %4668 = shalt.err (%p4666)
  %s4669 = scalar_lea.sflag [#allocation5], 2
  %4670 = vsyncmov %s4669
  %s4671 = vpop.sfrf %4670
  %p4672 = scmp.eq.s32.totalorder %s4671, 0
  %p4673 = pneg %p4672
  %4675 = shalt.err (%p4673)
  %s4676 = scalar_lea.sflag [#allocation5], 3
  %4677 = vsyncmov %s4676
  %s4678 = vpop.sfrf %4677
  %p4679 = scmp.eq.s32.totalorder %s4678, 0
  %p4680 = pneg %p4679
  %4682 = shalt.err (%p4680)
  %4683 = vsyncmov [#allocation6]
  %s4684 = vpop.sfrf %4683
  %p4685 = scmp.eq.s32.totalorder %s4684, 0
  %p4686 = pneg %p4685
  %4688 = shalt.err (%p4686)
  %s4689 = scalar_lea.sflag [#allocation6], 1
  %4690 = vsyncmov %s4689
  %s4691 = vpop.sfrf %4690
  %p4692 = scmp.eq.s32.totalorder %s4691, 0
  %p4693 = pneg %p4692
  %4695 = shalt.err (%p4693)

</llo_original>
